<compile_context>
chip_gen: v7x
topology: tpu7x:2x2x1
jax: 0.10.0
libtpu: 0.0.40
codegen_flags: <defaults>
</compile_context>

<pallas_src>
import functools
import math

import jax
import jax.numpy as jnp
from jax.experimental import pallas as pl
from jax.experimental.pallas import tpu as pltpu  # noqa: F401  (TPU backend assumed)


# ----------------------------------------------------------------------------
# Fused attention-layer kernel (single block, no grid).
# ----------------------------------------------------------------------------
def _attention_kernel(q_ref, k_ref, v_ref,
                      wq_ref, bq_ref, wk_ref, bk_ref, wv_ref, bv_ref,
                      wo_ref, bo_ref, o_ref, *, n_heads, B, L, S, scale):
    d_model = wo_ref.shape[2]
    dk = wq_ref.shape[2]
    dv = wv_ref.shape[2]

    q_in = q_ref[...]                                   # [B*L, d_model]
    k_in = k_ref[...]                                   # [B*S, d_model]
    v_in = v_ref[...]                                   # [B*S, d_model]

    # Accumulate the output projection head-by-head (concat-then-project == sum over
    # head slices of W_O); start from the output bias.
    acc = jnp.zeros((B * L, d_model), jnp.float32) + bo_ref[...]

    # Python loop is unrolled at trace time (n_heads is small); heads live on a
    # leading axis of the weight refs -> no sub-128 lane slicing anywhere.
    for h in range(n_heads):
        qh = (jnp.dot(q_in, wq_ref[h], preferred_element_type=jnp.float32)
              + bq_ref[h]).reshape(B, L, dk)
        kh = (jnp.dot(k_in, wk_ref[h], preferred_element_type=jnp.float32)
              + bk_ref[h]).reshape(B, S, dk)
        vh = (jnp.dot(v_in, wv_ref[h], preferred_element_type=jnp.float32)
              + bv_ref[h]).reshape(B, S, dv)

        # Batched (over B) scaled dot-product attention for this head.
        s = jnp.einsum('bld,bsd->bls', qh, kh,
                       preferred_element_type=jnp.float32) * scale      # [B, L, S]
        m = jnp.max(s, axis=-1, keepdims=True)
        e = jnp.exp(s - m)
        l = jnp.sum(e, axis=-1, keepdims=True)                          # [B, L, 1]
        oh = jnp.einsum('bls,bsd->bld', e, vh,
                        preferred_element_type=jnp.float32)             # [B, L, dv]
        # Apply softmax denominator AFTER attn@V; approx reciprocal -> EUP slot.
        oh = oh * pl.reciprocal(l, approx=True)

        acc = acc + jnp.dot(oh.reshape(B * L, dv), wo_ref[h],
                            preferred_element_type=jnp.float32)

    o_ref[...] = acc.astype(o_ref.dtype)


def attention_layer_pallas(queries, keys, values, params, *, n_heads,
                           attn_mask=None):
    """queries: [B, L, D]; keys/values: [B, S, D] -> ([B, L, D], None)."""
    # TODO(synk): attn_mask is not applied (mask-free full attention assumed).
    del attn_mask
    B, L, D = queries.shape
    _, S, _ = keys.shape
    H = n_heads
    dk = params["wq"].shape[1] // H
    dv = params["wv"].shape[1] // H
    scale = 1.0 / math.sqrt(dk)

    # Pre-split projection weights/biases per head on a LEADING axis (free, tiny
    # wrapper-side reshapes) so the kernel indexes heads instead of lane-slicing.
    wq_h = params["wq"].reshape(D, H, dk).transpose(1, 0, 2)      # [H, D, dk]
    wk_h = params["wk"].reshape(D, H, dk).transpose(1, 0, 2)      # [H, D, dk]
    wv_h = params["wv"].reshape(D, H, dv).transpose(1, 0, 2)      # [H, D, dv]
    bq_h = params["bq"].reshape(H, 1, dk)
    bk_h = params["bk"].reshape(H, 1, dk)
    bv_h = params["bv"].reshape(H, 1, dv)
    wo_h = params["wo"].reshape(H, dv, D)                         # [H, dv, D]
    bo = params["bo"].reshape(1, D)

    kernel = functools.partial(_attention_kernel, n_heads=H, B=B, L=L, S=S,
                               scale=scale)
    out_flat = pl.pallas_call(
        kernel,
        out_shape=jax.ShapeDtypeStruct((B * L, D), queries.dtype),
    )(queries.reshape(B * L, D),
      keys.reshape(B * S, D),
      values.reshape(B * S, D),
      wq_h, bq_h, wk_h, bk_h, wv_h, bv_h, wo_h, bo)

    # Attention weights are not materialized (output_attention=False path).
    return out_flat.reshape(B, L, D), None


# ----------------------------------------------------------------------------
# Pure-JAX reference (mirrors the PyTorch forward) for a sanity check.
# ----------------------------------------------------------------------------
def attention_layer_ref(queries, keys, values, params, n_heads):
    B, L, D = queries.shape
    S = keys.shape[1]
    H = n_heads
    q = queries.reshape(B * L, D) @ params["wq"] + params["bq"]
    k = keys.reshape(B * S, D) @ params["wk"] + params["bk"]
    v = values.reshape(B * S, D) @ params["wv"] + params["bv"]
    dk = q.shape[-1] // H
    dv = v.shape[-1] // H
    q = q.reshape(B, L, H, dk)
    k = k.reshape(B, S, H, dk)
    v = v.reshape(B, S, H, dv)
    scale = 1.0 / math.sqrt(dk)
    s = jnp.einsum('blhe,bshe->bhls', q, k) * scale
    a = jax.nn.softmax(s, axis=-1)
    o = jnp.einsum('bhls,bshd->blhd', a, v).reshape(B, L, H * dv)
    return o @ params["wo"] + params["bo"]


# ----------------------------------------------------------------------------
# Deterministic parameter init (shapes follow the PyTorch __init__; weights are
# stored pre-transposed to [in, out], i.e. torch_weight.T).
# ----------------------------------------------------------------------------
def init_params(key, *, d_model, n_heads, d_keys=None, d_values=None):
    d_keys = d_keys or d_model // n_heads
    d_values = d_values or d_model // n_heads
    ks = jax.random.split(key, 8)

    def linear(kw, kb, fan_in, fan_out):
        bound = 1.0 / math.sqrt(fan_in)
        w = jax.random.uniform(kw, (fan_in, fan_out), jnp.float32, -bound, bound)
        b = jax.random.uniform(kb, (fan_out,), jnp.float32, -bound, bound)
        return w, b

    wq, bq = linear(ks[0], ks[1], d_model, d_keys * n_heads)
    wk, bk = linear(ks[2], ks[3], d_model, d_keys * n_heads)
    wv, bv = linear(ks[4], ks[5], d_model, d_values * n_heads)
    wo, bo = linear(ks[6], ks[7], d_values * n_heads, d_model)
    return dict(wq=wq, bq=bq, wk=wk, bk=bk, wv=wv, bv=bv, wo=wo, bo=bo)


if __name__ == "__main__":
    B, L, S = 2, 8, 16            # queries [B, L, D]; keys/values [B, S, D]
    d_model, n_heads = 32, 4

    key = jax.random.PRNGKey(0)
    kq, kk, kv, kp = jax.random.split(key, 4)
    params = init_params(kp, d_model=d_model, n_heads=n_heads)
    queries = jax.random.normal(kq, (B, L, d_model), jnp.float32)
    keys = jax.random.normal(kk, (B, S, d_model), jnp.float32)
    values = jax.random.normal(kv, (B, S, d_model), jnp.float32)

    fwd = jax.jit(functools.partial(attention_layer_pallas, n_heads=n_heads))
    out, attn = fwd(queries, keys, values, params)
    out = jax.block_until_ready(out)

    ref = attention_layer_ref(queries, keys, values, params, n_heads)

    assert out.shape == (B, L, d_model)
    assert jnp.all(jnp.isfinite(out))
    assert jnp.allclose(out, ref, rtol=2e-2, atol=2e-2), \
        float(jnp.max(jnp.abs(out - ref)))
    print("KERNEL_OK")
</pallas_src>

<mosaic_0001>
module attributes {stable_mosaic.version = 11 : i64} {
  func.func @_attention_kernel(%arg0: memref<16x32xf32, #tpu.memory_space<vmem>>, %arg1: memref<32x32xf32, #tpu.memory_space<vmem>>, %arg2: memref<32x32xf32, #tpu.memory_space<vmem>>, %arg3: memref<4x32x8xf32, #tpu.memory_space<vmem>>, %arg4: memref<4x1x8xf32, #tpu.memory_space<vmem>>, %arg5: memref<4x32x8xf32, #tpu.memory_space<vmem>>, %arg6: memref<4x1x8xf32, #tpu.memory_space<vmem>>, %arg7: memref<4x32x8xf32, #tpu.memory_space<vmem>>, %arg8: memref<4x1x8xf32, #tpu.memory_space<vmem>>, %arg9: memref<4x8x32xf32, #tpu.memory_space<vmem>>, %arg10: memref<1x32xf32, #tpu.memory_space<vmem>>, %arg11: memref<16x32xf32, #tpu.memory_space<vmem>>) attributes {dimension_semantics = [], scalar_prefetch = 0 : i64, scratch_operands = 0 : i64, tpu.core_type = #tpu.core_type<tc>} {
    %c0 = arith.constant 0 : index
    %c0_0 = arith.constant 0 : index
    %0 = vector.load %arg0[%c0, %c0_0] : memref<16x32xf32, #tpu.memory_space<vmem>>, vector<16x32xf32>
    %c0_1 = arith.constant 0 : index
    %c0_2 = arith.constant 0 : index
    %1 = vector.load %arg1[%c0_1, %c0_2] : memref<32x32xf32, #tpu.memory_space<vmem>>, vector<32x32xf32>
    %c0_3 = arith.constant 0 : index
    %c0_4 = arith.constant 0 : index
    %2 = vector.load %arg2[%c0_3, %c0_4] : memref<32x32xf32, #tpu.memory_space<vmem>>, vector<32x32xf32>
    %cst = arith.constant 0.000000e+00 : f32
    %3 = vector.broadcast %cst : f32 to vector<16x32xf32>
    %c0_5 = arith.constant 0 : index
    %c0_6 = arith.constant 0 : index
    %4 = vector.load %arg10[%c0_5, %c0_6] : memref<1x32xf32, #tpu.memory_space<vmem>>, vector<1x32xf32>
    %5 = vector.broadcast %4 : vector<1x32xf32> to vector<16x32xf32>
    %6 = arith.addf %3, %5 : vector<16x32xf32>
    %c0_7 = arith.constant 0 : index
    %c0_8 = arith.constant 0 : index
    %c0_9 = arith.constant 0 : index
    %7 = vector.load %arg3[%c0_7, %c0_8, %c0_9] : memref<4x32x8xf32, #tpu.memory_space<vmem>>, vector<1x32x8xf32>
    %8 = vector.shape_cast %7 : vector<1x32x8xf32> to vector<32x8xf32>
    %cst_10 = arith.constant dense<0.000000e+00> : vector<16x8xf32>
    %9 = tpu.matmul %0, %8, %cst_10 {dimension_numbers = #tpu.dot_dimension_numbers<[1], [0], [0], [1], [0, 0, 1, 1], [], []>} : vector<16x32xf32>, vector<32x8xf32>, vector<16x8xf32> -> vector<16x8xf32>
    %c0_11 = arith.constant 0 : index
    %c0_12 = arith.constant 0 : index
    %c0_13 = arith.constant 0 : index
    %10 = vector.load %arg4[%c0_11, %c0_12, %c0_13] : memref<4x1x8xf32, #tpu.memory_space<vmem>>, vector<1x1x8xf32>
    %11 = vector.shape_cast %10 : vector<1x1x8xf32> to vector<1x8xf32>
    %12 = vector.broadcast %11 : vector<1x8xf32> to vector<16x8xf32>
    %13 = arith.addf %9, %12 : vector<16x8xf32>
    %14 = vector.shape_cast %13 : vector<16x8xf32> to vector<2x8x8xf32>
    %c0_14 = arith.constant 0 : index
    %c0_15 = arith.constant 0 : index
    %c0_16 = arith.constant 0 : index
    %15 = vector.load %arg5[%c0_14, %c0_15, %c0_16] : memref<4x32x8xf32, #tpu.memory_space<vmem>>, vector<1x32x8xf32>
    %16 = vector.shape_cast %15 : vector<1x32x8xf32> to vector<32x8xf32>
    %cst_17 = arith.constant dense<0.000000e+00> : vector<32x8xf32>
    %17 = tpu.matmul %1, %16, %cst_17 {dimension_numbers = #tpu.dot_dimension_numbers<[1], [0], [0], [1], [0, 0, 1, 1], [], []>} : vector<32x32xf32>, vector<32x8xf32>, vector<32x8xf32> -> vector<32x8xf32>
    %c0_18 = arith.constant 0 : index
    %c0_19 = arith.constant 0 : index
    %c0_20 = arith.constant 0 : index
    %18 = vector.load %arg6[%c0_18, %c0_19, %c0_20] : memref<4x1x8xf32, #tpu.memory_space<vmem>>, vector<1x1x8xf32>
    %19 = vector.shape_cast %18 : vector<1x1x8xf32> to vector<1x8xf32>
    %20 = vector.broadcast %19 : vector<1x8xf32> to vector<32x8xf32>
    %21 = arith.addf %17, %20 : vector<32x8xf32>
    %22 = vector.shape_cast %21 : vector<32x8xf32> to vector<2x16x8xf32>
    %c0_21 = arith.constant 0 : index
    %c0_22 = arith.constant 0 : index
    %c0_23 = arith.constant 0 : index
    %23 = vector.load %arg7[%c0_21, %c0_22, %c0_23] : memref<4x32x8xf32, #tpu.memory_space<vmem>>, vector<1x32x8xf32>
    %24 = vector.shape_cast %23 : vector<1x32x8xf32> to vector<32x8xf32>
    %cst_24 = arith.constant dense<0.000000e+00> : vector<32x8xf32>
    %25 = tpu.matmul %2, %24, %cst_24 {dimension_numbers = #tpu.dot_dimension_numbers<[1], [0], [0], [1], [0, 0, 1, 1], [], []>} : vector<32x32xf32>, vector<32x8xf32>, vector<32x8xf32> -> vector<32x8xf32>
    %c0_25 = arith.constant 0 : index
    %c0_26 = arith.constant 0 : index
    %c0_27 = arith.constant 0 : index
    %26 = vector.load %arg8[%c0_25, %c0_26, %c0_27] : memref<4x1x8xf32, #tpu.memory_space<vmem>>, vector<1x1x8xf32>
    %27 = vector.shape_cast %26 : vector<1x1x8xf32> to vector<1x8xf32>
    %28 = vector.broadcast %27 : vector<1x8xf32> to vector<32x8xf32>
    %29 = arith.addf %25, %28 : vector<32x8xf32>
    %30 = vector.shape_cast %29 : vector<32x8xf32> to vector<2x16x8xf32>
    "tpu.trace_start"() <{level = 10 : i32, message = "bld,bsd->bls"}> : () -> ()
    %cst_28 = arith.constant dense<0.000000e+00> : vector<2x8x16xf32>
    %31 = tpu.matmul %14, %22, %cst_28 {dimension_numbers = #tpu.dot_dimension_numbers<[2], [2], [1], [1], [0, 0, 0, 1, 1, 1], [0], [0]>} : vector<2x8x8xf32>, vector<2x16x8xf32>, vector<2x8x16xf32> -> vector<2x8x16xf32>
    "tpu.trace_stop"() : () -> ()
    %cst_29 = arith.constant 0.353553385 : f32
    %32 = vector.broadcast %cst_29 : f32 to vector<2x8x16xf32>
    %33 = arith.mulf %31, %32 : vector<2x8x16xf32>
    %cst_30 = arith.constant dense<0xFF800000> : vector<2x8xf32>
    %34 = vector.multi_reduction <maximumf>, %33, %cst_30 [2] : vector<2x8x16xf32> to vector<2x8xf32>
    %35 = vector.shape_cast %34 : vector<2x8xf32> to vector<2x8x1xf32>
    %36 = vector.broadcast %35 : vector<2x8x1xf32> to vector<2x8x16xf32>
    %37 = arith.subf %33, %36 : vector<2x8x16xf32>
    %38 = math.exp %37 : vector<2x8x16xf32>
    %cst_31 = arith.constant dense<0.000000e+00> : vector<2x8xf32>
    %39 = vector.multi_reduction <add>, %38, %cst_31 [2] : vector<2x8x16xf32> to vector<2x8xf32>
    %40 = vector.shape_cast %39 : vector<2x8xf32> to vector<2x8x1xf32>
    "tpu.trace_start"() <{level = 10 : i32, message = "bls,bsd->bld"}> : () -> ()
    %cst_32 = arith.constant dense<0.000000e+00> : vector<2x8x8xf32>
    %41 = tpu.matmul %38, %30, %cst_32 {dimension_numbers = #tpu.dot_dimension_numbers<[2], [1], [1], [2], [0, 0, 0, 1, 1, 2], [0], [0]>} : vector<2x8x16xf32>, vector<2x16x8xf32>, vector<2x8x8xf32> -> vector<2x8x8xf32>
    "tpu.trace_stop"() : () -> ()
    %42 = tpu.reciprocal %40 {approx = true} : vector<2x8x1xf32> -> vector<2x8x1xf32>
    %43 = vector.broadcast %42 : vector<2x8x1xf32> to vector<2x8x8xf32>
    %44 = arith.mulf %41, %43 : vector<2x8x8xf32>
    %45 = vector.shape_cast %44 : vector<2x8x8xf32> to vector<16x8xf32>
    %c0_33 = arith.constant 0 : index
    %c0_34 = arith.constant 0 : index
    %c0_35 = arith.constant 0 : index
    %46 = vector.load %arg9[%c0_33, %c0_34, %c0_35] : memref<4x8x32xf32, #tpu.memory_space<vmem>>, vector<1x8x32xf32>
    %47 = vector.shape_cast %46 : vector<1x8x32xf32> to vector<8x32xf32>
    %cst_36 = arith.constant dense<0.000000e+00> : vector<16x32xf32>
    %48 = tpu.matmul %45, %47, %cst_36 {dimension_numbers = #tpu.dot_dimension_numbers<[1], [0], [0], [1], [0, 0, 1, 1], [], []>} : vector<16x8xf32>, vector<8x32xf32>, vector<16x32xf32> -> vector<16x32xf32>
    %49 = arith.addf %6, %48 : vector<16x32xf32>
    %c1 = arith.constant 1 : index
    %c0_37 = arith.constant 0 : index
    %c0_38 = arith.constant 0 : index
    %50 = vector.load %arg3[%c1, %c0_37, %c0_38] : memref<4x32x8xf32, #tpu.memory_space<vmem>>, vector<1x32x8xf32>
    %51 = vector.shape_cast %50 : vector<1x32x8xf32> to vector<32x8xf32>
    %cst_39 = arith.constant dense<0.000000e+00> : vector<16x8xf32>
    %52 = tpu.matmul %0, %51, %cst_39 {dimension_numbers = #tpu.dot_dimension_numbers<[1], [0], [0], [1], [0, 0, 1, 1], [], []>} : vector<16x32xf32>, vector<32x8xf32>, vector<16x8xf32> -> vector<16x8xf32>
    %c1_40 = arith.constant 1 : index
    %c0_41 = arith.constant 0 : index
    %c0_42 = arith.constant 0 : index
    %53 = vector.load %arg4[%c1_40, %c0_41, %c0_42] : memref<4x1x8xf32, #tpu.memory_space<vmem>>, vector<1x1x8xf32>
    %54 = vector.shape_cast %53 : vector<1x1x8xf32> to vector<1x8xf32>
    %55 = vector.broadcast %54 : vector<1x8xf32> to vector<16x8xf32>
    %56 = arith.addf %52, %55 : vector<16x8xf32>
    %57 = vector.shape_cast %56 : vector<16x8xf32> to vector<2x8x8xf32>
    %c1_43 = arith.constant 1 : index
    %c0_44 = arith.constant 0 : index
    %c0_45 = arith.constant 0 : index
    %58 = vector.load %arg5[%c1_43, %c0_44, %c0_45] : memref<4x32x8xf32, #tpu.memory_space<vmem>>, vector<1x32x8xf32>
    %59 = vector.shape_cast %58 : vector<1x32x8xf32> to vector<32x8xf32>
    %cst_46 = arith.constant dense<0.000000e+00> : vector<32x8xf32>
    %60 = tpu.matmul %1, %59, %cst_46 {dimension_numbers = #tpu.dot_dimension_numbers<[1], [0], [0], [1], [0, 0, 1, 1], [], []>} : vector<32x32xf32>, vector<32x8xf32>, vector<32x8xf32> -> vector<32x8xf32>
    %c1_47 = arith.constant 1 : index
    %c0_48 = arith.constant 0 : index
    %c0_49 = arith.constant 0 : index
    %61 = vector.load %arg6[%c1_47, %c0_48, %c0_49] : memref<4x1x8xf32, #tpu.memory_space<vmem>>, vector<1x1x8xf32>
    %62 = vector.shape_cast %61 : vector<1x1x8xf32> to vector<1x8xf32>
    %63 = vector.broadcast %62 : vector<1x8xf32> to vector<32x8xf32>
    %64 = arith.addf %60, %63 : vector<32x8xf32>
    %65 = vector.shape_cast %64 : vector<32x8xf32> to vector<2x16x8xf32>
    %c1_50 = arith.constant 1 : index
    %c0_51 = arith.constant 0 : index
    %c0_52 = arith.constant 0 : index
    %66 = vector.load %arg7[%c1_50, %c0_51, %c0_52] : memref<4x32x8xf32, #tpu.memory_space<vmem>>, vector<1x32x8xf32>
    %67 = vector.shape_cast %66 : vector<1x32x8xf32> to vector<32x8xf32>
    %cst_53 = arith.constant dense<0.000000e+00> : vector<32x8xf32>
    %68 = tpu.matmul %2, %67, %cst_53 {dimension_numbers = #tpu.dot_dimension_numbers<[1], [0], [0], [1], [0, 0, 1, 1], [], []>} : vector<32x32xf32>, vector<32x8xf32>, vector<32x8xf32> -> vector<32x8xf32>
    %c1_54 = arith.constant 1 : index
    %c0_55 = arith.constant 0 : index
    %c0_56 = arith.constant 0 : index
    %69 = vector.load %arg8[%c1_54, %c0_55, %c0_56] : memref<4x1x8xf32, #tpu.memory_space<vmem>>, vector<1x1x8xf32>
    %70 = vector.shape_cast %69 : vector<1x1x8xf32> to vector<1x8xf32>
    %71 = vector.broadcast %70 : vector<1x8xf32> to vector<32x8xf32>
    %72 = arith.addf %68, %71 : vector<32x8xf32>
    %73 = vector.shape_cast %72 : vector<32x8xf32> to vector<2x16x8xf32>
    "tpu.trace_start"() <{level = 10 : i32, message = "bld,bsd->bls"}> : () -> ()
    %cst_57 = arith.constant dense<0.000000e+00> : vector<2x8x16xf32>
    %74 = tpu.matmul %57, %65, %cst_57 {dimension_numbers = #tpu.dot_dimension_numbers<[2], [2], [1], [1], [0, 0, 0, 1, 1, 1], [0], [0]>} : vector<2x8x8xf32>, vector<2x16x8xf32>, vector<2x8x16xf32> -> vector<2x8x16xf32>
    "tpu.trace_stop"() : () -> ()
    %cst_58 = arith.constant 0.353553385 : f32
    %75 = vector.broadcast %cst_58 : f32 to vector<2x8x16xf32>
    %76 = arith.mulf %74, %75 : vector<2x8x16xf32>
    %cst_59 = arith.constant dense<0xFF800000> : vector<2x8xf32>
    %77 = vector.multi_reduction <maximumf>, %76, %cst_59 [2] : vector<2x8x16xf32> to vector<2x8xf32>
    %78 = vector.shape_cast %77 : vector<2x8xf32> to vector<2x8x1xf32>
    %79 = vector.broadcast %78 : vector<2x8x1xf32> to vector<2x8x16xf32>
    %80 = arith.subf %76, %79 : vector<2x8x16xf32>
    %81 = math.exp %80 : vector<2x8x16xf32>
    %cst_60 = arith.constant dense<0.000000e+00> : vector<2x8xf32>
    %82 = vector.multi_reduction <add>, %81, %cst_60 [2] : vector<2x8x16xf32> to vector<2x8xf32>
    %83 = vector.shape_cast %82 : vector<2x8xf32> to vector<2x8x1xf32>
    "tpu.trace_start"() <{level = 10 : i32, message = "bls,bsd->bld"}> : () -> ()
    %cst_61 = arith.constant dense<0.000000e+00> : vector<2x8x8xf32>
    %84 = tpu.matmul %81, %73, %cst_61 {dimension_numbers = #tpu.dot_dimension_numbers<[2], [1], [1], [2], [0, 0, 0, 1, 1, 2], [0], [0]>} : vector<2x8x16xf32>, vector<2x16x8xf32>, vector<2x8x8xf32> -> vector<2x8x8xf32>
    "tpu.trace_stop"() : () -> ()
    %85 = tpu.reciprocal %83 {approx = true} : vector<2x8x1xf32> -> vector<2x8x1xf32>
    %86 = vector.broadcast %85 : vector<2x8x1xf32> to vector<2x8x8xf32>
    %87 = arith.mulf %84, %86 : vector<2x8x8xf32>
    %88 = vector.shape_cast %87 : vector<2x8x8xf32> to vector<16x8xf32>
    %c1_62 = arith.constant 1 : index
    %c0_63 = arith.constant 0 : index
    %c0_64 = arith.constant 0 : index
    %89 = vector.load %arg9[%c1_62, %c0_63, %c0_64] : memref<4x8x32xf32, #tpu.memory_space<vmem>>, vector<1x8x32xf32>
    %90 = vector.shape_cast %89 : vector<1x8x32xf32> to vector<8x32xf32>
    %cst_65 = arith.constant dense<0.000000e+00> : vector<16x32xf32>
    %91 = tpu.matmul %88, %90, %cst_65 {dimension_numbers = #tpu.dot_dimension_numbers<[1], [0], [0], [1], [0, 0, 1, 1], [], []>} : vector<16x8xf32>, vector<8x32xf32>, vector<16x32xf32> -> vector<16x32xf32>
    %92 = arith.addf %49, %91 : vector<16x32xf32>
    %c2 = arith.constant 2 : index
    %c0_66 = arith.constant 0 : index
    %c0_67 = arith.constant 0 : index
    %93 = vector.load %arg3[%c2, %c0_66, %c0_67] : memref<4x32x8xf32, #tpu.memory_space<vmem>>, vector<1x32x8xf32>
    %94 = vector.shape_cast %93 : vector<1x32x8xf32> to vector<32x8xf32>
    %cst_68 = arith.constant dense<0.000000e+00> : vector<16x8xf32>
    %95 = tpu.matmul %0, %94, %cst_68 {dimension_numbers = #tpu.dot_dimension_numbers<[1], [0], [0], [1], [0, 0, 1, 1], [], []>} : vector<16x32xf32>, vector<32x8xf32>, vector<16x8xf32> -> vector<16x8xf32>
    %c2_69 = arith.constant 2 : index
    %c0_70 = arith.constant 0 : index
    %c0_71 = arith.constant 0 : index
    %96 = vector.load %arg4[%c2_69, %c0_70, %c0_71] : memref<4x1x8xf32, #tpu.memory_space<vmem>>, vector<1x1x8xf32>
    %97 = vector.shape_cast %96 : vector<1x1x8xf32> to vector<1x8xf32>
    %98 = vector.broadcast %97 : vector<1x8xf32> to vector<16x8xf32>
    %99 = arith.addf %95, %98 : vector<16x8xf32>
    %100 = vector.shape_cast %99 : vector<16x8xf32> to vector<2x8x8xf32>
    %c2_72 = arith.constant 2 : index
    %c0_73 = arith.constant 0 : index
    %c0_74 = arith.constant 0 : index
    %101 = vector.load %arg5[%c2_72, %c0_73, %c0_74] : memref<4x32x8xf32, #tpu.memory_space<vmem>>, vector<1x32x8xf32>
    %102 = vector.shape_cast %101 : vector<1x32x8xf32> to vector<32x8xf32>
    %cst_75 = arith.constant dense<0.000000e+00> : vector<32x8xf32>
    %103 = tpu.matmul %1, %102, %cst_75 {dimension_numbers = #tpu.dot_dimension_numbers<[1], [0], [0], [1], [0, 0, 1, 1], [], []>} : vector<32x32xf32>, vector<32x8xf32>, vector<32x8xf32> -> vector<32x8xf32>
    %c2_76 = arith.constant 2 : index
    %c0_77 = arith.constant 0 : index
    %c0_78 = arith.constant 0 : index
    %104 = vector.load %arg6[%c2_76, %c0_77, %c0_78] : memref<4x1x8xf32, #tpu.memory_space<vmem>>, vector<1x1x8xf32>
    %105 = vector.shape_cast %104 : vector<1x1x8xf32> to vector<1x8xf32>
    %106 = vector.broadcast %105 : vector<1x8xf32> to vector<32x8xf32>
    %107 = arith.addf %103, %106 : vector<32x8xf32>
    %108 = vector.shape_cast %107 : vector<32x8xf32> to vector<2x16x8xf32>
    %c2_79 = arith.constant 2 : index
    %c0_80 = arith.constant 0 : index
    %c0_81 = arith.constant 0 : index
    %109 = vector.load %arg7[%c2_79, %c0_80, %c0_81] : memref<4x32x8xf32, #tpu.memory_space<vmem>>, vector<1x32x8xf32>
    %110 = vector.shape_cast %109 : vector<1x32x8xf32> to vector<32x8xf32>
    %cst_82 = arith.constant dense<0.000000e+00> : vector<32x8xf32>
    %111 = tpu.matmul %2, %110, %cst_82 {dimension_numbers = #tpu.dot_dimension_numbers<[1], [0], [0], [1], [0, 0, 1, 1], [], []>} : vector<32x32xf32>, vector<32x8xf32>, vector<32x8xf32> -> vector<32x8xf32>
    %c2_83 = arith.constant 2 : index
    %c0_84 = arith.constant 0 : index
    %c0_85 = arith.constant 0 : index
    %112 = vector.load %arg8[%c2_83, %c0_84, %c0_85] : memref<4x1x8xf32, #tpu.memory_space<vmem>>, vector<1x1x8xf32>
    %113 = vector.shape_cast %112 : vector<1x1x8xf32> to vector<1x8xf32>
    %114 = vector.broadcast %113 : vector<1x8xf32> to vector<32x8xf32>
    %115 = arith.addf %111, %114 : vector<32x8xf32>
    %116 = vector.shape_cast %115 : vector<32x8xf32> to vector<2x16x8xf32>
    "tpu.trace_start"() <{level = 10 : i32, message = "bld,bsd->bls"}> : () -> ()
    %cst_86 = arith.constant dense<0.000000e+00> : vector<2x8x16xf32>
    %117 = tpu.matmul %100, %108, %cst_86 {dimension_numbers = #tpu.dot_dimension_numbers<[2], [2], [1], [1], [0, 0, 0, 1, 1, 1], [0], [0]>} : vector<2x8x8xf32>, vector<2x16x8xf32>, vector<2x8x16xf32> -> vector<2x8x16xf32>
    "tpu.trace_stop"() : () -> ()
    %cst_87 = arith.constant 0.353553385 : f32
    %118 = vector.broadcast %cst_87 : f32 to vector<2x8x16xf32>
    %119 = arith.mulf %117, %118 : vector<2x8x16xf32>
    %cst_88 = arith.constant dense<0xFF800000> : vector<2x8xf32>
    %120 = vector.multi_reduction <maximumf>, %119, %cst_88 [2] : vector<2x8x16xf32> to vector<2x8xf32>
    %121 = vector.shape_cast %120 : vector<2x8xf32> to vector<2x8x1xf32>
    %122 = vector.broadcast %121 : vector<2x8x1xf32> to vector<2x8x16xf32>
    %123 = arith.subf %119, %122 : vector<2x8x16xf32>
    %124 = math.exp %123 : vector<2x8x16xf32>
    %cst_89 = arith.constant dense<0.000000e+00> : vector<2x8xf32>
    %125 = vector.multi_reduction <add>, %124, %cst_89 [2] : vector<2x8x16xf32> to vector<2x8xf32>
    %126 = vector.shape_cast %125 : vector<2x8xf32> to vector<2x8x1xf32>
    "tpu.trace_start"() <{level = 10 : i32, message = "bls,bsd->bld"}> : () -> ()
    %cst_90 = arith.constant dense<0.000000e+00> : vector<2x8x8xf32>
    %127 = tpu.matmul %124, %116, %cst_90 {dimension_numbers = #tpu.dot_dimension_numbers<[2], [1], [1], [2], [0, 0, 0, 1, 1, 2], [0], [0]>} : vector<2x8x16xf32>, vector<2x16x8xf32>, vector<2x8x8xf32> -> vector<2x8x8xf32>
    "tpu.trace_stop"() : () -> ()
    %128 = tpu.reciprocal %126 {approx = true} : vector<2x8x1xf32> -> vector<2x8x1xf32>
    %129 = vector.broadcast %128 : vector<2x8x1xf32> to vector<2x8x8xf32>
    %130 = arith.mulf %127, %129 : vector<2x8x8xf32>
    %131 = vector.shape_cast %130 : vector<2x8x8xf32> to vector<16x8xf32>
    %c2_91 = arith.constant 2 : index
    %c0_92 = arith.constant 0 : index
    %c0_93 = arith.constant 0 : index
    %132 = vector.load %arg9[%c2_91, %c0_92, %c0_93] : memref<4x8x32xf32, #tpu.memory_space<vmem>>, vector<1x8x32xf32>
    %133 = vector.shape_cast %132 : vector<1x8x32xf32> to vector<8x32xf32>
    %cst_94 = arith.constant dense<0.000000e+00> : vector<16x32xf32>
    %134 = tpu.matmul %131, %133, %cst_94 {dimension_numbers = #tpu.dot_dimension_numbers<[1], [0], [0], [1], [0, 0, 1, 1], [], []>} : vector<16x8xf32>, vector<8x32xf32>, vector<16x32xf32> -> vector<16x32xf32>
    %135 = arith.addf %92, %134 : vector<16x32xf32>
    %c3 = arith.constant 3 : index
    %c0_95 = arith.constant 0 : index
    %c0_96 = arith.constant 0 : index
    %136 = vector.load %arg3[%c3, %c0_95, %c0_96] : memref<4x32x8xf32, #tpu.memory_space<vmem>>, vector<1x32x8xf32>
    %137 = vector.shape_cast %136 : vector<1x32x8xf32> to vector<32x8xf32>
    %cst_97 = arith.constant dense<0.000000e+00> : vector<16x8xf32>
    %138 = tpu.matmul %0, %137, %cst_97 {dimension_numbers = #tpu.dot_dimension_numbers<[1], [0], [0], [1], [0, 0, 1, 1], [], []>} : vector<16x32xf32>, vector<32x8xf32>, vector<16x8xf32> -> vector<16x8xf32>
    %c3_98 = arith.constant 3 : index
    %c0_99 = arith.constant 0 : index
    %c0_100 = arith.constant 0 : index
    %139 = vector.load %arg4[%c3_98, %c0_99, %c0_100] : memref<4x1x8xf32, #tpu.memory_space<vmem>>, vector<1x1x8xf32>
    %140 = vector.shape_cast %139 : vector<1x1x8xf32> to vector<1x8xf32>
    %141 = vector.broadcast %140 : vector<1x8xf32> to vector<16x8xf32>
    %142 = arith.addf %138, %141 : vector<16x8xf32>
    %143 = vector.shape_cast %142 : vector<16x8xf32> to vector<2x8x8xf32>
    %c3_101 = arith.constant 3 : index
    %c0_102 = arith.constant 0 : index
    %c0_103 = arith.constant 0 : index
    %144 = vector.load %arg5[%c3_101, %c0_102, %c0_103] : memref<4x32x8xf32, #tpu.memory_space<vmem>>, vector<1x32x8xf32>
    %145 = vector.shape_cast %144 : vector<1x32x8xf32> to vector<32x8xf32>
    %cst_104 = arith.constant dense<0.000000e+00> : vector<32x8xf32>
    %146 = tpu.matmul %1, %145, %cst_104 {dimension_numbers = #tpu.dot_dimension_numbers<[1], [0], [0], [1], [0, 0, 1, 1], [], []>} : vector<32x32xf32>, vector<32x8xf32>, vector<32x8xf32> -> vector<32x8xf32>
    %c3_105 = arith.constant 3 : index
    %c0_106 = arith.constant 0 : index
    %c0_107 = arith.constant 0 : index
    %147 = vector.load %arg6[%c3_105, %c0_106, %c0_107] : memref<4x1x8xf32, #tpu.memory_space<vmem>>, vector<1x1x8xf32>
    %148 = vector.shape_cast %147 : vector<1x1x8xf32> to vector<1x8xf32>
    %149 = vector.broadcast %148 : vector<1x8xf32> to vector<32x8xf32>
    %150 = arith.addf %146, %149 : vector<32x8xf32>
    %151 = vector.shape_cast %150 : vector<32x8xf32> to vector<2x16x8xf32>
    %c3_108 = arith.constant 3 : index
    %c0_109 = arith.constant 0 : index
    %c0_110 = arith.constant 0 : index
    %152 = vector.load %arg7[%c3_108, %c0_109, %c0_110] : memref<4x32x8xf32, #tpu.memory_space<vmem>>, vector<1x32x8xf32>
    %153 = vector.shape_cast %152 : vector<1x32x8xf32> to vector<32x8xf32>
    %cst_111 = arith.constant dense<0.000000e+00> : vector<32x8xf32>
    %154 = tpu.matmul %2, %153, %cst_111 {dimension_numbers = #tpu.dot_dimension_numbers<[1], [0], [0], [1], [0, 0, 1, 1], [], []>} : vector<32x32xf32>, vector<32x8xf32>, vector<32x8xf32> -> vector<32x8xf32>
    %c3_112 = arith.constant 3 : index
    %c0_113 = arith.constant 0 : index
    %c0_114 = arith.constant 0 : index
    %155 = vector.load %arg8[%c3_112, %c0_113, %c0_114] : memref<4x1x8xf32, #tpu.memory_space<vmem>>, vector<1x1x8xf32>
    %156 = vector.shape_cast %155 : vector<1x1x8xf32> to vector<1x8xf32>
    %157 = vector.broadcast %156 : vector<1x8xf32> to vector<32x8xf32>
    %158 = arith.addf %154, %157 : vector<32x8xf32>
    %159 = vector.shape_cast %158 : vector<32x8xf32> to vector<2x16x8xf32>
    "tpu.trace_start"() <{level = 10 : i32, message = "bld,bsd->bls"}> : () -> ()
    %cst_115 = arith.constant dense<0.000000e+00> : vector<2x8x16xf32>
    %160 = tpu.matmul %143, %151, %cst_115 {dimension_numbers = #tpu.dot_dimension_numbers<[2], [2], [1], [1], [0, 0, 0, 1, 1, 1], [0], [0]>} : vector<2x8x8xf32>, vector<2x16x8xf32>, vector<2x8x16xf32> -> vector<2x8x16xf32>
    "tpu.trace_stop"() : () -> ()
    %cst_116 = arith.constant 0.353553385 : f32
    %161 = vector.broadcast %cst_116 : f32 to vector<2x8x16xf32>
    %162 = arith.mulf %160, %161 : vector<2x8x16xf32>
    %cst_117 = arith.constant dense<0xFF800000> : vector<2x8xf32>
    %163 = vector.multi_reduction <maximumf>, %162, %cst_117 [2] : vector<2x8x16xf32> to vector<2x8xf32>
    %164 = vector.shape_cast %163 : vector<2x8xf32> to vector<2x8x1xf32>
    %165 = vector.broadcast %164 : vector<2x8x1xf32> to vector<2x8x16xf32>
    %166 = arith.subf %162, %165 : vector<2x8x16xf32>
    %167 = math.exp %166 : vector<2x8x16xf32>
    %cst_118 = arith.constant dense<0.000000e+00> : vector<2x8xf32>
    %168 = vector.multi_reduction <add>, %167, %cst_118 [2] : vector<2x8x16xf32> to vector<2x8xf32>
    %169 = vector.shape_cast %168 : vector<2x8xf32> to vector<2x8x1xf32>
    "tpu.trace_start"() <{level = 10 : i32, message = "bls,bsd->bld"}> : () -> ()
    %cst_119 = arith.constant dense<0.000000e+00> : vector<2x8x8xf32>
    %170 = tpu.matmul %167, %159, %cst_119 {dimension_numbers = #tpu.dot_dimension_numbers<[2], [1], [1], [2], [0, 0, 0, 1, 1, 2], [0], [0]>} : vector<2x8x16xf32>, vector<2x16x8xf32>, vector<2x8x8xf32> -> vector<2x8x8xf32>
    "tpu.trace_stop"() : () -> ()
    %171 = tpu.reciprocal %169 {approx = true} : vector<2x8x1xf32> -> vector<2x8x1xf32>
    %172 = vector.broadcast %171 : vector<2x8x1xf32> to vector<2x8x8xf32>
    %173 = arith.mulf %170, %172 : vector<2x8x8xf32>
    %174 = vector.shape_cast %173 : vector<2x8x8xf32> to vector<16x8xf32>
    %c3_120 = arith.constant 3 : index
    %c0_121 = arith.constant 0 : index
    %c0_122 = arith.constant 0 : index
    %175 = vector.load %arg9[%c3_120, %c0_121, %c0_122] : memref<4x8x32xf32, #tpu.memory_space<vmem>>, vector<1x8x32xf32>
    %176 = vector.shape_cast %175 : vector<1x8x32xf32> to vector<8x32xf32>
    %cst_123 = arith.constant dense<0.000000e+00> : vector<16x32xf32>
    %177 = tpu.matmul %174, %176, %cst_123 {dimension_numbers = #tpu.dot_dimension_numbers<[1], [0], [0], [1], [0, 0, 1, 1], [], []>} : vector<16x8xf32>, vector<8x32xf32>, vector<16x32xf32> -> vector<16x32xf32>
    %178 = arith.addf %135, %177 : vector<16x32xf32>
    %c0_124 = arith.constant 0 : index
    %c0_125 = arith.constant 0 : index
    %179 = vector.load %arg11[%c0_124, %c0_125] : memref<16x32xf32, #tpu.memory_space<vmem>>, vector<16x32xf32>
    tpu.vector_store %arg11[%c0_124, %c0_125], %178 {strides = array<i32>} : memref<16x32xf32, #tpu.memory_space<vmem>>, vector<16x32xf32>,
    return
  }
}

</mosaic_0001>

<llo_original>
// kernel: attention_layer_pallas.1
$region0: #{attention_layer_pallas.1}
  #allocation0 [shape = 'u32[]', space=smem, size = 0x4, offset = 0x4, fixed_abs, tag = 'smem constant byte address 0x4 - core index']
  #allocation1 [shape = 'u32[144,128]{1,0:T(1,128)}', space=vmem, size = 0x12000, scoped, tag = 'internal scratch']
  %s0 = inlined_call_operand.vmem [shape: f32[16,32], index: 0, kind: input, shape index: {}]
  %s1 = inlined_call_operand.vmem [shape: f32[32,32], index: 1, kind: input, shape index: {}]
  %s2 = inlined_call_operand.vmem [shape: f32[32,32], index: 2, kind: input, shape index: {}]
  %s3 = inlined_call_operand.vmem [shape: f32[4,32,8], index: 3, kind: input, shape index: {}]
  %s4 = inlined_call_operand.vmem [shape: f32[4,1,8], index: 4, kind: input, shape index: {}]
  %s5 = inlined_call_operand.vmem [shape: f32[4,32,8], index: 5, kind: input, shape index: {}]
  %s6 = inlined_call_operand.vmem [shape: f32[4,1,8], index: 6, kind: input, shape index: {}]
  %s7 = inlined_call_operand.vmem [shape: f32[4,32,8], index: 7, kind: input, shape index: {}]
  %s8 = inlined_call_operand.vmem [shape: f32[4,1,8], index: 8, kind: input, shape index: {}]
  %s9 = inlined_call_operand.vmem [shape: f32[4,8,32], index: 9, kind: input, shape index: {}]
  %s10 = inlined_call_operand.vmem [shape: f32[1,32], index: 10, kind: input, shape index: {}]
  %s11 = inlined_call_operand.hbm [shape: f32[16,32], index: 11, kind: output, shape index: {}]
  %s12 = sld [smem:[#allocation0]]
  $region54: #{attention_layer_pallas.1} parent=0
    _
  %s14 = ssub.s32 1, %s12
  %s15 = scalar_select 0, %s14, %s12
  $region1: #{attention_layer_pallas.1} parent=0
    #allocation2 [shape = 'u8[8192]{0}', space=vmem, size = 0x2000, scoped, tag = 'output window, operand 0, single buffered']
    #allocation3 [shape = 's32[1]{0}', space=sflag, size = 0x4, scoped, tag = 'scoped memory for attention_layer_pallas.1']
    %16 = vsyncpa [#allocation3], 0
    // Predicated region
    $region2: #{attention_layer_pallas.1} parent=1 // pred_check
      _
    $region3: #{attention_layer_pallas.1} parent=1 // pred_check_branch
      %18 = sbr.rel (0) target = $region5
    $region4: #{attention_layer_pallas.1} parent=1 // pred_region
      _
    $region5: #{attention_layer_pallas.1} parent=1 // pred_fallthru
      _
    // Predicated region
    $region6: #{attention_layer_pallas.1} parent=1 // pred_check
      _
    $region7: #{attention_layer_pallas.1} parent=1 // pred_check_branch
      %20 = sbr.rel (0) target = $region9
    $region8: #{attention_layer_pallas.1} parent=1 // pred_region
      _
    $region9: #{attention_layer_pallas.1} parent=1 // pred_fallthru
      _
    // Predicated region
    $region10: #{attention_layer_pallas.1} parent=1 // pred_check
      _
    $region11: #{attention_layer_pallas.1} parent=1 // pred_check_branch
      %22 = sbr.rel (0) target = $region13
    $region12: #{attention_layer_pallas.1} parent=1 // pred_region
      _
    $region13: #{attention_layer_pallas.1} parent=1 // pred_fallthru
      _
    // Predicated region
    $region14: #{attention_layer_pallas.1} parent=1 // pred_check
      _
    $region15: #{attention_layer_pallas.1} parent=1 // pred_check_branch
      %24 = sbr.rel (0) target = $region17
    $region16: #{attention_layer_pallas.1} parent=1 // pred_region
      _
    $region17: #{attention_layer_pallas.1} parent=1 // pred_fallthru
      _
    // Predicated region
    $region18: #{attention_layer_pallas.1} parent=1 // pred_check
      _
    $region19: #{attention_layer_pallas.1} parent=1 // pred_check_branch
      %26 = sbr.rel (0) target = $region21
    $region20: #{attention_layer_pallas.1} parent=1 // pred_region
      _
    $region21: #{attention_layer_pallas.1} parent=1 // pred_fallthru
      _
    // Predicated region
    $region22: #{attention_layer_pallas.1} parent=1 // pred_check
      _
    $region23: #{attention_layer_pallas.1} parent=1 // pred_check_branch
      %28 = sbr.rel (0) target = $region25
    $region24: #{attention_layer_pallas.1} parent=1 // pred_region
      _
    $region25: #{attention_layer_pallas.1} parent=1 // pred_fallthru
      _
    // Predicated region
    $region26: #{attention_layer_pallas.1} parent=1 // pred_check
      _
    $region27: #{attention_layer_pallas.1} parent=1 // pred_check_branch
      %30 = sbr.rel (0) target = $region29
    $region28: #{attention_layer_pallas.1} parent=1 // pred_region
      _
    $region29: #{attention_layer_pallas.1} parent=1 // pred_fallthru
      _
    // Predicated region
    $region30: #{attention_layer_pallas.1} parent=1 // pred_check
      _
    $region31: #{attention_layer_pallas.1} parent=1 // pred_check_branch
      %32 = sbr.rel (0) target = $region33
    $region32: #{attention_layer_pallas.1} parent=1 // pred_region
      _
    $region33: #{attention_layer_pallas.1} parent=1 // pred_fallthru
      _
    // Predicated region
    $region34: #{attention_layer_pallas.1} parent=1 // pred_check
      _
    $region35: #{attention_layer_pallas.1} parent=1 // pred_check_branch
      %34 = sbr.rel (0) target = $region37
    $region36: #{attention_layer_pallas.1} parent=1 // pred_region
      _
    $region37: #{attention_layer_pallas.1} parent=1 // pred_fallthru
      _
    // Predicated region
    $region38: #{attention_layer_pallas.1} parent=1 // pred_check
      _
    $region39: #{attention_layer_pallas.1} parent=1 // pred_check_branch
      %36 = sbr.rel (0) target = $region41
    $region40: #{attention_layer_pallas.1} parent=1 // pred_region
      _
    $region41: #{attention_layer_pallas.1} parent=1 // pred_fallthru
      _
    // Predicated region
    $region42: #{attention_layer_pallas.1} parent=1 // pred_check
      _
    $region43: #{attention_layer_pallas.1} parent=1 // pred_check_branch
      %38 = sbr.rel (0) target = $region45
    $region44: #{attention_layer_pallas.1} parent=1 // pred_region
      _
    $region45: #{attention_layer_pallas.1} parent=1 // pred_fallthru
      _
    %v39 = vld [vmem:[%s0] sm:$0xff]
    %v40 = vld [vmem:[%s0 + $0x8] sm:$0xff]
    %v41 = vld [vmem:[%s1] sm:$0xff]
    %v42 = vld [vmem:[%s1 + $0x8] sm:$0xff]
    %v43 = vld [vmem:[%s1 + $0x10] sm:$0xff]
    %v44 = vld [vmem:[%s1 + $0x18] sm:$0xff]
    %v45 = vld [vmem:[%s2] sm:$0xff]
    %v46 = vld [vmem:[%s2 + $0x8] sm:$0xff]
    %v47 = vld [vmem:[%s2 + $0x10] sm:$0xff]
    %v48 = vld [vmem:[%s2 + $0x18] sm:$0xff]
    %v49 = vld [vmem:[%s10] sm:$0x1]
    %v51 = vlaneseq
    %v52 = vshrl.u32 %v51, 7
    %v53 = vsub.s32 0, %v52
    %v54 = vrot.slane %v49, %v53
    %v56 = vadd.f32 %v54, 0.0
    %v57 = vld [vmem:[%s3] sm:$0xff]
    %v58 = vld [vmem:[%s3 + $0x8] sm:$0xff]
    %v59 = vld [vmem:[%s3 + $0x10] sm:$0xff]
    %v60 = vld [vmem:[%s3 + $0x18] sm:$0xff]
    %v61 = vld [vmem:[%s4] sm:$0x1]
    %v63 = vlaneseq
    %v64 = vshrl.u32 %v63, 7
    %v65 = vsub.s32 0, %v64
    %v66 = vrot.slane %v61, %v65
    %vm68 = vcmask 261120
    %v70 = vsel %vm68, %v39, 0
    %v73 = vsel %vm68, %v40, 0
    %75 = vmatprep.subr.mxu0 0.0
    %76 = vmatpush1.msra.mxu0 %v57
    %77 = vmatprep.subr.mxu0 0.0
    %78 = vmatpush1.msra.mxu0 %v58
    %79 = vmatprep.subr.mxu0 0.0
    %80 = vmatpush1.msra.mxu0 %v59
    %81 = vmatprep.subr.mxu0 0.0
    %82 = vmatpush1.msra.mxu0 %v60
    %83 = vmatprep.subr.mxu0 0.0
    %84 = vmatpush1.msra.mxu0 0.0
    %85 = vmatprep.subr.mxu0 0.0
    %86 = vmatpush1.msra.mxu0 0.0
    %87 = vmatprep.subr.mxu0 0.0
    %88 = vmatpush1.msra.mxu0 0.0
    %89 = vmatprep.subr.mxu0 0.0
    %90 = vmatpush1.msra.mxu0 0.0
    %91 = vmatprep.subr.mxu0 0.0
    %92 = vmatpush1.msra.mxu0 0.0
    %93 = vmatprep.subr.mxu0 0.0
    %94 = vmatpush1.msra.mxu0 0.0
    %95 = vmatprep.subr.mxu0 0.0
    %96 = vmatpush1.msra.mxu0 0.0
    %97 = vmatprep.subr.mxu0 0.0
    %98 = vmatpush1.msra.mxu0 0.0
    %99 = vmatprep.subr.mxu0 0.0
    %100 = vmatpush1.msra.mxu0 0.0
    %101 = vmatprep.subr.mxu0 0.0
    %102 = vmatpush1.msra.mxu0 0.0
    %103 = vmatprep.subr.mxu0 0.0
    %104 = vmatpush1.msra.mxu0 0.0
    %105 = vmatprep.subr.mxu0 0.0
    %106 = vmatpush1.msra.mxu0 0.0
    %107 = vmatprep.subr.mxu0 0.0
    %108 = vmatpush1.msra.mxu0 0.0
    %109 = vmatprep.subr.mxu0 0.0
    %110 = vmatpush1.msra.mxu0 0.0
    %111 = vmatprep.subr.mxu0 0.0
    %112 = vmatpush1.msra.mxu0 0.0
    %113 = vmatprep.subr.mxu0 0.0
    %114 = vmatpush1.msra.mxu0 0.0
    %115 = vmatprep.subr.mxu0 0.0
    %116 = vmatpush1.msra.mxu0 0.0
    %117 = vmatprep.subr.mxu0 0.0
    %118 = vmatpush1.msra.mxu0 0.0
    %119 = vmatprep.subr.mxu0 0.0
    %120 = vmatpush1.msra.mxu0 0.0
    %121 = vmatprep.subr.mxu0 0.0
    %122 = vmatpush1.msra.mxu0 0.0
    %123 = vmatprep.subr.mxu0 0.0
    %124 = vmatpush1.msra.mxu0 0.0
    %125 = vmatprep.subr.mxu0 0.0
    %126 = vmatpush1.msra.mxu0 0.0
    %127 = vmatprep.subr.mxu0 0.0
    %128 = vmatpush1.msra.mxu0 0.0
    %129 = vmatprep.subr.mxu0 0.0
    %130 = vmatpush1.msra.mxu0 0.0
    %131 = vmatprep.subr.mxu0 0.0
    %132 = vmatpush1.msra.mxu0 0.0
    %133 = vmatprep.subr.mxu0 0.0
    %134 = vmatpush1.msra.mxu0 0.0
    %135 = vmatprep.subr.mxu0 0.0
    %136 = vmatpush1.msra.mxu0 0.0
    %137 = vmatprep.subr.mxu0 0.0
    %138 = vmatpush1.msra.mxu0 0.0
    %139 = vmatprep.mubr.f32.mxu0 0.0
    %140 = vmatmul.mubr.f32.gmra.mrb[0].mxu0 %v70
    %v141 = vpop.f32.mrb[0].mxu0
    %v142 = vadd.f32 %v66, %v141
    %v143 = vpop.f32.mrb[0].mxu0
    %144 = vmatprep.mubr.f32.mxu0 0.0
    %145 = vmatmul.mubr.f32.gmra.mrb[0].mxu0 %v73
    %v146 = vpop.f32.mrb[0].mxu0
    %v147 = vadd.f32 %v66, %v146
    %v148 = vpop.f32.mrb[0].mxu0
    %149 = vdwg.mxu0
    %v150 = vld [vmem:[%s5] sm:$0xff]
    %v151 = vld [vmem:[%s5 + $0x8] sm:$0xff]
    %v152 = vld [vmem:[%s5 + $0x10] sm:$0xff]
    %v153 = vld [vmem:[%s5 + $0x18] sm:$0xff]
    %v154 = vld [vmem:[%s6] sm:$0x1]
    %v156 = vlaneseq
    %v157 = vshrl.u32 %v156, 7
    %v158 = vsub.s32 0, %v157
    %v159 = vrot.slane %v154, %v158
    %v162 = vsel %vm68, %v41, 0
    %v165 = vsel %vm68, %v42, 0
    %v168 = vsel %vm68, %v43, 0
    %v171 = vsel %vm68, %v44, 0
    %173 = vmatprep.subr.mxu0 0.0
    %174 = vmatpush1.msra.mxu0 %v150
    %175 = vmatprep.subr.mxu0 0.0
    %176 = vmatpush1.msra.mxu0 %v151
    %177 = vmatprep.subr.mxu0 0.0
    %178 = vmatpush1.msra.mxu0 %v152
    %179 = vmatprep.subr.mxu0 0.0
    %180 = vmatpush1.msra.mxu0 %v153
    %181 = vmatprep.subr.mxu0 0.0
    %182 = vmatpush1.msra.mxu0 0.0
    %183 = vmatprep.subr.mxu0 0.0
    %184 = vmatpush1.msra.mxu0 0.0
    %185 = vmatprep.subr.mxu0 0.0
    %186 = vmatpush1.msra.mxu0 0.0
    %187 = vmatprep.subr.mxu0 0.0
    %188 = vmatpush1.msra.mxu0 0.0
    %189 = vmatprep.subr.mxu0 0.0
    %190 = vmatpush1.msra.mxu0 0.0
    %191 = vmatprep.subr.mxu0 0.0
    %192 = vmatpush1.msra.mxu0 0.0
    %193 = vmatprep.subr.mxu0 0.0
    %194 = vmatpush1.msra.mxu0 0.0
    %195 = vmatprep.subr.mxu0 0.0
    %196 = vmatpush1.msra.mxu0 0.0
    %197 = vmatprep.subr.mxu0 0.0
    %198 = vmatpush1.msra.mxu0 0.0
    %199 = vmatprep.subr.mxu0 0.0
    %200 = vmatpush1.msra.mxu0 0.0
    %201 = vmatprep.subr.mxu0 0.0
    %202 = vmatpush1.msra.mxu0 0.0
    %203 = vmatprep.subr.mxu0 0.0
    %204 = vmatpush1.msra.mxu0 0.0
    %205 = vmatprep.subr.mxu0 0.0
    %206 = vmatpush1.msra.mxu0 0.0
    %207 = vmatprep.subr.mxu0 0.0
    %208 = vmatpush1.msra.mxu0 0.0
    %209 = vmatprep.subr.mxu0 0.0
    %210 = vmatpush1.msra.mxu0 0.0
    %211 = vmatprep.subr.mxu0 0.0
    %212 = vmatpush1.msra.mxu0 0.0
    %213 = vmatprep.subr.mxu0 0.0
    %214 = vmatpush1.msra.mxu0 0.0
    %215 = vmatprep.subr.mxu0 0.0
    %216 = vmatpush1.msra.mxu0 0.0
    %217 = vmatprep.subr.mxu0 0.0
    %218 = vmatpush1.msra.mxu0 0.0
    %219 = vmatprep.subr.mxu0 0.0
    %220 = vmatpush1.msra.mxu0 0.0
    %221 = vmatprep.subr.mxu0 0.0
    %222 = vmatpush1.msra.mxu0 0.0
    %223 = vmatprep.subr.mxu0 0.0
    %224 = vmatpush1.msra.mxu0 0.0
    %225 = vmatprep.subr.mxu0 0.0
    %226 = vmatpush1.msra.mxu0 0.0
    %227 = vmatprep.subr.mxu0 0.0
    %228 = vmatpush1.msra.mxu0 0.0
    %229 = vmatprep.subr.mxu0 0.0
    %230 = vmatpush1.msra.mxu0 0.0
    %231 = vmatprep.subr.mxu0 0.0
    %232 = vmatpush1.msra.mxu0 0.0
    %233 = vmatprep.subr.mxu0 0.0
    %234 = vmatpush1.msra.mxu0 0.0
    %235 = vmatprep.subr.mxu0 0.0
    %236 = vmatpush1.msra.mxu0 0.0
    %237 = vmatprep.mubr.f32.mxu0 0.0
    %238 = vmatmul.mubr.f32.gmra.mrb[0].mxu0 %v162
    %v239 = vpop.f32.mrb[0].mxu0
    %v240 = vadd.f32 %v159, %v239
    %v241 = vpop.f32.mrb[0].mxu0
    %242 = vmatprep.mubr.f32.mxu0 0.0
    %243 = vmatmul.mubr.f32.gmra.mrb[0].mxu0 %v165
    %v244 = vpop.f32.mrb[0].mxu0
    %v245 = vadd.f32 %v159, %v244
    %v246 = vpop.f32.mrb[0].mxu0
    %247 = vmatprep.mubr.f32.mxu0 0.0
    %248 = vmatmul.mubr.f32.gmra.mrb[0].mxu0 %v168
    %v249 = vpop.f32.mrb[0].mxu0
    %v250 = vadd.f32 %v159, %v249
    %v251 = vpop.f32.mrb[0].mxu0
    %252 = vmatprep.mubr.f32.mxu0 0.0
    %253 = vmatmul.mubr.f32.gmra.mrb[0].mxu0 %v171
    %v254 = vpop.f32.mrb[0].mxu0
    %v255 = vadd.f32 %v159, %v254
    %v256 = vpop.f32.mrb[0].mxu0
    %257 = vdwg.mxu0
    %v258 = vld [vmem:[%s7] sm:$0xff]
    %v259 = vld [vmem:[%s7 + $0x8] sm:$0xff]
    %v260 = vld [vmem:[%s7 + $0x10] sm:$0xff]
    %v261 = vld [vmem:[%s7 + $0x18] sm:$0xff]
    %v262 = vld [vmem:[%s8] sm:$0x1]
    %v264 = vlaneseq
    %v265 = vshrl.u32 %v264, 7
    %v266 = vsub.s32 0, %v265
    %v267 = vrot.slane %v262, %v266
    %v270 = vsel %vm68, %v45, 0
    %v273 = vsel %vm68, %v46, 0
    %v276 = vsel %vm68, %v47, 0
    %v279 = vsel %vm68, %v48, 0
    %281 = vmatprep.subr.mxu0 0.0
    %282 = vmatpush1.msra.mxu0 %v258
    %283 = vmatprep.subr.mxu0 0.0
    %284 = vmatpush1.msra.mxu0 %v259
    %285 = vmatprep.subr.mxu0 0.0
    %286 = vmatpush1.msra.mxu0 %v260
    %287 = vmatprep.subr.mxu0 0.0
    %288 = vmatpush1.msra.mxu0 %v261
    %289 = vmatprep.subr.mxu0 0.0
    %290 = vmatpush1.msra.mxu0 0.0
    %291 = vmatprep.subr.mxu0 0.0
    %292 = vmatpush1.msra.mxu0 0.0
    %293 = vmatprep.subr.mxu0 0.0
    %294 = vmatpush1.msra.mxu0 0.0
    %295 = vmatprep.subr.mxu0 0.0
    %296 = vmatpush1.msra.mxu0 0.0
    %297 = vmatprep.subr.mxu0 0.0
    %298 = vmatpush1.msra.mxu0 0.0
    %299 = vmatprep.subr.mxu0 0.0
    %300 = vmatpush1.msra.mxu0 0.0
    %301 = vmatprep.subr.mxu0 0.0
    %302 = vmatpush1.msra.mxu0 0.0
    %303 = vmatprep.subr.mxu0 0.0
    %304 = vmatpush1.msra.mxu0 0.0
    %305 = vmatprep.subr.mxu0 0.0
    %306 = vmatpush1.msra.mxu0 0.0
    %307 = vmatprep.subr.mxu0 0.0
    %308 = vmatpush1.msra.mxu0 0.0
    %309 = vmatprep.subr.mxu0 0.0
    %310 = vmatpush1.msra.mxu0 0.0
    %311 = vmatprep.subr.mxu0 0.0
    %312 = vmatpush1.msra.mxu0 0.0
    %313 = vmatprep.subr.mxu0 0.0
    %314 = vmatpush1.msra.mxu0 0.0
    %315 = vmatprep.subr.mxu0 0.0
    %316 = vmatpush1.msra.mxu0 0.0
    %317 = vmatprep.subr.mxu0 0.0
    %318 = vmatpush1.msra.mxu0 0.0
    %319 = vmatprep.subr.mxu0 0.0
    %320 = vmatpush1.msra.mxu0 0.0
    %321 = vmatprep.subr.mxu0 0.0
    %322 = vmatpush1.msra.mxu0 0.0
    %323 = vmatprep.subr.mxu0 0.0
    %324 = vmatpush1.msra.mxu0 0.0
    %325 = vmatprep.subr.mxu0 0.0
    %326 = vmatpush1.msra.mxu0 0.0
    %327 = vmatprep.subr.mxu0 0.0
    %328 = vmatpush1.msra.mxu0 0.0
    %329 = vmatprep.subr.mxu0 0.0
    %330 = vmatpush1.msra.mxu0 0.0
    %331 = vmatprep.subr.mxu0 0.0
    %332 = vmatpush1.msra.mxu0 0.0
    %333 = vmatprep.subr.mxu0 0.0
    %334 = vmatpush1.msra.mxu0 0.0
    %335 = vmatprep.subr.mxu0 0.0
    %336 = vmatpush1.msra.mxu0 0.0
    %337 = vmatprep.subr.mxu0 0.0
    %338 = vmatpush1.msra.mxu0 0.0
    %339 = vmatprep.subr.mxu0 0.0
    %340 = vmatpush1.msra.mxu0 0.0
    %341 = vmatprep.subr.mxu0 0.0
    %342 = vmatpush1.msra.mxu0 0.0
    %343 = vmatprep.subr.mxu0 0.0
    %344 = vmatpush1.msra.mxu0 0.0
    %345 = vmatprep.mubr.f32.mxu0 0.0
    %346 = vmatmul.mubr.f32.gmra.mrb[0].mxu0 %v270
    %v347 = vpop.f32.mrb[0].mxu0
    %v348 = vadd.f32 %v267, %v347
    %v349 = vpop.f32.mrb[0].mxu0
    %350 = vmatprep.mubr.f32.mxu0 0.0
    %351 = vmatmul.mubr.f32.gmra.mrb[0].mxu0 %v273
    %v352 = vpop.f32.mrb[0].mxu0
    %v353 = vadd.f32 %v267, %v352
    %v354 = vpop.f32.mrb[0].mxu0
    %355 = vmatprep.mubr.f32.mxu0 0.0
    %356 = vmatmul.mubr.f32.gmra.mrb[0].mxu0 %v276
    %v357 = vpop.f32.mrb[0].mxu0
    %v358 = vadd.f32 %v267, %v357
    %v359 = vpop.f32.mrb[0].mxu0
    %360 = vmatprep.mubr.f32.mxu0 0.0
    %361 = vmatmul.mubr.f32.gmra.mrb[0].mxu0 %v279
    %v362 = vpop.f32.mrb[0].mxu0
    %v363 = vadd.f32 %v267, %v362
    %v364 = vpop.f32.mrb[0].mxu0
    %365 = vdwg.mxu0
    %vm366 = vcmask 64512
    %v368 = vsel %vm366, %v142, 0
    %v371 = vsel %vm366, %v240, 0
    %v374 = vsel %vm366, %v245, 0
    %376 = vmatprep.subr.mxu0 0.0
    %377 = vmatpush1.xpose.msra.mxu0 %v371
    %378 = vmatprep.subr.mxu0 0.0
    %379 = vmatpush1.xpose.msra.mxu0 %v374
    %380 = vmatprep.subr.mxu0 0.0
    %381 = vmatpush1.xpose.msra.mxu0 0.0
    %382 = vmatprep.subr.mxu0 0.0
    %383 = vmatpush1.xpose.msra.mxu0 0.0
    %384 = vmatprep.subr.mxu0 0.0
    %385 = vmatpush1.xpose.msra.mxu0 0.0
    %386 = vmatprep.subr.mxu0 0.0
    %387 = vmatpush1.xpose.msra.mxu0 0.0
    %388 = vmatprep.subr.mxu0 0.0
    %389 = vmatpush1.xpose.msra.mxu0 0.0
    %390 = vmatprep.subr.mxu0 0.0
    %391 = vmatpush1.xpose.msra.mxu0 0.0
    %392 = vmatprep.subr.mxu0 0.0
    %393 = vmatpush1.xpose.msra.mxu0 0.0
    %394 = vmatprep.subr.mxu0 0.0
    %395 = vmatpush1.xpose.msra.mxu0 0.0
    %396 = vmatprep.subr.mxu0 0.0
    %397 = vmatpush1.xpose.msra.mxu0 0.0
    %398 = vmatprep.subr.mxu0 0.0
    %399 = vmatpush1.xpose.msra.mxu0 0.0
    %400 = vmatprep.subr.mxu0 0.0
    %401 = vmatpush1.xpose.msra.mxu0 0.0
    %402 = vmatprep.subr.mxu0 0.0
    %403 = vmatpush1.xpose.msra.mxu0 0.0
    %404 = vmatprep.subr.mxu0 0.0
    %405 = vmatpush1.xpose.msra.mxu0 0.0
    %406 = vmatprep.subr.mxu0 0.0
    %407 = vmatpush1.xpose.msra.mxu0 0.0
    %408 = vmatprep.subr.mxu0 0.0
    %409 = vmatpush1.xpose.msra.mxu0 0.0
    %410 = vmatprep.subr.mxu0 0.0
    %411 = vmatpush1.xpose.msra.mxu0 0.0
    %412 = vmatprep.subr.mxu0 0.0
    %413 = vmatpush1.xpose.msra.mxu0 0.0
    %414 = vmatprep.subr.mxu0 0.0
    %415 = vmatpush1.xpose.msra.mxu0 0.0
    %416 = vmatprep.subr.mxu0 0.0
    %417 = vmatpush1.xpose.msra.mxu0 0.0
    %418 = vmatprep.subr.mxu0 0.0
    %419 = vmatpush1.xpose.msra.mxu0 0.0
    %420 = vmatprep.subr.mxu0 0.0
    %421 = vmatpush1.xpose.msra.mxu0 0.0
    %422 = vmatprep.subr.mxu0 0.0
    %423 = vmatpush1.xpose.msra.mxu0 0.0
    %424 = vmatprep.subr.mxu0 0.0
    %425 = vmatpush1.xpose.msra.mxu0 0.0
    %426 = vmatprep.subr.mxu0 0.0
    %427 = vmatpush1.xpose.msra.mxu0 0.0
    %428 = vmatprep.subr.mxu0 0.0
    %429 = vmatpush1.xpose.msra.mxu0 0.0
    %430 = vmatprep.subr.mxu0 0.0
    %431 = vmatpush1.xpose.msra.mxu0 0.0
    %432 = vmatprep.subr.mxu0 0.0
    %433 = vmatpush1.xpose.msra.mxu0 0.0
    %434 = vmatprep.subr.mxu0 0.0
    %435 = vmatpush1.xpose.msra.mxu0 0.0
    %436 = vmatprep.subr.mxu0 0.0
    %437 = vmatpush1.xpose.msra.mxu0 0.0
    %438 = vmatprep.subr.mxu0 0.0
    %439 = vmatpush1.xpose.msra.mxu0 0.0
    %440 = vmatprep.mubr.f32.mxu0 0.0
    %441 = vmatmul.mubr.f32.gmra.mrb[0].mxu0 %v368
    %v442 = vpop.f32.mrb[0].mxu0
    %v443 = vadd.f32 0.0, %v442
    %v444 = vpop.f32.mrb[0].mxu0
    %445 = vdwg.mxu0
    %v447 = vsel %vm366, %v147, 0
    %v450 = vsel %vm366, %v250, 0
    %v453 = vsel %vm366, %v255, 0
    %455 = vmatprep.subr.mxu0 0.0
    %456 = vmatpush1.xpose.msra.mxu0 %v450
    %457 = vmatprep.subr.mxu0 0.0
    %458 = vmatpush1.xpose.msra.mxu0 %v453
    %459 = vmatprep.subr.mxu0 0.0
    %460 = vmatpush1.xpose.msra.mxu0 0.0
    %461 = vmatprep.subr.mxu0 0.0
    %462 = vmatpush1.xpose.msra.mxu0 0.0
    %463 = vmatprep.subr.mxu0 0.0
    %464 = vmatpush1.xpose.msra.mxu0 0.0
    %465 = vmatprep.subr.mxu0 0.0
    %466 = vmatpush1.xpose.msra.mxu0 0.0
    %467 = vmatprep.subr.mxu0 0.0
    %468 = vmatpush1.xpose.msra.mxu0 0.0
    %469 = vmatprep.subr.mxu0 0.0
    %470 = vmatpush1.xpose.msra.mxu0 0.0
    %471 = vmatprep.subr.mxu0 0.0
    %472 = vmatpush1.xpose.msra.mxu0 0.0
    %473 = vmatprep.subr.mxu0 0.0
    %474 = vmatpush1.xpose.msra.mxu0 0.0
    %475 = vmatprep.subr.mxu0 0.0
    %476 = vmatpush1.xpose.msra.mxu0 0.0
    %477 = vmatprep.subr.mxu0 0.0
    %478 = vmatpush1.xpose.msra.mxu0 0.0
    %479 = vmatprep.subr.mxu0 0.0
    %480 = vmatpush1.xpose.msra.mxu0 0.0
    %481 = vmatprep.subr.mxu0 0.0
    %482 = vmatpush1.xpose.msra.mxu0 0.0
    %483 = vmatprep.subr.mxu0 0.0
    %484 = vmatpush1.xpose.msra.mxu0 0.0
    %485 = vmatprep.subr.mxu0 0.0
    %486 = vmatpush1.xpose.msra.mxu0 0.0
    %487 = vmatprep.subr.mxu0 0.0
    %488 = vmatpush1.xpose.msra.mxu0 0.0
    %489 = vmatprep.subr.mxu0 0.0
    %490 = vmatpush1.xpose.msra.mxu0 0.0
    %491 = vmatprep.subr.mxu0 0.0
    %492 = vmatpush1.xpose.msra.mxu0 0.0
    %493 = vmatprep.subr.mxu0 0.0
    %494 = vmatpush1.xpose.msra.mxu0 0.0
    %495 = vmatprep.subr.mxu0 0.0
    %496 = vmatpush1.xpose.msra.mxu0 0.0
    %497 = vmatprep.subr.mxu0 0.0
    %498 = vmatpush1.xpose.msra.mxu0 0.0
    %499 = vmatprep.subr.mxu0 0.0
    %500 = vmatpush1.xpose.msra.mxu0 0.0
    %501 = vmatprep.subr.mxu0 0.0
    %502 = vmatpush1.xpose.msra.mxu0 0.0
    %503 = vmatprep.subr.mxu0 0.0
    %504 = vmatpush1.xpose.msra.mxu0 0.0
    %505 = vmatprep.subr.mxu0 0.0
    %506 = vmatpush1.xpose.msra.mxu0 0.0
    %507 = vmatprep.subr.mxu0 0.0
    %508 = vmatpush1.xpose.msra.mxu0 0.0
    %509 = vmatprep.subr.mxu0 0.0
    %510 = vmatpush1.xpose.msra.mxu0 0.0
    %511 = vmatprep.subr.mxu0 0.0
    %512 = vmatpush1.xpose.msra.mxu0 0.0
    %513 = vmatprep.subr.mxu0 0.0
    %514 = vmatpush1.xpose.msra.mxu0 0.0
    %515 = vmatprep.subr.mxu0 0.0
    %516 = vmatpush1.xpose.msra.mxu0 0.0
    %517 = vmatprep.subr.mxu0 0.0
    %518 = vmatpush1.xpose.msra.mxu0 0.0
    %519 = vmatprep.mubr.f32.mxu0 0.0
    %520 = vmatmul.mubr.f32.gmra.mrb[0].mxu0 %v447
    %v521 = vpop.f32.mrb[0].mxu0
    %v522 = vadd.f32 0.0, %v521
    %v523 = vpop.f32.mrb[0].mxu0
    %524 = vdwg.mxu0
    %v525 = vmul.f32 %v443, 0.35355338
    %v526 = vmul.f32 %v522, 0.35355338
    %vm527 = vcmask 130048
    %v528 = vsel %vm527, %v525, -inf
    %529 = vmax.xlane.f32.xlu0 %v528
    %v530 = vpop.xlane.xlu0 %529
    %v531 = vsel %vm527, %v526, -inf
    %532 = vmax.xlane.f32.xlu0 %v531
    %v533 = vpop.xlane.xlu0 %532
    %v534 = vsub.f32 %v525, %v530
    %v535 = vsub.f32 %v526, %v533
    %v536 = vmul.f32 %v534, 1.442695
    %v537 = vpow.pop %v536
    %v538 = vmul.f32 %v535, 1.442695
    %v539 = vpow.pop %v538
    %v540 = vsel %vm527, %v537, 0.0
    %541 = vadd.xlane.f32.xlu0 %v540
    %v542 = vpop.xlane.xlu0 %541
    %v543 = vsel %vm527, %v539, 0.0
    %544 = vadd.xlane.f32.xlu0 %v543
    %v545 = vpop.xlane.xlu0 %544
    %v547 = vsel %vm527, %v537, 0
    %549 = vmatprep.subr.mxu0 0.0
    %550 = vmatpush1.msra.mxu0 %v348
    %551 = vmatprep.subr.mxu0 0.0
    %552 = vmatpush1.msra.mxu0 %v353
    %553 = vmatprep.subr.mxu0 0.0
    %554 = vmatpush1.msra.mxu0 0.0
    %555 = vmatprep.subr.mxu0 0.0
    %556 = vmatpush1.msra.mxu0 0.0
    %557 = vmatprep.subr.mxu0 0.0
    %558 = vmatpush1.msra.mxu0 0.0
    %559 = vmatprep.subr.mxu0 0.0
    %560 = vmatpush1.msra.mxu0 0.0
    %561 = vmatprep.subr.mxu0 0.0
    %562 = vmatpush1.msra.mxu0 0.0
    %563 = vmatprep.subr.mxu0 0.0
    %564 = vmatpush1.msra.mxu0 0.0
    %565 = vmatprep.subr.mxu0 0.0
    %566 = vmatpush1.msra.mxu0 0.0
    %567 = vmatprep.subr.mxu0 0.0
    %568 = vmatpush1.msra.mxu0 0.0
    %569 = vmatprep.subr.mxu0 0.0
    %570 = vmatpush1.msra.mxu0 0.0
    %571 = vmatprep.subr.mxu0 0.0
    %572 = vmatpush1.msra.mxu0 0.0
    %573 = vmatprep.subr.mxu0 0.0
    %574 = vmatpush1.msra.mxu0 0.0
    %575 = vmatprep.subr.mxu0 0.0
    %576 = vmatpush1.msra.mxu0 0.0
    %577 = vmatprep.subr.mxu0 0.0
    %578 = vmatpush1.msra.mxu0 0.0
    %579 = vmatprep.subr.mxu0 0.0
    %580 = vmatpush1.msra.mxu0 0.0
    %581 = vmatprep.subr.mxu0 0.0
    %582 = vmatpush1.msra.mxu0 0.0
    %583 = vmatprep.subr.mxu0 0.0
    %584 = vmatpush1.msra.mxu0 0.0
    %585 = vmatprep.subr.mxu0 0.0
    %586 = vmatpush1.msra.mxu0 0.0
    %587 = vmatprep.subr.mxu0 0.0
    %588 = vmatpush1.msra.mxu0 0.0
    %589 = vmatprep.subr.mxu0 0.0
    %590 = vmatpush1.msra.mxu0 0.0
    %591 = vmatprep.subr.mxu0 0.0
    %592 = vmatpush1.msra.mxu0 0.0
    %593 = vmatprep.subr.mxu0 0.0
    %594 = vmatpush1.msra.mxu0 0.0
    %595 = vmatprep.subr.mxu0 0.0
    %596 = vmatpush1.msra.mxu0 0.0
    %597 = vmatprep.subr.mxu0 0.0
    %598 = vmatpush1.msra.mxu0 0.0
    %599 = vmatprep.subr.mxu0 0.0
    %600 = vmatpush1.msra.mxu0 0.0
    %601 = vmatprep.subr.mxu0 0.0
    %602 = vmatpush1.msra.mxu0 0.0
    %603 = vmatprep.subr.mxu0 0.0
    %604 = vmatpush1.msra.mxu0 0.0
    %605 = vmatprep.subr.mxu0 0.0
    %606 = vmatpush1.msra.mxu0 0.0
    %607 = vmatprep.subr.mxu0 0.0
    %608 = vmatpush1.msra.mxu0 0.0
    %609 = vmatprep.subr.mxu0 0.0
    %610 = vmatpush1.msra.mxu0 0.0
    %611 = vmatprep.subr.mxu0 0.0
    %612 = vmatpush1.msra.mxu0 0.0
    %613 = vmatprep.mubr.f32.mxu0 0.0
    %614 = vmatmul.mubr.f32.gmra.mrb[0].mxu0 %v547
    %v615 = vpop.f32.mrb[0].mxu0
    %v616 = vadd.f32 0.0, %v615
    %v617 = vpop.f32.mrb[0].mxu0
    %618 = vdwg.mxu0
    %v620 = vsel %vm527, %v539, 0
    %622 = vmatprep.subr.mxu0 0.0
    %623 = vmatpush1.msra.mxu0 %v358
    %624 = vmatprep.subr.mxu0 0.0
    %625 = vmatpush1.msra.mxu0 %v363
    %626 = vmatprep.subr.mxu0 0.0
    %627 = vmatpush1.msra.mxu0 0.0
    %628 = vmatprep.subr.mxu0 0.0
    %629 = vmatpush1.msra.mxu0 0.0
    %630 = vmatprep.subr.mxu0 0.0
    %631 = vmatpush1.msra.mxu0 0.0
    %632 = vmatprep.subr.mxu0 0.0
    %633 = vmatpush1.msra.mxu0 0.0
    %634 = vmatprep.subr.mxu0 0.0
    %635 = vmatpush1.msra.mxu0 0.0
    %636 = vmatprep.subr.mxu0 0.0
    %637 = vmatpush1.msra.mxu0 0.0
    %638 = vmatprep.subr.mxu0 0.0
    %639 = vmatpush1.msra.mxu0 0.0
    %640 = vmatprep.subr.mxu0 0.0
    %641 = vmatpush1.msra.mxu0 0.0
    %642 = vmatprep.subr.mxu0 0.0
    %643 = vmatpush1.msra.mxu0 0.0
    %644 = vmatprep.subr.mxu0 0.0
    %645 = vmatpush1.msra.mxu0 0.0
    %646 = vmatprep.subr.mxu0 0.0
    %647 = vmatpush1.msra.mxu0 0.0
    %648 = vmatprep.subr.mxu0 0.0
    %649 = vmatpush1.msra.mxu0 0.0
    %650 = vmatprep.subr.mxu0 0.0
    %651 = vmatpush1.msra.mxu0 0.0
    %652 = vmatprep.subr.mxu0 0.0
    %653 = vmatpush1.msra.mxu0 0.0
    %654 = vmatprep.subr.mxu0 0.0
    %655 = vmatpush1.msra.mxu0 0.0
    %656 = vmatprep.subr.mxu0 0.0
    %657 = vmatpush1.msra.mxu0 0.0
    %658 = vmatprep.subr.mxu0 0.0
    %659 = vmatpush1.msra.mxu0 0.0
    %660 = vmatprep.subr.mxu0 0.0
    %661 = vmatpush1.msra.mxu0 0.0
    %662 = vmatprep.subr.mxu0 0.0
    %663 = vmatpush1.msra.mxu0 0.0
    %664 = vmatprep.subr.mxu0 0.0
    %665 = vmatpush1.msra.mxu0 0.0
    %666 = vmatprep.subr.mxu0 0.0
    %667 = vmatpush1.msra.mxu0 0.0
    %668 = vmatprep.subr.mxu0 0.0
    %669 = vmatpush1.msra.mxu0 0.0
    %670 = vmatprep.subr.mxu0 0.0
    %671 = vmatpush1.msra.mxu0 0.0
    %672 = vmatprep.subr.mxu0 0.0
    %673 = vmatpush1.msra.mxu0 0.0
    %674 = vmatprep.subr.mxu0 0.0
    %675 = vmatpush1.msra.mxu0 0.0
    %676 = vmatprep.subr.mxu0 0.0
    %677 = vmatpush1.msra.mxu0 0.0
    %678 = vmatprep.subr.mxu0 0.0
    %679 = vmatpush1.msra.mxu0 0.0
    %680 = vmatprep.subr.mxu0 0.0
    %681 = vmatpush1.msra.mxu0 0.0
    %682 = vmatprep.subr.mxu0 0.0
    %683 = vmatpush1.msra.mxu0 0.0
    %684 = vmatprep.subr.mxu0 0.0
    %685 = vmatpush1.msra.mxu0 0.0
    %686 = vmatprep.mubr.f32.mxu0 0.0
    %687 = vmatmul.mubr.f32.gmra.mrb[0].mxu0 %v620
    %v688 = vpop.f32.mrb[0].mxu0
    %v689 = vadd.f32 0.0, %v688
    %v690 = vpop.f32.mrb[0].mxu0
    %691 = vdwg.mxu0
    %v692 = vrcp.pop %v542
    %v693 = vrcp.pop %v545
    %v694 = vmul.f32 %v616, %v692
    %v695 = vmul.f32 %v689, %v693
    %v696 = vld [vmem:[%s9] sm:$0xff]
    %v698 = vsel %vm366, %v694, 0
    %v701 = vsel %vm366, %v695, 0
    %703 = vmatprep.subr.mxu0 0.0
    %704 = vmatpush1.msra.mxu0 %v696
    %705 = vmatprep.subr.mxu0 0.0
    %706 = vmatpush1.msra.mxu0 0.0
    %707 = vmatprep.subr.mxu0 0.0
    %708 = vmatpush1.msra.mxu0 0.0
    %709 = vmatprep.subr.mxu0 0.0
    %710 = vmatpush1.msra.mxu0 0.0
    %711 = vmatprep.subr.mxu0 0.0
    %712 = vmatpush1.msra.mxu0 0.0
    %713 = vmatprep.subr.mxu0 0.0
    %714 = vmatpush1.msra.mxu0 0.0
    %715 = vmatprep.subr.mxu0 0.0
    %716 = vmatpush1.msra.mxu0 0.0
    %717 = vmatprep.subr.mxu0 0.0
    %718 = vmatpush1.msra.mxu0 0.0
    %719 = vmatprep.subr.mxu0 0.0
    %720 = vmatpush1.msra.mxu0 0.0
    %721 = vmatprep.subr.mxu0 0.0
    %722 = vmatpush1.msra.mxu0 0.0
    %723 = vmatprep.subr.mxu0 0.0
    %724 = vmatpush1.msra.mxu0 0.0
    %725 = vmatprep.subr.mxu0 0.0
    %726 = vmatpush1.msra.mxu0 0.0
    %727 = vmatprep.subr.mxu0 0.0
    %728 = vmatpush1.msra.mxu0 0.0
    %729 = vmatprep.subr.mxu0 0.0
    %730 = vmatpush1.msra.mxu0 0.0
    %731 = vmatprep.subr.mxu0 0.0
    %732 = vmatpush1.msra.mxu0 0.0
    %733 = vmatprep.subr.mxu0 0.0
    %734 = vmatpush1.msra.mxu0 0.0
    %735 = vmatprep.subr.mxu0 0.0
    %736 = vmatpush1.msra.mxu0 0.0
    %737 = vmatprep.subr.mxu0 0.0
    %738 = vmatpush1.msra.mxu0 0.0
    %739 = vmatprep.subr.mxu0 0.0
    %740 = vmatpush1.msra.mxu0 0.0
    %741 = vmatprep.subr.mxu0 0.0
    %742 = vmatpush1.msra.mxu0 0.0
    %743 = vmatprep.subr.mxu0 0.0
    %744 = vmatpush1.msra.mxu0 0.0
    %745 = vmatprep.subr.mxu0 0.0
    %746 = vmatpush1.msra.mxu0 0.0
    %747 = vmatprep.subr.mxu0 0.0
    %748 = vmatpush1.msra.mxu0 0.0
    %749 = vmatprep.subr.mxu0 0.0
    %750 = vmatpush1.msra.mxu0 0.0
    %751 = vmatprep.subr.mxu0 0.0
    %752 = vmatpush1.msra.mxu0 0.0
    %753 = vmatprep.subr.mxu0 0.0
    %754 = vmatpush1.msra.mxu0 0.0
    %755 = vmatprep.subr.mxu0 0.0
    %756 = vmatpush1.msra.mxu0 0.0
    %757 = vmatprep.subr.mxu0 0.0
    %758 = vmatpush1.msra.mxu0 0.0
    %759 = vmatprep.subr.mxu0 0.0
    %760 = vmatpush1.msra.mxu0 0.0
    %761 = vmatprep.subr.mxu0 0.0
    %762 = vmatpush1.msra.mxu0 0.0
    %763 = vmatprep.subr.mxu0 0.0
    %764 = vmatpush1.msra.mxu0 0.0
    %765 = vmatprep.subr.mxu0 0.0
    %766 = vmatpush1.msra.mxu0 0.0
    %767 = vmatprep.mubr.f32.mxu0 0.0
    %768 = vmatmul.mubr.f32.gmra.mrb[0].mxu0 %v698
    %v769 = vpop.f32.mrb[0].mxu0
    %v770 = vadd.f32 0.0, %v769
    %v771 = vpop.f32.mrb[0].mxu0
    %772 = vmatprep.mubr.f32.mxu0 0.0
    %773 = vmatmul.mubr.f32.gmra.mrb[0].mxu0 %v701
    %v774 = vpop.f32.mrb[0].mxu0
    %v775 = vadd.f32 0.0, %v774
    %v776 = vpop.f32.mrb[0].mxu0
    %777 = vdwg.mxu0
    %v778 = vadd.f32 %v56, %v770
    %v779 = vadd.f32 %v56, %v775
    %s780 = scalar_lea.vmem %s3, 32
    %v781 = vld [vmem:[%s780] sm:$0xff]
    %v782 = vld [vmem:[%s780 + $0x8] sm:$0xff]
    %v783 = vld [vmem:[%s780 + $0x10] sm:$0xff]
    %v784 = vld [vmem:[%s780 + $0x18] sm:$0xff]
    %s785 = scalar_lea.vmem %s4, 1
    %v786 = vld [vmem:[%s785] sm:$0x1]
    %v788 = vlaneseq
    %v789 = vshrl.u32 %v788, 7
    %v790 = vsub.s32 0, %v789
    %v791 = vrot.slane %v786, %v790
    %793 = vmatprep.subr.mxu0 0.0
    %794 = vmatpush1.msra.mxu0 %v781
    %795 = vmatprep.subr.mxu0 0.0
    %796 = vmatpush1.msra.mxu0 %v782
    %797 = vmatprep.subr.mxu0 0.0
    %798 = vmatpush1.msra.mxu0 %v783
    %799 = vmatprep.subr.mxu0 0.0
    %800 = vmatpush1.msra.mxu0 %v784
    %801 = vmatprep.subr.mxu0 0.0
    %802 = vmatpush1.msra.mxu0 0.0
    %803 = vmatprep.subr.mxu0 0.0
    %804 = vmatpush1.msra.mxu0 0.0
    %805 = vmatprep.subr.mxu0 0.0
    %806 = vmatpush1.msra.mxu0 0.0
    %807 = vmatprep.subr.mxu0 0.0
    %808 = vmatpush1.msra.mxu0 0.0
    %809 = vmatprep.subr.mxu0 0.0
    %810 = vmatpush1.msra.mxu0 0.0
    %811 = vmatprep.subr.mxu0 0.0
    %812 = vmatpush1.msra.mxu0 0.0
    %813 = vmatprep.subr.mxu0 0.0
    %814 = vmatpush1.msra.mxu0 0.0
    %815 = vmatprep.subr.mxu0 0.0
    %816 = vmatpush1.msra.mxu0 0.0
    %817 = vmatprep.subr.mxu0 0.0
    %818 = vmatpush1.msra.mxu0 0.0
    %819 = vmatprep.subr.mxu0 0.0
    %820 = vmatpush1.msra.mxu0 0.0
    %821 = vmatprep.subr.mxu0 0.0
    %822 = vmatpush1.msra.mxu0 0.0
    %823 = vmatprep.subr.mxu0 0.0
    %824 = vmatpush1.msra.mxu0 0.0
    %825 = vmatprep.subr.mxu0 0.0
    %826 = vmatpush1.msra.mxu0 0.0
    %827 = vmatprep.subr.mxu0 0.0
    %828 = vmatpush1.msra.mxu0 0.0
    %829 = vmatprep.subr.mxu0 0.0
    %830 = vmatpush1.msra.mxu0 0.0
    %831 = vmatprep.subr.mxu0 0.0
    %832 = vmatpush1.msra.mxu0 0.0
    %833 = vmatprep.subr.mxu0 0.0
    %834 = vmatpush1.msra.mxu0 0.0
    %835 = vmatprep.subr.mxu0 0.0
    %836 = vmatpush1.msra.mxu0 0.0
    %837 = vmatprep.subr.mxu0 0.0
    %838 = vmatpush1.msra.mxu0 0.0
    %839 = vmatprep.subr.mxu0 0.0
    %840 = vmatpush1.msra.mxu0 0.0
    %841 = vmatprep.subr.mxu0 0.0
    %842 = vmatpush1.msra.mxu0 0.0
    %843 = vmatprep.subr.mxu0 0.0
    %844 = vmatpush1.msra.mxu0 0.0
    %845 = vmatprep.subr.mxu0 0.0
    %846 = vmatpush1.msra.mxu0 0.0
    %847 = vmatprep.subr.mxu0 0.0
    %848 = vmatpush1.msra.mxu0 0.0
    %849 = vmatprep.subr.mxu0 0.0
    %850 = vmatpush1.msra.mxu0 0.0
    %851 = vmatprep.subr.mxu0 0.0
    %852 = vmatpush1.msra.mxu0 0.0
    %853 = vmatprep.subr.mxu0 0.0
    %854 = vmatpush1.msra.mxu0 0.0
    %855 = vmatprep.subr.mxu0 0.0
    %856 = vmatpush1.msra.mxu0 0.0
    %857 = vmatprep.mubr.f32.mxu0 0.0
    %858 = vmatmul.mubr.f32.gmra.mrb[0].mxu0 %v70
    %v859 = vpop.f32.mrb[0].mxu0
    %v860 = vadd.f32 %v791, %v859
    %v861 = vpop.f32.mrb[0].mxu0
    %862 = vmatprep.mubr.f32.mxu0 0.0
    %863 = vmatmul.mubr.f32.gmra.mrb[0].mxu0 %v73
    %v864 = vpop.f32.mrb[0].mxu0
    %v865 = vadd.f32 %v791, %v864
    %v866 = vpop.f32.mrb[0].mxu0
    %867 = vdwg.mxu0
    %s868 = scalar_lea.vmem %s5, 32
    %v869 = vld [vmem:[%s868] sm:$0xff]
    %v870 = vld [vmem:[%s868 + $0x8] sm:$0xff]
    %v871 = vld [vmem:[%s868 + $0x10] sm:$0xff]
    %v872 = vld [vmem:[%s868 + $0x18] sm:$0xff]
    %s873 = scalar_lea.vmem %s6, 1
    %v874 = vld [vmem:[%s873] sm:$0x1]
    %v876 = vlaneseq
    %v877 = vshrl.u32 %v876, 7
    %v878 = vsub.s32 0, %v877
    %v879 = vrot.slane %v874, %v878
    %881 = vmatprep.subr.mxu0 0.0
    %882 = vmatpush1.msra.mxu0 %v869
    %883 = vmatprep.subr.mxu0 0.0
    %884 = vmatpush1.msra.mxu0 %v870
    %885 = vmatprep.subr.mxu0 0.0
    %886 = vmatpush1.msra.mxu0 %v871
    %887 = vmatprep.subr.mxu0 0.0
    %888 = vmatpush1.msra.mxu0 %v872
    %889 = vmatprep.subr.mxu0 0.0
    %890 = vmatpush1.msra.mxu0 0.0
    %891 = vmatprep.subr.mxu0 0.0
    %892 = vmatpush1.msra.mxu0 0.0
    %893 = vmatprep.subr.mxu0 0.0
    %894 = vmatpush1.msra.mxu0 0.0
    %895 = vmatprep.subr.mxu0 0.0
    %896 = vmatpush1.msra.mxu0 0.0
    %897 = vmatprep.subr.mxu0 0.0
    %898 = vmatpush1.msra.mxu0 0.0
    %899 = vmatprep.subr.mxu0 0.0
    %900 = vmatpush1.msra.mxu0 0.0
    %901 = vmatprep.subr.mxu0 0.0
    %902 = vmatpush1.msra.mxu0 0.0
    %903 = vmatprep.subr.mxu0 0.0
    %904 = vmatpush1.msra.mxu0 0.0
    %905 = vmatprep.subr.mxu0 0.0
    %906 = vmatpush1.msra.mxu0 0.0
    %907 = vmatprep.subr.mxu0 0.0
    %908 = vmatpush1.msra.mxu0 0.0
    %909 = vmatprep.subr.mxu0 0.0
    %910 = vmatpush1.msra.mxu0 0.0
    %911 = vmatprep.subr.mxu0 0.0
    %912 = vmatpush1.msra.mxu0 0.0
    %913 = vmatprep.subr.mxu0 0.0
    %914 = vmatpush1.msra.mxu0 0.0
    %915 = vmatprep.subr.mxu0 0.0
    %916 = vmatpush1.msra.mxu0 0.0
    %917 = vmatprep.subr.mxu0 0.0
    %918 = vmatpush1.msra.mxu0 0.0
    %919 = vmatprep.subr.mxu0 0.0
    %920 = vmatpush1.msra.mxu0 0.0
    %921 = vmatprep.subr.mxu0 0.0
    %922 = vmatpush1.msra.mxu0 0.0
    %923 = vmatprep.subr.mxu0 0.0
    %924 = vmatpush1.msra.mxu0 0.0
    %925 = vmatprep.subr.mxu0 0.0
    %926 = vmatpush1.msra.mxu0 0.0
    %927 = vmatprep.subr.mxu0 0.0
    %928 = vmatpush1.msra.mxu0 0.0
    %929 = vmatprep.subr.mxu0 0.0
    %930 = vmatpush1.msra.mxu0 0.0
    %931 = vmatprep.subr.mxu0 0.0
    %932 = vmatpush1.msra.mxu0 0.0
    %933 = vmatprep.subr.mxu0 0.0
    %934 = vmatpush1.msra.mxu0 0.0
    %935 = vmatprep.subr.mxu0 0.0
    %936 = vmatpush1.msra.mxu0 0.0
    %937 = vmatprep.subr.mxu0 0.0
    %938 = vmatpush1.msra.mxu0 0.0
    %939 = vmatprep.subr.mxu0 0.0
    %940 = vmatpush1.msra.mxu0 0.0
    %941 = vmatprep.subr.mxu0 0.0
    %942 = vmatpush1.msra.mxu0 0.0
    %943 = vmatprep.subr.mxu0 0.0
    %944 = vmatpush1.msra.mxu0 0.0
    %945 = vmatprep.mubr.f32.mxu0 0.0
    %946 = vmatmul.mubr.f32.gmra.mrb[0].mxu0 %v162
    %v947 = vpop.f32.mrb[0].mxu0
    %v948 = vadd.f32 %v879, %v947
    %v949 = vpop.f32.mrb[0].mxu0
    %950 = vmatprep.mubr.f32.mxu0 0.0
    %951 = vmatmul.mubr.f32.gmra.mrb[0].mxu0 %v165
    %v952 = vpop.f32.mrb[0].mxu0
    %v953 = vadd.f32 %v879, %v952
    %v954 = vpop.f32.mrb[0].mxu0
    %955 = vmatprep.mubr.f32.mxu0 0.0
    %956 = vmatmul.mubr.f32.gmra.mrb[0].mxu0 %v168
    %v957 = vpop.f32.mrb[0].mxu0
    %v958 = vadd.f32 %v879, %v957
    %v959 = vpop.f32.mrb[0].mxu0
    %960 = vmatprep.mubr.f32.mxu0 0.0
    %961 = vmatmul.mubr.f32.gmra.mrb[0].mxu0 %v171
    %v962 = vpop.f32.mrb[0].mxu0
    %v963 = vadd.f32 %v879, %v962
    %v964 = vpop.f32.mrb[0].mxu0
    %965 = vdwg.mxu0
    %s966 = scalar_lea.vmem %s7, 32
    %v967 = vld [vmem:[%s966] sm:$0xff]
    %v968 = vld [vmem:[%s966 + $0x8] sm:$0xff]
    %v969 = vld [vmem:[%s966 + $0x10] sm:$0xff]
    %v970 = vld [vmem:[%s966 + $0x18] sm:$0xff]
    %s971 = scalar_lea.vmem %s8, 1
    %v972 = vld [vmem:[%s971] sm:$0x1]
    %v974 = vlaneseq
    %v975 = vshrl.u32 %v974, 7
    %v976 = vsub.s32 0, %v975
    %v977 = vrot.slane %v972, %v976
    %979 = vmatprep.subr.mxu0 0.0
    %980 = vmatpush1.msra.mxu0 %v967
    %981 = vmatprep.subr.mxu0 0.0
    %982 = vmatpush1.msra.mxu0 %v968
    %983 = vmatprep.subr.mxu0 0.0
    %984 = vmatpush1.msra.mxu0 %v969
    %985 = vmatprep.subr.mxu0 0.0
    %986 = vmatpush1.msra.mxu0 %v970
    %987 = vmatprep.subr.mxu0 0.0
    %988 = vmatpush1.msra.mxu0 0.0
    %989 = vmatprep.subr.mxu0 0.0
    %990 = vmatpush1.msra.mxu0 0.0
    %991 = vmatprep.subr.mxu0 0.0
    %992 = vmatpush1.msra.mxu0 0.0
    %993 = vmatprep.subr.mxu0 0.0
    %994 = vmatpush1.msra.mxu0 0.0
    %995 = vmatprep.subr.mxu0 0.0
    %996 = vmatpush1.msra.mxu0 0.0
    %997 = vmatprep.subr.mxu0 0.0
    %998 = vmatpush1.msra.mxu0 0.0
    %999 = vmatprep.subr.mxu0 0.0
    %1000 = vmatpush1.msra.mxu0 0.0
    %1001 = vmatprep.subr.mxu0 0.0
    %1002 = vmatpush1.msra.mxu0 0.0
    %1003 = vmatprep.subr.mxu0 0.0
    %1004 = vmatpush1.msra.mxu0 0.0
    %1005 = vmatprep.subr.mxu0 0.0
    %1006 = vmatpush1.msra.mxu0 0.0
    %1007 = vmatprep.subr.mxu0 0.0
    %1008 = vmatpush1.msra.mxu0 0.0
    %1009 = vmatprep.subr.mxu0 0.0
    %1010 = vmatpush1.msra.mxu0 0.0
    %1011 = vmatprep.subr.mxu0 0.0
    %1012 = vmatpush1.msra.mxu0 0.0
    %1013 = vmatprep.subr.mxu0 0.0
    %1014 = vmatpush1.msra.mxu0 0.0
    %1015 = vmatprep.subr.mxu0 0.0
    %1016 = vmatpush1.msra.mxu0 0.0
    %1017 = vmatprep.subr.mxu0 0.0
    %1018 = vmatpush1.msra.mxu0 0.0
    %1019 = vmatprep.subr.mxu0 0.0
    %1020 = vmatpush1.msra.mxu0 0.0
    %1021 = vmatprep.subr.mxu0 0.0
    %1022 = vmatpush1.msra.mxu0 0.0
    %1023 = vmatprep.subr.mxu0 0.0
    %1024 = vmatpush1.msra.mxu0 0.0
    %1025 = vmatprep.subr.mxu0 0.0
    %1026 = vmatpush1.msra.mxu0 0.0
    %1027 = vmatprep.subr.mxu0 0.0
    %1028 = vmatpush1.msra.mxu0 0.0
    %1029 = vmatprep.subr.mxu0 0.0
    %1030 = vmatpush1.msra.mxu0 0.0
    %1031 = vmatprep.subr.mxu0 0.0
    %1032 = vmatpush1.msra.mxu0 0.0
    %1033 = vmatprep.subr.mxu0 0.0
    %1034 = vmatpush1.msra.mxu0 0.0
    %1035 = vmatprep.subr.mxu0 0.0
    %1036 = vmatpush1.msra.mxu0 0.0
    %1037 = vmatprep.subr.mxu0 0.0
    %1038 = vmatpush1.msra.mxu0 0.0
    %1039 = vmatprep.subr.mxu0 0.0
    %1040 = vmatpush1.msra.mxu0 0.0
    %1041 = vmatprep.subr.mxu0 0.0
    %1042 = vmatpush1.msra.mxu0 0.0
    %1043 = vmatprep.mubr.f32.mxu0 0.0
    %1044 = vmatmul.mubr.f32.gmra.mrb[0].mxu0 %v270
    %v1045 = vpop.f32.mrb[0].mxu0
    %v1046 = vadd.f32 %v977, %v1045
    %v1047 = vpop.f32.mrb[0].mxu0
    %1048 = vmatprep.mubr.f32.mxu0 0.0
    %1049 = vmatmul.mubr.f32.gmra.mrb[0].mxu0 %v273
    %v1050 = vpop.f32.mrb[0].mxu0
    %v1051 = vadd.f32 %v977, %v1050
    %v1052 = vpop.f32.mrb[0].mxu0
    %1053 = vmatprep.mubr.f32.mxu0 0.0
    %1054 = vmatmul.mubr.f32.gmra.mrb[0].mxu0 %v276
    %v1055 = vpop.f32.mrb[0].mxu0
    %v1056 = vadd.f32 %v977, %v1055
    %v1057 = vpop.f32.mrb[0].mxu0
    %1058 = vmatprep.mubr.f32.mxu0 0.0
    %1059 = vmatmul.mubr.f32.gmra.mrb[0].mxu0 %v279
    %v1060 = vpop.f32.mrb[0].mxu0
    %v1061 = vadd.f32 %v977, %v1060
    %v1062 = vpop.f32.mrb[0].mxu0
    %1063 = vdwg.mxu0
    %v1065 = vsel %vm366, %v860, 0
    %v1068 = vsel %vm366, %v948, 0
    %v1071 = vsel %vm366, %v953, 0
    %1073 = vmatprep.subr.mxu0 0.0
    %1074 = vmatpush1.xpose.msra.mxu0 %v1068
    %1075 = vmatprep.subr.mxu0 0.0
    %1076 = vmatpush1.xpose.msra.mxu0 %v1071
    %1077 = vmatprep.subr.mxu0 0.0
    %1078 = vmatpush1.xpose.msra.mxu0 0.0
    %1079 = vmatprep.subr.mxu0 0.0
    %1080 = vmatpush1.xpose.msra.mxu0 0.0
    %1081 = vmatprep.subr.mxu0 0.0
    %1082 = vmatpush1.xpose.msra.mxu0 0.0
    %1083 = vmatprep.subr.mxu0 0.0
    %1084 = vmatpush1.xpose.msra.mxu0 0.0
    %1085 = vmatprep.subr.mxu0 0.0
    %1086 = vmatpush1.xpose.msra.mxu0 0.0
    %1087 = vmatprep.subr.mxu0 0.0
    %1088 = vmatpush1.xpose.msra.mxu0 0.0
    %1089 = vmatprep.subr.mxu0 0.0
    %1090 = vmatpush1.xpose.msra.mxu0 0.0
    %1091 = vmatprep.subr.mxu0 0.0
    %1092 = vmatpush1.xpose.msra.mxu0 0.0
    %1093 = vmatprep.subr.mxu0 0.0
    %1094 = vmatpush1.xpose.msra.mxu0 0.0
    %1095 = vmatprep.subr.mxu0 0.0
    %1096 = vmatpush1.xpose.msra.mxu0 0.0
    %1097 = vmatprep.subr.mxu0 0.0
    %1098 = vmatpush1.xpose.msra.mxu0 0.0
    %1099 = vmatprep.subr.mxu0 0.0
    %1100 = vmatpush1.xpose.msra.mxu0 0.0
    %1101 = vmatprep.subr.mxu0 0.0
    %1102 = vmatpush1.xpose.msra.mxu0 0.0
    %1103 = vmatprep.subr.mxu0 0.0
    %1104 = vmatpush1.xpose.msra.mxu0 0.0
    %1105 = vmatprep.subr.mxu0 0.0
    %1106 = vmatpush1.xpose.msra.mxu0 0.0
    %1107 = vmatprep.subr.mxu0 0.0
    %1108 = vmatpush1.xpose.msra.mxu0 0.0
    %1109 = vmatprep.subr.mxu0 0.0
    %1110 = vmatpush1.xpose.msra.mxu0 0.0
    %1111 = vmatprep.subr.mxu0 0.0
    %1112 = vmatpush1.xpose.msra.mxu0 0.0
    %1113 = vmatprep.subr.mxu0 0.0
    %1114 = vmatpush1.xpose.msra.mxu0 0.0
    %1115 = vmatprep.subr.mxu0 0.0
    %1116 = vmatpush1.xpose.msra.mxu0 0.0
    %1117 = vmatprep.subr.mxu0 0.0
    %1118 = vmatpush1.xpose.msra.mxu0 0.0
    %1119 = vmatprep.subr.mxu0 0.0
    %1120 = vmatpush1.xpose.msra.mxu0 0.0
    %1121 = vmatprep.subr.mxu0 0.0
    %1122 = vmatpush1.xpose.msra.mxu0 0.0
    %1123 = vmatprep.subr.mxu0 0.0
    %1124 = vmatpush1.xpose.msra.mxu0 0.0
    %1125 = vmatprep.subr.mxu0 0.0
    %1126 = vmatpush1.xpose.msra.mxu0 0.0
    %1127 = vmatprep.subr.mxu0 0.0
    %1128 = vmatpush1.xpose.msra.mxu0 0.0
    %1129 = vmatprep.subr.mxu0 0.0
    %1130 = vmatpush1.xpose.msra.mxu0 0.0
    %1131 = vmatprep.subr.mxu0 0.0
    %1132 = vmatpush1.xpose.msra.mxu0 0.0
    %1133 = vmatprep.subr.mxu0 0.0
    %1134 = vmatpush1.xpose.msra.mxu0 0.0
    %1135 = vmatprep.subr.mxu0 0.0
    %1136 = vmatpush1.xpose.msra.mxu0 0.0
    %1137 = vmatprep.mubr.f32.mxu0 0.0
    %1138 = vmatmul.mubr.f32.gmra.mrb[0].mxu0 %v1065
    %v1139 = vpop.f32.mrb[0].mxu0
    %v1140 = vadd.f32 0.0, %v1139
    %v1141 = vpop.f32.mrb[0].mxu0
    %1142 = vdwg.mxu0
    %v1144 = vsel %vm366, %v865, 0
    %v1147 = vsel %vm366, %v958, 0
    %v1150 = vsel %vm366, %v963, 0
    %1152 = vmatprep.subr.mxu0 0.0
    %1153 = vmatpush1.xpose.msra.mxu0 %v1147
    %1154 = vmatprep.subr.mxu0 0.0
    %1155 = vmatpush1.xpose.msra.mxu0 %v1150
    %1156 = vmatprep.subr.mxu0 0.0
    %1157 = vmatpush1.xpose.msra.mxu0 0.0
    %1158 = vmatprep.subr.mxu0 0.0
    %1159 = vmatpush1.xpose.msra.mxu0 0.0
    %1160 = vmatprep.subr.mxu0 0.0
    %1161 = vmatpush1.xpose.msra.mxu0 0.0
    %1162 = vmatprep.subr.mxu0 0.0
    %1163 = vmatpush1.xpose.msra.mxu0 0.0
    %1164 = vmatprep.subr.mxu0 0.0
    %1165 = vmatpush1.xpose.msra.mxu0 0.0
    %1166 = vmatprep.subr.mxu0 0.0
    %1167 = vmatpush1.xpose.msra.mxu0 0.0
    %1168 = vmatprep.subr.mxu0 0.0
    %1169 = vmatpush1.xpose.msra.mxu0 0.0
    %1170 = vmatprep.subr.mxu0 0.0
    %1171 = vmatpush1.xpose.msra.mxu0 0.0
    %1172 = vmatprep.subr.mxu0 0.0
    %1173 = vmatpush1.xpose.msra.mxu0 0.0
    %1174 = vmatprep.subr.mxu0 0.0
    %1175 = vmatpush1.xpose.msra.mxu0 0.0
    %1176 = vmatprep.subr.mxu0 0.0
    %1177 = vmatpush1.xpose.msra.mxu0 0.0
    %1178 = vmatprep.subr.mxu0 0.0
    %1179 = vmatpush1.xpose.msra.mxu0 0.0
    %1180 = vmatprep.subr.mxu0 0.0
    %1181 = vmatpush1.xpose.msra.mxu0 0.0
    %1182 = vmatprep.subr.mxu0 0.0
    %1183 = vmatpush1.xpose.msra.mxu0 0.0
    %1184 = vmatprep.subr.mxu0 0.0
    %1185 = vmatpush1.xpose.msra.mxu0 0.0
    %1186 = vmatprep.subr.mxu0 0.0
    %1187 = vmatpush1.xpose.msra.mxu0 0.0
    %1188 = vmatprep.subr.mxu0 0.0
    %1189 = vmatpush1.xpose.msra.mxu0 0.0
    %1190 = vmatprep.subr.mxu0 0.0
    %1191 = vmatpush1.xpose.msra.mxu0 0.0
    %1192 = vmatprep.subr.mxu0 0.0
    %1193 = vmatpush1.xpose.msra.mxu0 0.0
    %1194 = vmatprep.subr.mxu0 0.0
    %1195 = vmatpush1.xpose.msra.mxu0 0.0
    %1196 = vmatprep.subr.mxu0 0.0
    %1197 = vmatpush1.xpose.msra.mxu0 0.0
    %1198 = vmatprep.subr.mxu0 0.0
    %1199 = vmatpush1.xpose.msra.mxu0 0.0
    %1200 = vmatprep.subr.mxu0 0.0
    %1201 = vmatpush1.xpose.msra.mxu0 0.0
    %1202 = vmatprep.subr.mxu0 0.0
    %1203 = vmatpush1.xpose.msra.mxu0 0.0
    %1204 = vmatprep.subr.mxu0 0.0
    %1205 = vmatpush1.xpose.msra.mxu0 0.0
    %1206 = vmatprep.subr.mxu0 0.0
    %1207 = vmatpush1.xpose.msra.mxu0 0.0
    %1208 = vmatprep.subr.mxu0 0.0
    %1209 = vmatpush1.xpose.msra.mxu0 0.0
    %1210 = vmatprep.subr.mxu0 0.0
    %1211 = vmatpush1.xpose.msra.mxu0 0.0
    %1212 = vmatprep.subr.mxu0 0.0
    %1213 = vmatpush1.xpose.msra.mxu0 0.0
    %1214 = vmatprep.subr.mxu0 0.0
    %1215 = vmatpush1.xpose.msra.mxu0 0.0
    %1216 = vmatprep.mubr.f32.mxu0 0.0
    %1217 = vmatmul.mubr.f32.gmra.mrb[0].mxu0 %v1144
    %v1218 = vpop.f32.mrb[0].mxu0
    %v1219 = vadd.f32 0.0, %v1218
    %v1220 = vpop.f32.mrb[0].mxu0
    %1221 = vdwg.mxu0
    %v1222 = vmul.f32 %v1140, 0.35355338
    %v1223 = vmul.f32 %v1219, 0.35355338
    %v1224 = vsel %vm527, %v1222, -inf
    %1225 = vmax.xlane.f32.xlu0 %v1224
    %v1226 = vpop.xlane.xlu0 %1225
    %v1227 = vsel %vm527, %v1223, -inf
    %1228 = vmax.xlane.f32.xlu0 %v1227
    %v1229 = vpop.xlane.xlu0 %1228
    %v1230 = vsub.f32 %v1222, %v1226
    %v1231 = vsub.f32 %v1223, %v1229
    %v1232 = vmul.f32 %v1230, 1.442695
    %v1233 = vpow.pop %v1232
    %v1234 = vmul.f32 %v1231, 1.442695
    %v1235 = vpow.pop %v1234
    %v1236 = vsel %vm527, %v1233, 0.0
    %1237 = vadd.xlane.f32.xlu0 %v1236
    %v1238 = vpop.xlane.xlu0 %1237
    %v1239 = vsel %vm527, %v1235, 0.0
    %1240 = vadd.xlane.f32.xlu0 %v1239
    %v1241 = vpop.xlane.xlu0 %1240
    %v1243 = vsel %vm527, %v1233, 0
    %1245 = vmatprep.subr.mxu0 0.0
    %1246 = vmatpush1.msra.mxu0 %v1046
    %1247 = vmatprep.subr.mxu0 0.0
    %1248 = vmatpush1.msra.mxu0 %v1051
    %1249 = vmatprep.subr.mxu0 0.0
    %1250 = vmatpush1.msra.mxu0 0.0
    %1251 = vmatprep.subr.mxu0 0.0
    %1252 = vmatpush1.msra.mxu0 0.0
    %1253 = vmatprep.subr.mxu0 0.0
    %1254 = vmatpush1.msra.mxu0 0.0
    %1255 = vmatprep.subr.mxu0 0.0
    %1256 = vmatpush1.msra.mxu0 0.0
    %1257 = vmatprep.subr.mxu0 0.0
    %1258 = vmatpush1.msra.mxu0 0.0
    %1259 = vmatprep.subr.mxu0 0.0
    %1260 = vmatpush1.msra.mxu0 0.0
    %1261 = vmatprep.subr.mxu0 0.0
    %1262 = vmatpush1.msra.mxu0 0.0
    %1263 = vmatprep.subr.mxu0 0.0
    %1264 = vmatpush1.msra.mxu0 0.0
    %1265 = vmatprep.subr.mxu0 0.0
    %1266 = vmatpush1.msra.mxu0 0.0
    %1267 = vmatprep.subr.mxu0 0.0
    %1268 = vmatpush1.msra.mxu0 0.0
    %1269 = vmatprep.subr.mxu0 0.0
    %1270 = vmatpush1.msra.mxu0 0.0
    %1271 = vmatprep.subr.mxu0 0.0
    %1272 = vmatpush1.msra.mxu0 0.0
    %1273 = vmatprep.subr.mxu0 0.0
    %1274 = vmatpush1.msra.mxu0 0.0
    %1275 = vmatprep.subr.mxu0 0.0
    %1276 = vmatpush1.msra.mxu0 0.0
    %1277 = vmatprep.subr.mxu0 0.0
    %1278 = vmatpush1.msra.mxu0 0.0
    %1279 = vmatprep.subr.mxu0 0.0
    %1280 = vmatpush1.msra.mxu0 0.0
    %1281 = vmatprep.subr.mxu0 0.0
    %1282 = vmatpush1.msra.mxu0 0.0
    %1283 = vmatprep.subr.mxu0 0.0
    %1284 = vmatpush1.msra.mxu0 0.0
    %1285 = vmatprep.subr.mxu0 0.0
    %1286 = vmatpush1.msra.mxu0 0.0
    %1287 = vmatprep.subr.mxu0 0.0
    %1288 = vmatpush1.msra.mxu0 0.0
    %1289 = vmatprep.subr.mxu0 0.0
    %1290 = vmatpush1.msra.mxu0 0.0
    %1291 = vmatprep.subr.mxu0 0.0
    %1292 = vmatpush1.msra.mxu0 0.0
    %1293 = vmatprep.subr.mxu0 0.0
    %1294 = vmatpush1.msra.mxu0 0.0
    %1295 = vmatprep.subr.mxu0 0.0
    %1296 = vmatpush1.msra.mxu0 0.0
    %1297 = vmatprep.subr.mxu0 0.0
    %1298 = vmatpush1.msra.mxu0 0.0
    %1299 = vmatprep.subr.mxu0 0.0
    %1300 = vmatpush1.msra.mxu0 0.0
    %1301 = vmatprep.subr.mxu0 0.0
    %1302 = vmatpush1.msra.mxu0 0.0
    %1303 = vmatprep.subr.mxu0 0.0
    %1304 = vmatpush1.msra.mxu0 0.0
    %1305 = vmatprep.subr.mxu0 0.0
    %1306 = vmatpush1.msra.mxu0 0.0
    %1307 = vmatprep.subr.mxu0 0.0
    %1308 = vmatpush1.msra.mxu0 0.0
    %1309 = vmatprep.mubr.f32.mxu0 0.0
    %1310 = vmatmul.mubr.f32.gmra.mrb[0].mxu0 %v1243
    %v1311 = vpop.f32.mrb[0].mxu0
    %v1312 = vadd.f32 0.0, %v1311
    %v1313 = vpop.f32.mrb[0].mxu0
    %1314 = vdwg.mxu0
    %v1316 = vsel %vm527, %v1235, 0
    %1318 = vmatprep.subr.mxu0 0.0
    %1319 = vmatpush1.msra.mxu0 %v1056
    %1320 = vmatprep.subr.mxu0 0.0
    %1321 = vmatpush1.msra.mxu0 %v1061
    %1322 = vmatprep.subr.mxu0 0.0
    %1323 = vmatpush1.msra.mxu0 0.0
    %1324 = vmatprep.subr.mxu0 0.0
    %1325 = vmatpush1.msra.mxu0 0.0
    %1326 = vmatprep.subr.mxu0 0.0
    %1327 = vmatpush1.msra.mxu0 0.0
    %1328 = vmatprep.subr.mxu0 0.0
    %1329 = vmatpush1.msra.mxu0 0.0
    %1330 = vmatprep.subr.mxu0 0.0
    %1331 = vmatpush1.msra.mxu0 0.0
    %1332 = vmatprep.subr.mxu0 0.0
    %1333 = vmatpush1.msra.mxu0 0.0
    %1334 = vmatprep.subr.mxu0 0.0
    %1335 = vmatpush1.msra.mxu0 0.0
    %1336 = vmatprep.subr.mxu0 0.0
    %1337 = vmatpush1.msra.mxu0 0.0
    %1338 = vmatprep.subr.mxu0 0.0
    %1339 = vmatpush1.msra.mxu0 0.0
    %1340 = vmatprep.subr.mxu0 0.0
    %1341 = vmatpush1.msra.mxu0 0.0
    %1342 = vmatprep.subr.mxu0 0.0
    %1343 = vmatpush1.msra.mxu0 0.0
    %1344 = vmatprep.subr.mxu0 0.0
    %1345 = vmatpush1.msra.mxu0 0.0
    %1346 = vmatprep.subr.mxu0 0.0
    %1347 = vmatpush1.msra.mxu0 0.0
    %1348 = vmatprep.subr.mxu0 0.0
    %1349 = vmatpush1.msra.mxu0 0.0
    %1350 = vmatprep.subr.mxu0 0.0
    %1351 = vmatpush1.msra.mxu0 0.0
    %1352 = vmatprep.subr.mxu0 0.0
    %1353 = vmatpush1.msra.mxu0 0.0
    %1354 = vmatprep.subr.mxu0 0.0
    %1355 = vmatpush1.msra.mxu0 0.0
    %1356 = vmatprep.subr.mxu0 0.0
    %1357 = vmatpush1.msra.mxu0 0.0
    %1358 = vmatprep.subr.mxu0 0.0
    %1359 = vmatpush1.msra.mxu0 0.0
    %1360 = vmatprep.subr.mxu0 0.0
    %1361 = vmatpush1.msra.mxu0 0.0
    %1362 = vmatprep.subr.mxu0 0.0
    %1363 = vmatpush1.msra.mxu0 0.0
    %1364 = vmatprep.subr.mxu0 0.0
    %1365 = vmatpush1.msra.mxu0 0.0
    %1366 = vmatprep.subr.mxu0 0.0
    %1367 = vmatpush1.msra.mxu0 0.0
    %1368 = vmatprep.subr.mxu0 0.0
    %1369 = vmatpush1.msra.mxu0 0.0
    %1370 = vmatprep.subr.mxu0 0.0
    %1371 = vmatpush1.msra.mxu0 0.0
    %1372 = vmatprep.subr.mxu0 0.0
    %1373 = vmatpush1.msra.mxu0 0.0
    %1374 = vmatprep.subr.mxu0 0.0
    %1375 = vmatpush1.msra.mxu0 0.0
    %1376 = vmatprep.subr.mxu0 0.0
    %1377 = vmatpush1.msra.mxu0 0.0
    %1378 = vmatprep.subr.mxu0 0.0
    %1379 = vmatpush1.msra.mxu0 0.0
    %1380 = vmatprep.subr.mxu0 0.0
    %1381 = vmatpush1.msra.mxu0 0.0
    %1382 = vmatprep.mubr.f32.mxu0 0.0
    %1383 = vmatmul.mubr.f32.gmra.mrb[0].mxu0 %v1316
    %v1384 = vpop.f32.mrb[0].mxu0
    %v1385 = vadd.f32 0.0, %v1384
    %v1386 = vpop.f32.mrb[0].mxu0
    %1387 = vdwg.mxu0
    %v1388 = vrcp.pop %v1238
    %v1389 = vrcp.pop %v1241
    %v1390 = vmul.f32 %v1312, %v1388
    %v1391 = vmul.f32 %v1385, %v1389
    %s1392 = scalar_lea.vmem %s9, 8
    %v1393 = vld [vmem:[%s1392] sm:$0xff]
    %v1395 = vsel %vm366, %v1390, 0
    %v1398 = vsel %vm366, %v1391, 0
    %1400 = vmatprep.subr.mxu0 0.0
    %1401 = vmatpush1.msra.mxu0 %v1393
    %1402 = vmatprep.subr.mxu0 0.0
    %1403 = vmatpush1.msra.mxu0 0.0
    %1404 = vmatprep.subr.mxu0 0.0
    %1405 = vmatpush1.msra.mxu0 0.0
    %1406 = vmatprep.subr.mxu0 0.0
    %1407 = vmatpush1.msra.mxu0 0.0
    %1408 = vmatprep.subr.mxu0 0.0
    %1409 = vmatpush1.msra.mxu0 0.0
    %1410 = vmatprep.subr.mxu0 0.0
    %1411 = vmatpush1.msra.mxu0 0.0
    %1412 = vmatprep.subr.mxu0 0.0
    %1413 = vmatpush1.msra.mxu0 0.0
    %1414 = vmatprep.subr.mxu0 0.0
    %1415 = vmatpush1.msra.mxu0 0.0
    %1416 = vmatprep.subr.mxu0 0.0
    %1417 = vmatpush1.msra.mxu0 0.0
    %1418 = vmatprep.subr.mxu0 0.0
    %1419 = vmatpush1.msra.mxu0 0.0
    %1420 = vmatprep.subr.mxu0 0.0
    %1421 = vmatpush1.msra.mxu0 0.0
    %1422 = vmatprep.subr.mxu0 0.0
    %1423 = vmatpush1.msra.mxu0 0.0
    %1424 = vmatprep.subr.mxu0 0.0
    %1425 = vmatpush1.msra.mxu0 0.0
    %1426 = vmatprep.subr.mxu0 0.0
    %1427 = vmatpush1.msra.mxu0 0.0
    %1428 = vmatprep.subr.mxu0 0.0
    %1429 = vmatpush1.msra.mxu0 0.0
    %1430 = vmatprep.subr.mxu0 0.0
    %1431 = vmatpush1.msra.mxu0 0.0
    %1432 = vmatprep.subr.mxu0 0.0
    %1433 = vmatpush1.msra.mxu0 0.0
    %1434 = vmatprep.subr.mxu0 0.0
    %1435 = vmatpush1.msra.mxu0 0.0
    %1436 = vmatprep.subr.mxu0 0.0
    %1437 = vmatpush1.msra.mxu0 0.0
    %1438 = vmatprep.subr.mxu0 0.0
    %1439 = vmatpush1.msra.mxu0 0.0
    %1440 = vmatprep.subr.mxu0 0.0
    %1441 = vmatpush1.msra.mxu0 0.0
    %1442 = vmatprep.subr.mxu0 0.0
    %1443 = vmatpush1.msra.mxu0 0.0
    %1444 = vmatprep.subr.mxu0 0.0
    %1445 = vmatpush1.msra.mxu0 0.0
    %1446 = vmatprep.subr.mxu0 0.0
    %1447 = vmatpush1.msra.mxu0 0.0
    %1448 = vmatprep.subr.mxu0 0.0
    %1449 = vmatpush1.msra.mxu0 0.0
    %1450 = vmatprep.subr.mxu0 0.0
    %1451 = vmatpush1.msra.mxu0 0.0
    %1452 = vmatprep.subr.mxu0 0.0
    %1453 = vmatpush1.msra.mxu0 0.0
    %1454 = vmatprep.subr.mxu0 0.0
    %1455 = vmatpush1.msra.mxu0 0.0
    %1456 = vmatprep.subr.mxu0 0.0
    %1457 = vmatpush1.msra.mxu0 0.0
    %1458 = vmatprep.subr.mxu0 0.0
    %1459 = vmatpush1.msra.mxu0 0.0
    %1460 = vmatprep.subr.mxu0 0.0
    %1461 = vmatpush1.msra.mxu0 0.0
    %1462 = vmatprep.subr.mxu0 0.0
    %1463 = vmatpush1.msra.mxu0 0.0
    %1464 = vmatprep.mubr.f32.mxu0 0.0
    %1465 = vmatmul.mubr.f32.gmra.mrb[0].mxu0 %v1395
    %v1466 = vpop.f32.mrb[0].mxu0
    %v1467 = vadd.f32 0.0, %v1466
    %v1468 = vpop.f32.mrb[0].mxu0
    %1469 = vmatprep.mubr.f32.mxu0 0.0
    %1470 = vmatmul.mubr.f32.gmra.mrb[0].mxu0 %v1398
    %v1471 = vpop.f32.mrb[0].mxu0
    %v1472 = vadd.f32 0.0, %v1471
    %v1473 = vpop.f32.mrb[0].mxu0
    %1474 = vdwg.mxu0
    %v1475 = vadd.f32 %v778, %v1467
    %v1476 = vadd.f32 %v779, %v1472
    %s1477 = scalar_lea.vmem %s3, 64
    %v1478 = vld [vmem:[%s1477] sm:$0xff]
    %v1479 = vld [vmem:[%s1477 + $0x8] sm:$0xff]
    %v1480 = vld [vmem:[%s1477 + $0x10] sm:$0xff]
    %v1481 = vld [vmem:[%s1477 + $0x18] sm:$0xff]
    %s1482 = scalar_lea.vmem %s4, 2
    %v1483 = vld [vmem:[%s1482] sm:$0x1]
    %v1485 = vlaneseq
    %v1486 = vshrl.u32 %v1485, 7
    %v1487 = vsub.s32 0, %v1486
    %v1488 = vrot.slane %v1483, %v1487
    %1490 = vmatprep.subr.mxu0 0.0
    %1491 = vmatpush1.msra.mxu0 %v1478
    %1492 = vmatprep.subr.mxu0 0.0
    %1493 = vmatpush1.msra.mxu0 %v1479
    %1494 = vmatprep.subr.mxu0 0.0
    %1495 = vmatpush1.msra.mxu0 %v1480
    %1496 = vmatprep.subr.mxu0 0.0
    %1497 = vmatpush1.msra.mxu0 %v1481
    %1498 = vmatprep.subr.mxu0 0.0
    %1499 = vmatpush1.msra.mxu0 0.0
    %1500 = vmatprep.subr.mxu0 0.0
    %1501 = vmatpush1.msra.mxu0 0.0
    %1502 = vmatprep.subr.mxu0 0.0
    %1503 = vmatpush1.msra.mxu0 0.0
    %1504 = vmatprep.subr.mxu0 0.0
    %1505 = vmatpush1.msra.mxu0 0.0
    %1506 = vmatprep.subr.mxu0 0.0
    %1507 = vmatpush1.msra.mxu0 0.0
    %1508 = vmatprep.subr.mxu0 0.0
    %1509 = vmatpush1.msra.mxu0 0.0
    %1510 = vmatprep.subr.mxu0 0.0
    %1511 = vmatpush1.msra.mxu0 0.0
    %1512 = vmatprep.subr.mxu0 0.0
    %1513 = vmatpush1.msra.mxu0 0.0
    %1514 = vmatprep.subr.mxu0 0.0
    %1515 = vmatpush1.msra.mxu0 0.0
    %1516 = vmatprep.subr.mxu0 0.0
    %1517 = vmatpush1.msra.mxu0 0.0
    %1518 = vmatprep.subr.mxu0 0.0
    %1519 = vmatpush1.msra.mxu0 0.0
    %1520 = vmatprep.subr.mxu0 0.0
    %1521 = vmatpush1.msra.mxu0 0.0
    %1522 = vmatprep.subr.mxu0 0.0
    %1523 = vmatpush1.msra.mxu0 0.0
    %1524 = vmatprep.subr.mxu0 0.0
    %1525 = vmatpush1.msra.mxu0 0.0
    %1526 = vmatprep.subr.mxu0 0.0
    %1527 = vmatpush1.msra.mxu0 0.0
    %1528 = vmatprep.subr.mxu0 0.0
    %1529 = vmatpush1.msra.mxu0 0.0
    %1530 = vmatprep.subr.mxu0 0.0
    %1531 = vmatpush1.msra.mxu0 0.0
    %1532 = vmatprep.subr.mxu0 0.0
    %1533 = vmatpush1.msra.mxu0 0.0
    %1534 = vmatprep.subr.mxu0 0.0
    %1535 = vmatpush1.msra.mxu0 0.0
    %1536 = vmatprep.subr.mxu0 0.0
    %1537 = vmatpush1.msra.mxu0 0.0
    %1538 = vmatprep.subr.mxu0 0.0
    %1539 = vmatpush1.msra.mxu0 0.0
    %1540 = vmatprep.subr.mxu0 0.0
    %1541 = vmatpush1.msra.mxu0 0.0
    %1542 = vmatprep.subr.mxu0 0.0
    %1543 = vmatpush1.msra.mxu0 0.0
    %1544 = vmatprep.subr.mxu0 0.0
    %1545 = vmatpush1.msra.mxu0 0.0
    %1546 = vmatprep.subr.mxu0 0.0
    %1547 = vmatpush1.msra.mxu0 0.0
    %1548 = vmatprep.subr.mxu0 0.0
    %1549 = vmatpush1.msra.mxu0 0.0
    %1550 = vmatprep.subr.mxu0 0.0
    %1551 = vmatpush1.msra.mxu0 0.0
    %1552 = vmatprep.subr.mxu0 0.0
    %1553 = vmatpush1.msra.mxu0 0.0
    %1554 = vmatprep.mubr.f32.mxu0 0.0
    %1555 = vmatmul.mubr.f32.gmra.mrb[0].mxu0 %v70
    %v1556 = vpop.f32.mrb[0].mxu0
    %v1557 = vadd.f32 %v1488, %v1556
    %v1558 = vpop.f32.mrb[0].mxu0
    %1559 = vmatprep.mubr.f32.mxu0 0.0
    %1560 = vmatmul.mubr.f32.gmra.mrb[0].mxu0 %v73
    %v1561 = vpop.f32.mrb[0].mxu0
    %v1562 = vadd.f32 %v1488, %v1561
    %v1563 = vpop.f32.mrb[0].mxu0
    %1564 = vdwg.mxu0
    %s1565 = scalar_lea.vmem %s5, 64
    %v1566 = vld [vmem:[%s1565] sm:$0xff]
    %v1567 = vld [vmem:[%s1565 + $0x8] sm:$0xff]
    %v1568 = vld [vmem:[%s1565 + $0x10] sm:$0xff]
    %v1569 = vld [vmem:[%s1565 + $0x18] sm:$0xff]
    %s1570 = scalar_lea.vmem %s6, 2
    %v1571 = vld [vmem:[%s1570] sm:$0x1]
    %v1573 = vlaneseq
    %v1574 = vshrl.u32 %v1573, 7
    %v1575 = vsub.s32 0, %v1574
    %v1576 = vrot.slane %v1571, %v1575
    %1578 = vmatprep.subr.mxu0 0.0
    %1579 = vmatpush1.msra.mxu0 %v1566
    %1580 = vmatprep.subr.mxu0 0.0
    %1581 = vmatpush1.msra.mxu0 %v1567
    %1582 = vmatprep.subr.mxu0 0.0
    %1583 = vmatpush1.msra.mxu0 %v1568
    %1584 = vmatprep.subr.mxu0 0.0
    %1585 = vmatpush1.msra.mxu0 %v1569
    %1586 = vmatprep.subr.mxu0 0.0
    %1587 = vmatpush1.msra.mxu0 0.0
    %1588 = vmatprep.subr.mxu0 0.0
    %1589 = vmatpush1.msra.mxu0 0.0
    %1590 = vmatprep.subr.mxu0 0.0
    %1591 = vmatpush1.msra.mxu0 0.0
    %1592 = vmatprep.subr.mxu0 0.0
    %1593 = vmatpush1.msra.mxu0 0.0
    %1594 = vmatprep.subr.mxu0 0.0
    %1595 = vmatpush1.msra.mxu0 0.0
    %1596 = vmatprep.subr.mxu0 0.0
    %1597 = vmatpush1.msra.mxu0 0.0
    %1598 = vmatprep.subr.mxu0 0.0
    %1599 = vmatpush1.msra.mxu0 0.0
    %1600 = vmatprep.subr.mxu0 0.0
    %1601 = vmatpush1.msra.mxu0 0.0
    %1602 = vmatprep.subr.mxu0 0.0
    %1603 = vmatpush1.msra.mxu0 0.0
    %1604 = vmatprep.subr.mxu0 0.0
    %1605 = vmatpush1.msra.mxu0 0.0
    %1606 = vmatprep.subr.mxu0 0.0
    %1607 = vmatpush1.msra.mxu0 0.0
    %1608 = vmatprep.subr.mxu0 0.0
    %1609 = vmatpush1.msra.mxu0 0.0
    %1610 = vmatprep.subr.mxu0 0.0
    %1611 = vmatpush1.msra.mxu0 0.0
    %1612 = vmatprep.subr.mxu0 0.0
    %1613 = vmatpush1.msra.mxu0 0.0
    %1614 = vmatprep.subr.mxu0 0.0
    %1615 = vmatpush1.msra.mxu0 0.0
    %1616 = vmatprep.subr.mxu0 0.0
    %1617 = vmatpush1.msra.mxu0 0.0
    %1618 = vmatprep.subr.mxu0 0.0
    %1619 = vmatpush1.msra.mxu0 0.0
    %1620 = vmatprep.subr.mxu0 0.0
    %1621 = vmatpush1.msra.mxu0 0.0
    %1622 = vmatprep.subr.mxu0 0.0
    %1623 = vmatpush1.msra.mxu0 0.0
    %1624 = vmatprep.subr.mxu0 0.0
    %1625 = vmatpush1.msra.mxu0 0.0
    %1626 = vmatprep.subr.mxu0 0.0
    %1627 = vmatpush1.msra.mxu0 0.0
    %1628 = vmatprep.subr.mxu0 0.0
    %1629 = vmatpush1.msra.mxu0 0.0
    %1630 = vmatprep.subr.mxu0 0.0
    %1631 = vmatpush1.msra.mxu0 0.0
    %1632 = vmatprep.subr.mxu0 0.0
    %1633 = vmatpush1.msra.mxu0 0.0
    %1634 = vmatprep.subr.mxu0 0.0
    %1635 = vmatpush1.msra.mxu0 0.0
    %1636 = vmatprep.subr.mxu0 0.0
    %1637 = vmatpush1.msra.mxu0 0.0
    %1638 = vmatprep.subr.mxu0 0.0
    %1639 = vmatpush1.msra.mxu0 0.0
    %1640 = vmatprep.subr.mxu0 0.0
    %1641 = vmatpush1.msra.mxu0 0.0
    %1642 = vmatprep.mubr.f32.mxu0 0.0
    %1643 = vmatmul.mubr.f32.gmra.mrb[0].mxu0 %v162
    %v1644 = vpop.f32.mrb[0].mxu0
    %v1645 = vadd.f32 %v1576, %v1644
    %v1646 = vpop.f32.mrb[0].mxu0
    %1647 = vmatprep.mubr.f32.mxu0 0.0
    %1648 = vmatmul.mubr.f32.gmra.mrb[0].mxu0 %v165
    %v1649 = vpop.f32.mrb[0].mxu0
    %v1650 = vadd.f32 %v1576, %v1649
    %v1651 = vpop.f32.mrb[0].mxu0
    %1652 = vmatprep.mubr.f32.mxu0 0.0
    %1653 = vmatmul.mubr.f32.gmra.mrb[0].mxu0 %v168
    %v1654 = vpop.f32.mrb[0].mxu0
    %v1655 = vadd.f32 %v1576, %v1654
    %v1656 = vpop.f32.mrb[0].mxu0
    %1657 = vmatprep.mubr.f32.mxu0 0.0
    %1658 = vmatmul.mubr.f32.gmra.mrb[0].mxu0 %v171
    %v1659 = vpop.f32.mrb[0].mxu0
    %v1660 = vadd.f32 %v1576, %v1659
    %v1661 = vpop.f32.mrb[0].mxu0
    %1662 = vdwg.mxu0
    %s1663 = scalar_lea.vmem %s7, 64
    %v1664 = vld [vmem:[%s1663] sm:$0xff]
    %v1665 = vld [vmem:[%s1663 + $0x8] sm:$0xff]
    %v1666 = vld [vmem:[%s1663 + $0x10] sm:$0xff]
    %v1667 = vld [vmem:[%s1663 + $0x18] sm:$0xff]
    %s1668 = scalar_lea.vmem %s8, 2
    %v1669 = vld [vmem:[%s1668] sm:$0x1]
    %v1671 = vlaneseq
    %v1672 = vshrl.u32 %v1671, 7
    %v1673 = vsub.s32 0, %v1672
    %v1674 = vrot.slane %v1669, %v1673
    %1676 = vmatprep.subr.mxu0 0.0
    %1677 = vmatpush1.msra.mxu0 %v1664
    %1678 = vmatprep.subr.mxu0 0.0
    %1679 = vmatpush1.msra.mxu0 %v1665
    %1680 = vmatprep.subr.mxu0 0.0
    %1681 = vmatpush1.msra.mxu0 %v1666
    %1682 = vmatprep.subr.mxu0 0.0
    %1683 = vmatpush1.msra.mxu0 %v1667
    %1684 = vmatprep.subr.mxu0 0.0
    %1685 = vmatpush1.msra.mxu0 0.0
    %1686 = vmatprep.subr.mxu0 0.0
    %1687 = vmatpush1.msra.mxu0 0.0
    %1688 = vmatprep.subr.mxu0 0.0
    %1689 = vmatpush1.msra.mxu0 0.0
    %1690 = vmatprep.subr.mxu0 0.0
    %1691 = vmatpush1.msra.mxu0 0.0
    %1692 = vmatprep.subr.mxu0 0.0
    %1693 = vmatpush1.msra.mxu0 0.0
    %1694 = vmatprep.subr.mxu0 0.0
    %1695 = vmatpush1.msra.mxu0 0.0
    %1696 = vmatprep.subr.mxu0 0.0
    %1697 = vmatpush1.msra.mxu0 0.0
    %1698 = vmatprep.subr.mxu0 0.0
    %1699 = vmatpush1.msra.mxu0 0.0
    %1700 = vmatprep.subr.mxu0 0.0
    %1701 = vmatpush1.msra.mxu0 0.0
    %1702 = vmatprep.subr.mxu0 0.0
    %1703 = vmatpush1.msra.mxu0 0.0
    %1704 = vmatprep.subr.mxu0 0.0
    %1705 = vmatpush1.msra.mxu0 0.0
    %1706 = vmatprep.subr.mxu0 0.0
    %1707 = vmatpush1.msra.mxu0 0.0
    %1708 = vmatprep.subr.mxu0 0.0
    %1709 = vmatpush1.msra.mxu0 0.0
    %1710 = vmatprep.subr.mxu0 0.0
    %1711 = vmatpush1.msra.mxu0 0.0
    %1712 = vmatprep.subr.mxu0 0.0
    %1713 = vmatpush1.msra.mxu0 0.0
    %1714 = vmatprep.subr.mxu0 0.0
    %1715 = vmatpush1.msra.mxu0 0.0
    %1716 = vmatprep.subr.mxu0 0.0
    %1717 = vmatpush1.msra.mxu0 0.0
    %1718 = vmatprep.subr.mxu0 0.0
    %1719 = vmatpush1.msra.mxu0 0.0
    %1720 = vmatprep.subr.mxu0 0.0
    %1721 = vmatpush1.msra.mxu0 0.0
    %1722 = vmatprep.subr.mxu0 0.0
    %1723 = vmatpush1.msra.mxu0 0.0
    %1724 = vmatprep.subr.mxu0 0.0
    %1725 = vmatpush1.msra.mxu0 0.0
    %1726 = vmatprep.subr.mxu0 0.0
    %1727 = vmatpush1.msra.mxu0 0.0
    %1728 = vmatprep.subr.mxu0 0.0
    %1729 = vmatpush1.msra.mxu0 0.0
    %1730 = vmatprep.subr.mxu0 0.0
    %1731 = vmatpush1.msra.mxu0 0.0
    %1732 = vmatprep.subr.mxu0 0.0
    %1733 = vmatpush1.msra.mxu0 0.0
    %1734 = vmatprep.subr.mxu0 0.0
    %1735 = vmatpush1.msra.mxu0 0.0
    %1736 = vmatprep.subr.mxu0 0.0
    %1737 = vmatpush1.msra.mxu0 0.0
    %1738 = vmatprep.subr.mxu0 0.0
    %1739 = vmatpush1.msra.mxu0 0.0
    %1740 = vmatprep.mubr.f32.mxu0 0.0
    %1741 = vmatmul.mubr.f32.gmra.mrb[0].mxu0 %v270
    %v1742 = vpop.f32.mrb[0].mxu0
    %v1743 = vadd.f32 %v1674, %v1742
    %v1744 = vpop.f32.mrb[0].mxu0
    %1745 = vmatprep.mubr.f32.mxu0 0.0
    %1746 = vmatmul.mubr.f32.gmra.mrb[0].mxu0 %v273
    %v1747 = vpop.f32.mrb[0].mxu0
    %v1748 = vadd.f32 %v1674, %v1747
    %v1749 = vpop.f32.mrb[0].mxu0
    %1750 = vmatprep.mubr.f32.mxu0 0.0
    %1751 = vmatmul.mubr.f32.gmra.mrb[0].mxu0 %v276
    %v1752 = vpop.f32.mrb[0].mxu0
    %v1753 = vadd.f32 %v1674, %v1752
    %v1754 = vpop.f32.mrb[0].mxu0
    %1755 = vmatprep.mubr.f32.mxu0 0.0
    %1756 = vmatmul.mubr.f32.gmra.mrb[0].mxu0 %v279
    %v1757 = vpop.f32.mrb[0].mxu0
    %v1758 = vadd.f32 %v1674, %v1757
    %v1759 = vpop.f32.mrb[0].mxu0
    %1760 = vdwg.mxu0
    %v1762 = vsel %vm366, %v1557, 0
    %v1765 = vsel %vm366, %v1645, 0
    %v1768 = vsel %vm366, %v1650, 0
    %1770 = vmatprep.subr.mxu0 0.0
    %1771 = vmatpush1.xpose.msra.mxu0 %v1765
    %1772 = vmatprep.subr.mxu0 0.0
    %1773 = vmatpush1.xpose.msra.mxu0 %v1768
    %1774 = vmatprep.subr.mxu0 0.0
    %1775 = vmatpush1.xpose.msra.mxu0 0.0
    %1776 = vmatprep.subr.mxu0 0.0
    %1777 = vmatpush1.xpose.msra.mxu0 0.0
    %1778 = vmatprep.subr.mxu0 0.0
    %1779 = vmatpush1.xpose.msra.mxu0 0.0
    %1780 = vmatprep.subr.mxu0 0.0
    %1781 = vmatpush1.xpose.msra.mxu0 0.0
    %1782 = vmatprep.subr.mxu0 0.0
    %1783 = vmatpush1.xpose.msra.mxu0 0.0
    %1784 = vmatprep.subr.mxu0 0.0
    %1785 = vmatpush1.xpose.msra.mxu0 0.0
    %1786 = vmatprep.subr.mxu0 0.0
    %1787 = vmatpush1.xpose.msra.mxu0 0.0
    %1788 = vmatprep.subr.mxu0 0.0
    %1789 = vmatpush1.xpose.msra.mxu0 0.0
    %1790 = vmatprep.subr.mxu0 0.0
    %1791 = vmatpush1.xpose.msra.mxu0 0.0
    %1792 = vmatprep.subr.mxu0 0.0
    %1793 = vmatpush1.xpose.msra.mxu0 0.0
    %1794 = vmatprep.subr.mxu0 0.0
    %1795 = vmatpush1.xpose.msra.mxu0 0.0
    %1796 = vmatprep.subr.mxu0 0.0
    %1797 = vmatpush1.xpose.msra.mxu0 0.0
    %1798 = vmatprep.subr.mxu0 0.0
    %1799 = vmatpush1.xpose.msra.mxu0 0.0
    %1800 = vmatprep.subr.mxu0 0.0
    %1801 = vmatpush1.xpose.msra.mxu0 0.0
    %1802 = vmatprep.subr.mxu0 0.0
    %1803 = vmatpush1.xpose.msra.mxu0 0.0
    %1804 = vmatprep.subr.mxu0 0.0
    %1805 = vmatpush1.xpose.msra.mxu0 0.0
    %1806 = vmatprep.subr.mxu0 0.0
    %1807 = vmatpush1.xpose.msra.mxu0 0.0
    %1808 = vmatprep.subr.mxu0 0.0
    %1809 = vmatpush1.xpose.msra.mxu0 0.0
    %1810 = vmatprep.subr.mxu0 0.0
    %1811 = vmatpush1.xpose.msra.mxu0 0.0
    %1812 = vmatprep.subr.mxu0 0.0
    %1813 = vmatpush1.xpose.msra.mxu0 0.0
    %1814 = vmatprep.subr.mxu0 0.0
    %1815 = vmatpush1.xpose.msra.mxu0 0.0
    %1816 = vmatprep.subr.mxu0 0.0
    %1817 = vmatpush1.xpose.msra.mxu0 0.0
    %1818 = vmatprep.subr.mxu0 0.0
    %1819 = vmatpush1.xpose.msra.mxu0 0.0
    %1820 = vmatprep.subr.mxu0 0.0
    %1821 = vmatpush1.xpose.msra.mxu0 0.0
    %1822 = vmatprep.subr.mxu0 0.0
    %1823 = vmatpush1.xpose.msra.mxu0 0.0
    %1824 = vmatprep.subr.mxu0 0.0
    %1825 = vmatpush1.xpose.msra.mxu0 0.0
    %1826 = vmatprep.subr.mxu0 0.0
    %1827 = vmatpush1.xpose.msra.mxu0 0.0
    %1828 = vmatprep.subr.mxu0 0.0
    %1829 = vmatpush1.xpose.msra.mxu0 0.0
    %1830 = vmatprep.subr.mxu0 0.0
    %1831 = vmatpush1.xpose.msra.mxu0 0.0
    %1832 = vmatprep.subr.mxu0 0.0
    %1833 = vmatpush1.xpose.msra.mxu0 0.0
    %1834 = vmatprep.mubr.f32.mxu0 0.0
    %1835 = vmatmul.mubr.f32.gmra.mrb[0].mxu0 %v1762
    %v1836 = vpop.f32.mrb[0].mxu0
    %v1837 = vadd.f32 0.0, %v1836
    %v1838 = vpop.f32.mrb[0].mxu0
    %1839 = vdwg.mxu0
    %v1841 = vsel %vm366, %v1562, 0
    %v1844 = vsel %vm366, %v1655, 0
    %v1847 = vsel %vm366, %v1660, 0
    %1849 = vmatprep.subr.mxu0 0.0
    %1850 = vmatpush1.xpose.msra.mxu0 %v1844
    %1851 = vmatprep.subr.mxu0 0.0
    %1852 = vmatpush1.xpose.msra.mxu0 %v1847
    %1853 = vmatprep.subr.mxu0 0.0
    %1854 = vmatpush1.xpose.msra.mxu0 0.0
    %1855 = vmatprep.subr.mxu0 0.0
    %1856 = vmatpush1.xpose.msra.mxu0 0.0
    %1857 = vmatprep.subr.mxu0 0.0
    %1858 = vmatpush1.xpose.msra.mxu0 0.0
    %1859 = vmatprep.subr.mxu0 0.0
    %1860 = vmatpush1.xpose.msra.mxu0 0.0
    %1861 = vmatprep.subr.mxu0 0.0
    %1862 = vmatpush1.xpose.msra.mxu0 0.0
    %1863 = vmatprep.subr.mxu0 0.0
    %1864 = vmatpush1.xpose.msra.mxu0 0.0
    %1865 = vmatprep.subr.mxu0 0.0
    %1866 = vmatpush1.xpose.msra.mxu0 0.0
    %1867 = vmatprep.subr.mxu0 0.0
    %1868 = vmatpush1.xpose.msra.mxu0 0.0
    %1869 = vmatprep.subr.mxu0 0.0
    %1870 = vmatpush1.xpose.msra.mxu0 0.0
    %1871 = vmatprep.subr.mxu0 0.0
    %1872 = vmatpush1.xpose.msra.mxu0 0.0
    %1873 = vmatprep.subr.mxu0 0.0
    %1874 = vmatpush1.xpose.msra.mxu0 0.0
    %1875 = vmatprep.subr.mxu0 0.0
    %1876 = vmatpush1.xpose.msra.mxu0 0.0
    %1877 = vmatprep.subr.mxu0 0.0
    %1878 = vmatpush1.xpose.msra.mxu0 0.0
    %1879 = vmatprep.subr.mxu0 0.0
    %1880 = vmatpush1.xpose.msra.mxu0 0.0
    %1881 = vmatprep.subr.mxu0 0.0
    %1882 = vmatpush1.xpose.msra.mxu0 0.0
    %1883 = vmatprep.subr.mxu0 0.0
    %1884 = vmatpush1.xpose.msra.mxu0 0.0
    %1885 = vmatprep.subr.mxu0 0.0
    %1886 = vmatpush1.xpose.msra.mxu0 0.0
    %1887 = vmatprep.subr.mxu0 0.0
    %1888 = vmatpush1.xpose.msra.mxu0 0.0
    %1889 = vmatprep.subr.mxu0 0.0
    %1890 = vmatpush1.xpose.msra.mxu0 0.0
    %1891 = vmatprep.subr.mxu0 0.0
    %1892 = vmatpush1.xpose.msra.mxu0 0.0
    %1893 = vmatprep.subr.mxu0 0.0
    %1894 = vmatpush1.xpose.msra.mxu0 0.0
    %1895 = vmatprep.subr.mxu0 0.0
    %1896 = vmatpush1.xpose.msra.mxu0 0.0
    %1897 = vmatprep.subr.mxu0 0.0
    %1898 = vmatpush1.xpose.msra.mxu0 0.0
    %1899 = vmatprep.subr.mxu0 0.0
    %1900 = vmatpush1.xpose.msra.mxu0 0.0
    %1901 = vmatprep.subr.mxu0 0.0
    %1902 = vmatpush1.xpose.msra.mxu0 0.0
    %1903 = vmatprep.subr.mxu0 0.0
    %1904 = vmatpush1.xpose.msra.mxu0 0.0
    %1905 = vmatprep.subr.mxu0 0.0
    %1906 = vmatpush1.xpose.msra.mxu0 0.0
    %1907 = vmatprep.subr.mxu0 0.0
    %1908 = vmatpush1.xpose.msra.mxu0 0.0
    %1909 = vmatprep.subr.mxu0 0.0
    %1910 = vmatpush1.xpose.msra.mxu0 0.0
    %1911 = vmatprep.subr.mxu0 0.0
    %1912 = vmatpush1.xpose.msra.mxu0 0.0
    %1913 = vmatprep.mubr.f32.mxu0 0.0
    %1914 = vmatmul.mubr.f32.gmra.mrb[0].mxu0 %v1841
    %v1915 = vpop.f32.mrb[0].mxu0
    %v1916 = vadd.f32 0.0, %v1915
    %v1917 = vpop.f32.mrb[0].mxu0
    %1918 = vdwg.mxu0
    %v1919 = vmul.f32 %v1837, 0.35355338
    %v1920 = vmul.f32 %v1916, 0.35355338
    %v1921 = vsel %vm527, %v1919, -inf
    %1922 = vmax.xlane.f32.xlu0 %v1921
    %v1923 = vpop.xlane.xlu0 %1922
    %v1924 = vsel %vm527, %v1920, -inf
    %1925 = vmax.xlane.f32.xlu0 %v1924
    %v1926 = vpop.xlane.xlu0 %1925
    %v1927 = vsub.f32 %v1919, %v1923
    %v1928 = vsub.f32 %v1920, %v1926
    %v1929 = vmul.f32 %v1927, 1.442695
    %v1930 = vpow.pop %v1929
    %v1931 = vmul.f32 %v1928, 1.442695
    %v1932 = vpow.pop %v1931
    %v1933 = vsel %vm527, %v1930, 0.0
    %1934 = vadd.xlane.f32.xlu0 %v1933
    %v1935 = vpop.xlane.xlu0 %1934
    %v1936 = vsel %vm527, %v1932, 0.0
    %1937 = vadd.xlane.f32.xlu0 %v1936
    %v1938 = vpop.xlane.xlu0 %1937
    %v1940 = vsel %vm527, %v1930, 0
    %1942 = vmatprep.subr.mxu0 0.0
    %1943 = vmatpush1.msra.mxu0 %v1743
    %1944 = vmatprep.subr.mxu0 0.0
    %1945 = vmatpush1.msra.mxu0 %v1748
    %1946 = vmatprep.subr.mxu0 0.0
    %1947 = vmatpush1.msra.mxu0 0.0
    %1948 = vmatprep.subr.mxu0 0.0
    %1949 = vmatpush1.msra.mxu0 0.0
    %1950 = vmatprep.subr.mxu0 0.0
    %1951 = vmatpush1.msra.mxu0 0.0
    %1952 = vmatprep.subr.mxu0 0.0
    %1953 = vmatpush1.msra.mxu0 0.0
    %1954 = vmatprep.subr.mxu0 0.0
    %1955 = vmatpush1.msra.mxu0 0.0
    %1956 = vmatprep.subr.mxu0 0.0
    %1957 = vmatpush1.msra.mxu0 0.0
    %1958 = vmatprep.subr.mxu0 0.0
    %1959 = vmatpush1.msra.mxu0 0.0
    %1960 = vmatprep.subr.mxu0 0.0
    %1961 = vmatpush1.msra.mxu0 0.0
    %1962 = vmatprep.subr.mxu0 0.0
    %1963 = vmatpush1.msra.mxu0 0.0
    %1964 = vmatprep.subr.mxu0 0.0
    %1965 = vmatpush1.msra.mxu0 0.0
    %1966 = vmatprep.subr.mxu0 0.0
    %1967 = vmatpush1.msra.mxu0 0.0
    %1968 = vmatprep.subr.mxu0 0.0
    %1969 = vmatpush1.msra.mxu0 0.0
    %1970 = vmatprep.subr.mxu0 0.0
    %1971 = vmatpush1.msra.mxu0 0.0
    %1972 = vmatprep.subr.mxu0 0.0
    %1973 = vmatpush1.msra.mxu0 0.0
    %1974 = vmatprep.subr.mxu0 0.0
    %1975 = vmatpush1.msra.mxu0 0.0
    %1976 = vmatprep.subr.mxu0 0.0
    %1977 = vmatpush1.msra.mxu0 0.0
    %1978 = vmatprep.subr.mxu0 0.0
    %1979 = vmatpush1.msra.mxu0 0.0
    %1980 = vmatprep.subr.mxu0 0.0
    %1981 = vmatpush1.msra.mxu0 0.0
    %1982 = vmatprep.subr.mxu0 0.0
    %1983 = vmatpush1.msra.mxu0 0.0
    %1984 = vmatprep.subr.mxu0 0.0
    %1985 = vmatpush1.msra.mxu0 0.0
    %1986 = vmatprep.subr.mxu0 0.0
    %1987 = vmatpush1.msra.mxu0 0.0
    %1988 = vmatprep.subr.mxu0 0.0
    %1989 = vmatpush1.msra.mxu0 0.0
    %1990 = vmatprep.subr.mxu0 0.0
    %1991 = vmatpush1.msra.mxu0 0.0
    %1992 = vmatprep.subr.mxu0 0.0
    %1993 = vmatpush1.msra.mxu0 0.0
    %1994 = vmatprep.subr.mxu0 0.0
    %1995 = vmatpush1.msra.mxu0 0.0
    %1996 = vmatprep.subr.mxu0 0.0
    %1997 = vmatpush1.msra.mxu0 0.0
    %1998 = vmatprep.subr.mxu0 0.0
    %1999 = vmatpush1.msra.mxu0 0.0
    %2000 = vmatprep.subr.mxu0 0.0
    %2001 = vmatpush1.msra.mxu0 0.0
    %2002 = vmatprep.subr.mxu0 0.0
    %2003 = vmatpush1.msra.mxu0 0.0
    %2004 = vmatprep.subr.mxu0 0.0
    %2005 = vmatpush1.msra.mxu0 0.0
    %2006 = vmatprep.mubr.f32.mxu0 0.0
    %2007 = vmatmul.mubr.f32.gmra.mrb[0].mxu0 %v1940
    %v2008 = vpop.f32.mrb[0].mxu0
    %v2009 = vadd.f32 0.0, %v2008
    %v2010 = vpop.f32.mrb[0].mxu0
    %2011 = vdwg.mxu0
    %v2013 = vsel %vm527, %v1932, 0
    %2015 = vmatprep.subr.mxu0 0.0
    %2016 = vmatpush1.msra.mxu0 %v1753
    %2017 = vmatprep.subr.mxu0 0.0
    %2018 = vmatpush1.msra.mxu0 %v1758
    %2019 = vmatprep.subr.mxu0 0.0
    %2020 = vmatpush1.msra.mxu0 0.0
    %2021 = vmatprep.subr.mxu0 0.0
    %2022 = vmatpush1.msra.mxu0 0.0
    %2023 = vmatprep.subr.mxu0 0.0
    %2024 = vmatpush1.msra.mxu0 0.0
    %2025 = vmatprep.subr.mxu0 0.0
    %2026 = vmatpush1.msra.mxu0 0.0
    %2027 = vmatprep.subr.mxu0 0.0
    %2028 = vmatpush1.msra.mxu0 0.0
    %2029 = vmatprep.subr.mxu0 0.0
    %2030 = vmatpush1.msra.mxu0 0.0
    %2031 = vmatprep.subr.mxu0 0.0
    %2032 = vmatpush1.msra.mxu0 0.0
    %2033 = vmatprep.subr.mxu0 0.0
    %2034 = vmatpush1.msra.mxu0 0.0
    %2035 = vmatprep.subr.mxu0 0.0
    %2036 = vmatpush1.msra.mxu0 0.0
    %2037 = vmatprep.subr.mxu0 0.0
    %2038 = vmatpush1.msra.mxu0 0.0
    %2039 = vmatprep.subr.mxu0 0.0
    %2040 = vmatpush1.msra.mxu0 0.0
    %2041 = vmatprep.subr.mxu0 0.0
    %2042 = vmatpush1.msra.mxu0 0.0
    %2043 = vmatprep.subr.mxu0 0.0
    %2044 = vmatpush1.msra.mxu0 0.0
    %2045 = vmatprep.subr.mxu0 0.0
    %2046 = vmatpush1.msra.mxu0 0.0
    %2047 = vmatprep.subr.mxu0 0.0
    %2048 = vmatpush1.msra.mxu0 0.0
    %2049 = vmatprep.subr.mxu0 0.0
    %2050 = vmatpush1.msra.mxu0 0.0
    %2051 = vmatprep.subr.mxu0 0.0
    %2052 = vmatpush1.msra.mxu0 0.0
    %2053 = vmatprep.subr.mxu0 0.0
    %2054 = vmatpush1.msra.mxu0 0.0
    %2055 = vmatprep.subr.mxu0 0.0
    %2056 = vmatpush1.msra.mxu0 0.0
    %2057 = vmatprep.subr.mxu0 0.0
    %2058 = vmatpush1.msra.mxu0 0.0
    %2059 = vmatprep.subr.mxu0 0.0
    %2060 = vmatpush1.msra.mxu0 0.0
    %2061 = vmatprep.subr.mxu0 0.0
    %2062 = vmatpush1.msra.mxu0 0.0
    %2063 = vmatprep.subr.mxu0 0.0
    %2064 = vmatpush1.msra.mxu0 0.0
    %2065 = vmatprep.subr.mxu0 0.0
    %2066 = vmatpush1.msra.mxu0 0.0
    %2067 = vmatprep.subr.mxu0 0.0
    %2068 = vmatpush1.msra.mxu0 0.0
    %2069 = vmatprep.subr.mxu0 0.0
    %2070 = vmatpush1.msra.mxu0 0.0
    %2071 = vmatprep.subr.mxu0 0.0
    %2072 = vmatpush1.msra.mxu0 0.0
    %2073 = vmatprep.subr.mxu0 0.0
    %2074 = vmatpush1.msra.mxu0 0.0
    %2075 = vmatprep.subr.mxu0 0.0
    %2076 = vmatpush1.msra.mxu0 0.0
    %2077 = vmatprep.subr.mxu0 0.0
    %2078 = vmatpush1.msra.mxu0 0.0
    %2079 = vmatprep.mubr.f32.mxu0 0.0
    %2080 = vmatmul.mubr.f32.gmra.mrb[0].mxu0 %v2013
    %v2081 = vpop.f32.mrb[0].mxu0
    %v2082 = vadd.f32 0.0, %v2081
    %v2083 = vpop.f32.mrb[0].mxu0
    %2084 = vdwg.mxu0
    %v2085 = vrcp.pop %v1935
    %v2086 = vrcp.pop %v1938
    %v2087 = vmul.f32 %v2009, %v2085
    %v2088 = vmul.f32 %v2082, %v2086
    %s2089 = scalar_lea.vmem %s9, 16
    %v2090 = vld [vmem:[%s2089] sm:$0xff]
    %v2092 = vsel %vm366, %v2087, 0
    %v2095 = vsel %vm366, %v2088, 0
    %2097 = vmatprep.subr.mxu0 0.0
    %2098 = vmatpush1.msra.mxu0 %v2090
    %2099 = vmatprep.subr.mxu0 0.0
    %2100 = vmatpush1.msra.mxu0 0.0
    %2101 = vmatprep.subr.mxu0 0.0
    %2102 = vmatpush1.msra.mxu0 0.0
    %2103 = vmatprep.subr.mxu0 0.0
    %2104 = vmatpush1.msra.mxu0 0.0
    %2105 = vmatprep.subr.mxu0 0.0
    %2106 = vmatpush1.msra.mxu0 0.0
    %2107 = vmatprep.subr.mxu0 0.0
    %2108 = vmatpush1.msra.mxu0 0.0
    %2109 = vmatprep.subr.mxu0 0.0
    %2110 = vmatpush1.msra.mxu0 0.0
    %2111 = vmatprep.subr.mxu0 0.0
    %2112 = vmatpush1.msra.mxu0 0.0
    %2113 = vmatprep.subr.mxu0 0.0
    %2114 = vmatpush1.msra.mxu0 0.0
    %2115 = vmatprep.subr.mxu0 0.0
    %2116 = vmatpush1.msra.mxu0 0.0
    %2117 = vmatprep.subr.mxu0 0.0
    %2118 = vmatpush1.msra.mxu0 0.0
    %2119 = vmatprep.subr.mxu0 0.0
    %2120 = vmatpush1.msra.mxu0 0.0
    %2121 = vmatprep.subr.mxu0 0.0
    %2122 = vmatpush1.msra.mxu0 0.0
    %2123 = vmatprep.subr.mxu0 0.0
    %2124 = vmatpush1.msra.mxu0 0.0
    %2125 = vmatprep.subr.mxu0 0.0
    %2126 = vmatpush1.msra.mxu0 0.0
    %2127 = vmatprep.subr.mxu0 0.0
    %2128 = vmatpush1.msra.mxu0 0.0
    %2129 = vmatprep.subr.mxu0 0.0
    %2130 = vmatpush1.msra.mxu0 0.0
    %2131 = vmatprep.subr.mxu0 0.0
    %2132 = vmatpush1.msra.mxu0 0.0
    %2133 = vmatprep.subr.mxu0 0.0
    %2134 = vmatpush1.msra.mxu0 0.0
    %2135 = vmatprep.subr.mxu0 0.0
    %2136 = vmatpush1.msra.mxu0 0.0
    %2137 = vmatprep.subr.mxu0 0.0
    %2138 = vmatpush1.msra.mxu0 0.0
    %2139 = vmatprep.subr.mxu0 0.0
    %2140 = vmatpush1.msra.mxu0 0.0
    %2141 = vmatprep.subr.mxu0 0.0
    %2142 = vmatpush1.msra.mxu0 0.0
    %2143 = vmatprep.subr.mxu0 0.0
    %2144 = vmatpush1.msra.mxu0 0.0
    %2145 = vmatprep.subr.mxu0 0.0
    %2146 = vmatpush1.msra.mxu0 0.0
    %2147 = vmatprep.subr.mxu0 0.0
    %2148 = vmatpush1.msra.mxu0 0.0
    %2149 = vmatprep.subr.mxu0 0.0
    %2150 = vmatpush1.msra.mxu0 0.0
    %2151 = vmatprep.subr.mxu0 0.0
    %2152 = vmatpush1.msra.mxu0 0.0
    %2153 = vmatprep.subr.mxu0 0.0
    %2154 = vmatpush1.msra.mxu0 0.0
    %2155 = vmatprep.subr.mxu0 0.0
    %2156 = vmatpush1.msra.mxu0 0.0
    %2157 = vmatprep.subr.mxu0 0.0
    %2158 = vmatpush1.msra.mxu0 0.0
    %2159 = vmatprep.subr.mxu0 0.0
    %2160 = vmatpush1.msra.mxu0 0.0
    %2161 = vmatprep.mubr.f32.mxu0 0.0
    %2162 = vmatmul.mubr.f32.gmra.mrb[0].mxu0 %v2092
    %v2163 = vpop.f32.mrb[0].mxu0
    %v2164 = vadd.f32 0.0, %v2163
    %v2165 = vpop.f32.mrb[0].mxu0
    %2166 = vmatprep.mubr.f32.mxu0 0.0
    %2167 = vmatmul.mubr.f32.gmra.mrb[0].mxu0 %v2095
    %v2168 = vpop.f32.mrb[0].mxu0
    %v2169 = vadd.f32 0.0, %v2168
    %v2170 = vpop.f32.mrb[0].mxu0
    %2171 = vdwg.mxu0
    %v2172 = vadd.f32 %v1475, %v2164
    %v2173 = vadd.f32 %v1476, %v2169
    %s2174 = scalar_lea.vmem %s3, 96
    %v2175 = vld [vmem:[%s2174] sm:$0xff]
    %v2176 = vld [vmem:[%s2174 + $0x8] sm:$0xff]
    %v2177 = vld [vmem:[%s2174 + $0x10] sm:$0xff]
    %v2178 = vld [vmem:[%s2174 + $0x18] sm:$0xff]
    %s2179 = scalar_lea.vmem %s4, 3
    %v2180 = vld [vmem:[%s2179] sm:$0x1]
    %v2182 = vlaneseq
    %v2183 = vshrl.u32 %v2182, 7
    %v2184 = vsub.s32 0, %v2183
    %v2185 = vrot.slane %v2180, %v2184
    %2187 = vmatprep.subr.mxu0 0.0
    %2188 = vmatpush1.msra.mxu0 %v2175
    %2189 = vmatprep.subr.mxu0 0.0
    %2190 = vmatpush1.msra.mxu0 %v2176
    %2191 = vmatprep.subr.mxu0 0.0
    %2192 = vmatpush1.msra.mxu0 %v2177
    %2193 = vmatprep.subr.mxu0 0.0
    %2194 = vmatpush1.msra.mxu0 %v2178
    %2195 = vmatprep.subr.mxu0 0.0
    %2196 = vmatpush1.msra.mxu0 0.0
    %2197 = vmatprep.subr.mxu0 0.0
    %2198 = vmatpush1.msra.mxu0 0.0
    %2199 = vmatprep.subr.mxu0 0.0
    %2200 = vmatpush1.msra.mxu0 0.0
    %2201 = vmatprep.subr.mxu0 0.0
    %2202 = vmatpush1.msra.mxu0 0.0
    %2203 = vmatprep.subr.mxu0 0.0
    %2204 = vmatpush1.msra.mxu0 0.0
    %2205 = vmatprep.subr.mxu0 0.0
    %2206 = vmatpush1.msra.mxu0 0.0
    %2207 = vmatprep.subr.mxu0 0.0
    %2208 = vmatpush1.msra.mxu0 0.0
    %2209 = vmatprep.subr.mxu0 0.0
    %2210 = vmatpush1.msra.mxu0 0.0
    %2211 = vmatprep.subr.mxu0 0.0
    %2212 = vmatpush1.msra.mxu0 0.0
    %2213 = vmatprep.subr.mxu0 0.0
    %2214 = vmatpush1.msra.mxu0 0.0
    %2215 = vmatprep.subr.mxu0 0.0
    %2216 = vmatpush1.msra.mxu0 0.0
    %2217 = vmatprep.subr.mxu0 0.0
    %2218 = vmatpush1.msra.mxu0 0.0
    %2219 = vmatprep.subr.mxu0 0.0
    %2220 = vmatpush1.msra.mxu0 0.0
    %2221 = vmatprep.subr.mxu0 0.0
    %2222 = vmatpush1.msra.mxu0 0.0
    %2223 = vmatprep.subr.mxu0 0.0
    %2224 = vmatpush1.msra.mxu0 0.0
    %2225 = vmatprep.subr.mxu0 0.0
    %2226 = vmatpush1.msra.mxu0 0.0
    %2227 = vmatprep.subr.mxu0 0.0
    %2228 = vmatpush1.msra.mxu0 0.0
    %2229 = vmatprep.subr.mxu0 0.0
    %2230 = vmatpush1.msra.mxu0 0.0
    %2231 = vmatprep.subr.mxu0 0.0
    %2232 = vmatpush1.msra.mxu0 0.0
    %2233 = vmatprep.subr.mxu0 0.0
    %2234 = vmatpush1.msra.mxu0 0.0
    %2235 = vmatprep.subr.mxu0 0.0
    %2236 = vmatpush1.msra.mxu0 0.0
    %2237 = vmatprep.subr.mxu0 0.0
    %2238 = vmatpush1.msra.mxu0 0.0
    %2239 = vmatprep.subr.mxu0 0.0
    %2240 = vmatpush1.msra.mxu0 0.0
    %2241 = vmatprep.subr.mxu0 0.0
    %2242 = vmatpush1.msra.mxu0 0.0
    %2243 = vmatprep.subr.mxu0 0.0
    %2244 = vmatpush1.msra.mxu0 0.0
    %2245 = vmatprep.subr.mxu0 0.0
    %2246 = vmatpush1.msra.mxu0 0.0
    %2247 = vmatprep.subr.mxu0 0.0
    %2248 = vmatpush1.msra.mxu0 0.0
    %2249 = vmatprep.subr.mxu0 0.0
    %2250 = vmatpush1.msra.mxu0 0.0
    %2251 = vmatprep.mubr.f32.mxu0 0.0
    %2252 = vmatmul.mubr.f32.gmra.mrb[0].mxu0 %v70
    %v2253 = vpop.f32.mrb[0].mxu0
    %v2254 = vadd.f32 %v2185, %v2253
    %v2255 = vpop.f32.mrb[0].mxu0
    %2256 = vmatprep.mubr.f32.mxu0 0.0
    %2257 = vmatmul.mubr.f32.gmra.mrb[0].mxu0 %v73
    %v2258 = vpop.f32.mrb[0].mxu0
    %v2259 = vadd.f32 %v2185, %v2258
    %v2260 = vpop.f32.mrb[0].mxu0
    %2261 = vdwg.mxu0
    %s2262 = scalar_lea.vmem %s5, 96
    %v2263 = vld [vmem:[%s2262] sm:$0xff]
    %v2264 = vld [vmem:[%s2262 + $0x8] sm:$0xff]
    %v2265 = vld [vmem:[%s2262 + $0x10] sm:$0xff]
    %v2266 = vld [vmem:[%s2262 + $0x18] sm:$0xff]
    %s2267 = scalar_lea.vmem %s6, 3
    %v2268 = vld [vmem:[%s2267] sm:$0x1]
    %v2270 = vlaneseq
    %v2271 = vshrl.u32 %v2270, 7
    %v2272 = vsub.s32 0, %v2271
    %v2273 = vrot.slane %v2268, %v2272
    %2275 = vmatprep.subr.mxu0 0.0
    %2276 = vmatpush1.msra.mxu0 %v2263
    %2277 = vmatprep.subr.mxu0 0.0
    %2278 = vmatpush1.msra.mxu0 %v2264
    %2279 = vmatprep.subr.mxu0 0.0
    %2280 = vmatpush1.msra.mxu0 %v2265
    %2281 = vmatprep.subr.mxu0 0.0
    %2282 = vmatpush1.msra.mxu0 %v2266
    %2283 = vmatprep.subr.mxu0 0.0
    %2284 = vmatpush1.msra.mxu0 0.0
    %2285 = vmatprep.subr.mxu0 0.0
    %2286 = vmatpush1.msra.mxu0 0.0
    %2287 = vmatprep.subr.mxu0 0.0
    %2288 = vmatpush1.msra.mxu0 0.0
    %2289 = vmatprep.subr.mxu0 0.0
    %2290 = vmatpush1.msra.mxu0 0.0
    %2291 = vmatprep.subr.mxu0 0.0
    %2292 = vmatpush1.msra.mxu0 0.0
    %2293 = vmatprep.subr.mxu0 0.0
    %2294 = vmatpush1.msra.mxu0 0.0
    %2295 = vmatprep.subr.mxu0 0.0
    %2296 = vmatpush1.msra.mxu0 0.0
    %2297 = vmatprep.subr.mxu0 0.0
    %2298 = vmatpush1.msra.mxu0 0.0
    %2299 = vmatprep.subr.mxu0 0.0
    %2300 = vmatpush1.msra.mxu0 0.0
    %2301 = vmatprep.subr.mxu0 0.0
    %2302 = vmatpush1.msra.mxu0 0.0
    %2303 = vmatprep.subr.mxu0 0.0
    %2304 = vmatpush1.msra.mxu0 0.0
    %2305 = vmatprep.subr.mxu0 0.0
    %2306 = vmatpush1.msra.mxu0 0.0
    %2307 = vmatprep.subr.mxu0 0.0
    %2308 = vmatpush1.msra.mxu0 0.0
    %2309 = vmatprep.subr.mxu0 0.0
    %2310 = vmatpush1.msra.mxu0 0.0
    %2311 = vmatprep.subr.mxu0 0.0
    %2312 = vmatpush1.msra.mxu0 0.0
    %2313 = vmatprep.subr.mxu0 0.0
    %2314 = vmatpush1.msra.mxu0 0.0
    %2315 = vmatprep.subr.mxu0 0.0
    %2316 = vmatpush1.msra.mxu0 0.0
    %2317 = vmatprep.subr.mxu0 0.0
    %2318 = vmatpush1.msra.mxu0 0.0
    %2319 = vmatprep.subr.mxu0 0.0
    %2320 = vmatpush1.msra.mxu0 0.0
    %2321 = vmatprep.subr.mxu0 0.0
    %2322 = vmatpush1.msra.mxu0 0.0
    %2323 = vmatprep.subr.mxu0 0.0
    %2324 = vmatpush1.msra.mxu0 0.0
    %2325 = vmatprep.subr.mxu0 0.0
    %2326 = vmatpush1.msra.mxu0 0.0
    %2327 = vmatprep.subr.mxu0 0.0
    %2328 = vmatpush1.msra.mxu0 0.0
    %2329 = vmatprep.subr.mxu0 0.0
    %2330 = vmatpush1.msra.mxu0 0.0
    %2331 = vmatprep.subr.mxu0 0.0
    %2332 = vmatpush1.msra.mxu0 0.0
    %2333 = vmatprep.subr.mxu0 0.0
    %2334 = vmatpush1.msra.mxu0 0.0
    %2335 = vmatprep.subr.mxu0 0.0
    %2336 = vmatpush1.msra.mxu0 0.0
    %2337 = vmatprep.subr.mxu0 0.0
    %2338 = vmatpush1.msra.mxu0 0.0
    %2339 = vmatprep.mubr.f32.mxu0 0.0
    %2340 = vmatmul.mubr.f32.gmra.mrb[0].mxu0 %v162
    %v2341 = vpop.f32.mrb[0].mxu0
    %v2342 = vadd.f32 %v2273, %v2341
    %v2343 = vpop.f32.mrb[0].mxu0
    %2344 = vmatprep.mubr.f32.mxu0 0.0
    %2345 = vmatmul.mubr.f32.gmra.mrb[0].mxu0 %v165
    %v2346 = vpop.f32.mrb[0].mxu0
    %v2347 = vadd.f32 %v2273, %v2346
    %v2348 = vpop.f32.mrb[0].mxu0
    %2349 = vmatprep.mubr.f32.mxu0 0.0
    %2350 = vmatmul.mubr.f32.gmra.mrb[0].mxu0 %v168
    %v2351 = vpop.f32.mrb[0].mxu0
    %v2352 = vadd.f32 %v2273, %v2351
    %v2353 = vpop.f32.mrb[0].mxu0
    %2354 = vmatprep.mubr.f32.mxu0 0.0
    %2355 = vmatmul.mubr.f32.gmra.mrb[0].mxu0 %v171
    %v2356 = vpop.f32.mrb[0].mxu0
    %v2357 = vadd.f32 %v2273, %v2356
    %v2358 = vpop.f32.mrb[0].mxu0
    %2359 = vdwg.mxu0
    %s2360 = scalar_lea.vmem %s7, 96
    %v2361 = vld [vmem:[%s2360] sm:$0xff]
    %v2362 = vld [vmem:[%s2360 + $0x8] sm:$0xff]
    %v2363 = vld [vmem:[%s2360 + $0x10] sm:$0xff]
    %v2364 = vld [vmem:[%s2360 + $0x18] sm:$0xff]
    %s2365 = scalar_lea.vmem %s8, 3
    %v2366 = vld [vmem:[%s2365] sm:$0x1]
    %v2368 = vlaneseq
    %v2369 = vshrl.u32 %v2368, 7
    %v2370 = vsub.s32 0, %v2369
    %v2371 = vrot.slane %v2366, %v2370
    %2373 = vmatprep.subr.mxu0 0.0
    %2374 = vmatpush1.msra.mxu0 %v2361
    %2375 = vmatprep.subr.mxu0 0.0
    %2376 = vmatpush1.msra.mxu0 %v2362
    %2377 = vmatprep.subr.mxu0 0.0
    %2378 = vmatpush1.msra.mxu0 %v2363
    %2379 = vmatprep.subr.mxu0 0.0
    %2380 = vmatpush1.msra.mxu0 %v2364
    %2381 = vmatprep.subr.mxu0 0.0
    %2382 = vmatpush1.msra.mxu0 0.0
    %2383 = vmatprep.subr.mxu0 0.0
    %2384 = vmatpush1.msra.mxu0 0.0
    %2385 = vmatprep.subr.mxu0 0.0
    %2386 = vmatpush1.msra.mxu0 0.0
    %2387 = vmatprep.subr.mxu0 0.0
    %2388 = vmatpush1.msra.mxu0 0.0
    %2389 = vmatprep.subr.mxu0 0.0
    %2390 = vmatpush1.msra.mxu0 0.0
    %2391 = vmatprep.subr.mxu0 0.0
    %2392 = vmatpush1.msra.mxu0 0.0
    %2393 = vmatprep.subr.mxu0 0.0
    %2394 = vmatpush1.msra.mxu0 0.0
    %2395 = vmatprep.subr.mxu0 0.0
    %2396 = vmatpush1.msra.mxu0 0.0
    %2397 = vmatprep.subr.mxu0 0.0
    %2398 = vmatpush1.msra.mxu0 0.0
    %2399 = vmatprep.subr.mxu0 0.0
    %2400 = vmatpush1.msra.mxu0 0.0
    %2401 = vmatprep.subr.mxu0 0.0
    %2402 = vmatpush1.msra.mxu0 0.0
    %2403 = vmatprep.subr.mxu0 0.0
    %2404 = vmatpush1.msra.mxu0 0.0
    %2405 = vmatprep.subr.mxu0 0.0
    %2406 = vmatpush1.msra.mxu0 0.0
    %2407 = vmatprep.subr.mxu0 0.0
    %2408 = vmatpush1.msra.mxu0 0.0
    %2409 = vmatprep.subr.mxu0 0.0
    %2410 = vmatpush1.msra.mxu0 0.0
    %2411 = vmatprep.subr.mxu0 0.0
    %2412 = vmatpush1.msra.mxu0 0.0
    %2413 = vmatprep.subr.mxu0 0.0
    %2414 = vmatpush1.msra.mxu0 0.0
    %2415 = vmatprep.subr.mxu0 0.0
    %2416 = vmatpush1.msra.mxu0 0.0
    %2417 = vmatprep.subr.mxu0 0.0
    %2418 = vmatpush1.msra.mxu0 0.0
    %2419 = vmatprep.subr.mxu0 0.0
    %2420 = vmatpush1.msra.mxu0 0.0
    %2421 = vmatprep.subr.mxu0 0.0
    %2422 = vmatpush1.msra.mxu0 0.0
    %2423 = vmatprep.subr.mxu0 0.0
    %2424 = vmatpush1.msra.mxu0 0.0
    %2425 = vmatprep.subr.mxu0 0.0
    %2426 = vmatpush1.msra.mxu0 0.0
    %2427 = vmatprep.subr.mxu0 0.0
    %2428 = vmatpush1.msra.mxu0 0.0
    %2429 = vmatprep.subr.mxu0 0.0
    %2430 = vmatpush1.msra.mxu0 0.0
    %2431 = vmatprep.subr.mxu0 0.0
    %2432 = vmatpush1.msra.mxu0 0.0
    %2433 = vmatprep.subr.mxu0 0.0
    %2434 = vmatpush1.msra.mxu0 0.0
    %2435 = vmatprep.subr.mxu0 0.0
    %2436 = vmatpush1.msra.mxu0 0.0
    %2437 = vmatprep.mubr.f32.mxu0 0.0
    %2438 = vmatmul.mubr.f32.gmra.mrb[0].mxu0 %v270
    %v2439 = vpop.f32.mrb[0].mxu0
    %v2440 = vadd.f32 %v2371, %v2439
    %v2441 = vpop.f32.mrb[0].mxu0
    %2442 = vmatprep.mubr.f32.mxu0 0.0
    %2443 = vmatmul.mubr.f32.gmra.mrb[0].mxu0 %v273
    %v2444 = vpop.f32.mrb[0].mxu0
    %v2445 = vadd.f32 %v2371, %v2444
    %v2446 = vpop.f32.mrb[0].mxu0
    %2447 = vmatprep.mubr.f32.mxu0 0.0
    %2448 = vmatmul.mubr.f32.gmra.mrb[0].mxu0 %v276
    %v2449 = vpop.f32.mrb[0].mxu0
    %v2450 = vadd.f32 %v2371, %v2449
    %v2451 = vpop.f32.mrb[0].mxu0
    %2452 = vmatprep.mubr.f32.mxu0 0.0
    %2453 = vmatmul.mubr.f32.gmra.mrb[0].mxu0 %v279
    %v2454 = vpop.f32.mrb[0].mxu0
    %v2455 = vadd.f32 %v2371, %v2454
    %v2456 = vpop.f32.mrb[0].mxu0
    %2457 = vdwg.mxu0
    %v2459 = vsel %vm366, %v2254, 0
    %v2462 = vsel %vm366, %v2342, 0
    %v2465 = vsel %vm366, %v2347, 0
    %2467 = vmatprep.subr.mxu0 0.0
    %2468 = vmatpush1.xpose.msra.mxu0 %v2462
    %2469 = vmatprep.subr.mxu0 0.0
    %2470 = vmatpush1.xpose.msra.mxu0 %v2465
    %2471 = vmatprep.subr.mxu0 0.0
    %2472 = vmatpush1.xpose.msra.mxu0 0.0
    %2473 = vmatprep.subr.mxu0 0.0
    %2474 = vmatpush1.xpose.msra.mxu0 0.0
    %2475 = vmatprep.subr.mxu0 0.0
    %2476 = vmatpush1.xpose.msra.mxu0 0.0
    %2477 = vmatprep.subr.mxu0 0.0
    %2478 = vmatpush1.xpose.msra.mxu0 0.0
    %2479 = vmatprep.subr.mxu0 0.0
    %2480 = vmatpush1.xpose.msra.mxu0 0.0
    %2481 = vmatprep.subr.mxu0 0.0
    %2482 = vmatpush1.xpose.msra.mxu0 0.0
    %2483 = vmatprep.subr.mxu0 0.0
    %2484 = vmatpush1.xpose.msra.mxu0 0.0
    %2485 = vmatprep.subr.mxu0 0.0
    %2486 = vmatpush1.xpose.msra.mxu0 0.0
    %2487 = vmatprep.subr.mxu0 0.0
    %2488 = vmatpush1.xpose.msra.mxu0 0.0
    %2489 = vmatprep.subr.mxu0 0.0
    %2490 = vmatpush1.xpose.msra.mxu0 0.0
    %2491 = vmatprep.subr.mxu0 0.0
    %2492 = vmatpush1.xpose.msra.mxu0 0.0
    %2493 = vmatprep.subr.mxu0 0.0
    %2494 = vmatpush1.xpose.msra.mxu0 0.0
    %2495 = vmatprep.subr.mxu0 0.0
    %2496 = vmatpush1.xpose.msra.mxu0 0.0
    %2497 = vmatprep.subr.mxu0 0.0
    %2498 = vmatpush1.xpose.msra.mxu0 0.0
    %2499 = vmatprep.subr.mxu0 0.0
    %2500 = vmatpush1.xpose.msra.mxu0 0.0
    %2501 = vmatprep.subr.mxu0 0.0
    %2502 = vmatpush1.xpose.msra.mxu0 0.0
    %2503 = vmatprep.subr.mxu0 0.0
    %2504 = vmatpush1.xpose.msra.mxu0 0.0
    %2505 = vmatprep.subr.mxu0 0.0
    %2506 = vmatpush1.xpose.msra.mxu0 0.0
    %2507 = vmatprep.subr.mxu0 0.0
    %2508 = vmatpush1.xpose.msra.mxu0 0.0
    %2509 = vmatprep.subr.mxu0 0.0
    %2510 = vmatpush1.xpose.msra.mxu0 0.0
    %2511 = vmatprep.subr.mxu0 0.0
    %2512 = vmatpush1.xpose.msra.mxu0 0.0
    %2513 = vmatprep.subr.mxu0 0.0
    %2514 = vmatpush1.xpose.msra.mxu0 0.0
    %2515 = vmatprep.subr.mxu0 0.0
    %2516 = vmatpush1.xpose.msra.mxu0 0.0
    %2517 = vmatprep.subr.mxu0 0.0
    %2518 = vmatpush1.xpose.msra.mxu0 0.0
    %2519 = vmatprep.subr.mxu0 0.0
    %2520 = vmatpush1.xpose.msra.mxu0 0.0
    %2521 = vmatprep.subr.mxu0 0.0
    %2522 = vmatpush1.xpose.msra.mxu0 0.0
    %2523 = vmatprep.subr.mxu0 0.0
    %2524 = vmatpush1.xpose.msra.mxu0 0.0
    %2525 = vmatprep.subr.mxu0 0.0
    %2526 = vmatpush1.xpose.msra.mxu0 0.0
    %2527 = vmatprep.subr.mxu0 0.0
    %2528 = vmatpush1.xpose.msra.mxu0 0.0
    %2529 = vmatprep.subr.mxu0 0.0
    %2530 = vmatpush1.xpose.msra.mxu0 0.0
    %2531 = vmatprep.mubr.f32.mxu0 0.0
    %2532 = vmatmul.mubr.f32.gmra.mrb[0].mxu0 %v2459
    %v2533 = vpop.f32.mrb[0].mxu0
    %v2534 = vadd.f32 0.0, %v2533
    %v2535 = vpop.f32.mrb[0].mxu0
    %2536 = vdwg.mxu0
    %v2538 = vsel %vm366, %v2259, 0
    %v2541 = vsel %vm366, %v2352, 0
    %v2544 = vsel %vm366, %v2357, 0
    %2546 = vmatprep.subr.mxu0 0.0
    %2547 = vmatpush1.xpose.msra.mxu0 %v2541
    %2548 = vmatprep.subr.mxu0 0.0
    %2549 = vmatpush1.xpose.msra.mxu0 %v2544
    %2550 = vmatprep.subr.mxu0 0.0
    %2551 = vmatpush1.xpose.msra.mxu0 0.0
    %2552 = vmatprep.subr.mxu0 0.0
    %2553 = vmatpush1.xpose.msra.mxu0 0.0
    %2554 = vmatprep.subr.mxu0 0.0
    %2555 = vmatpush1.xpose.msra.mxu0 0.0
    %2556 = vmatprep.subr.mxu0 0.0
    %2557 = vmatpush1.xpose.msra.mxu0 0.0
    %2558 = vmatprep.subr.mxu0 0.0
    %2559 = vmatpush1.xpose.msra.mxu0 0.0
    %2560 = vmatprep.subr.mxu0 0.0
    %2561 = vmatpush1.xpose.msra.mxu0 0.0
    %2562 = vmatprep.subr.mxu0 0.0
    %2563 = vmatpush1.xpose.msra.mxu0 0.0
    %2564 = vmatprep.subr.mxu0 0.0
    %2565 = vmatpush1.xpose.msra.mxu0 0.0
    %2566 = vmatprep.subr.mxu0 0.0
    %2567 = vmatpush1.xpose.msra.mxu0 0.0
    %2568 = vmatprep.subr.mxu0 0.0
    %2569 = vmatpush1.xpose.msra.mxu0 0.0
    %2570 = vmatprep.subr.mxu0 0.0
    %2571 = vmatpush1.xpose.msra.mxu0 0.0
    %2572 = vmatprep.subr.mxu0 0.0
    %2573 = vmatpush1.xpose.msra.mxu0 0.0
    %2574 = vmatprep.subr.mxu0 0.0
    %2575 = vmatpush1.xpose.msra.mxu0 0.0
    %2576 = vmatprep.subr.mxu0 0.0
    %2577 = vmatpush1.xpose.msra.mxu0 0.0
    %2578 = vmatprep.subr.mxu0 0.0
    %2579 = vmatpush1.xpose.msra.mxu0 0.0
    %2580 = vmatprep.subr.mxu0 0.0
    %2581 = vmatpush1.xpose.msra.mxu0 0.0
    %2582 = vmatprep.subr.mxu0 0.0
    %2583 = vmatpush1.xpose.msra.mxu0 0.0
    %2584 = vmatprep.subr.mxu0 0.0
    %2585 = vmatpush1.xpose.msra.mxu0 0.0
    %2586 = vmatprep.subr.mxu0 0.0
    %2587 = vmatpush1.xpose.msra.mxu0 0.0
    %2588 = vmatprep.subr.mxu0 0.0
    %2589 = vmatpush1.xpose.msra.mxu0 0.0
    %2590 = vmatprep.subr.mxu0 0.0
    %2591 = vmatpush1.xpose.msra.mxu0 0.0
    %2592 = vmatprep.subr.mxu0 0.0
    %2593 = vmatpush1.xpose.msra.mxu0 0.0
    %2594 = vmatprep.subr.mxu0 0.0
    %2595 = vmatpush1.xpose.msra.mxu0 0.0
    %2596 = vmatprep.subr.mxu0 0.0
    %2597 = vmatpush1.xpose.msra.mxu0 0.0
    %2598 = vmatprep.subr.mxu0 0.0
    %2599 = vmatpush1.xpose.msra.mxu0 0.0
    %2600 = vmatprep.subr.mxu0 0.0
    %2601 = vmatpush1.xpose.msra.mxu0 0.0
    %2602 = vmatprep.subr.mxu0 0.0
    %2603 = vmatpush1.xpose.msra.mxu0 0.0
    %2604 = vmatprep.subr.mxu0 0.0
    %2605 = vmatpush1.xpose.msra.mxu0 0.0
    %2606 = vmatprep.subr.mxu0 0.0
    %2607 = vmatpush1.xpose.msra.mxu0 0.0
    %2608 = vmatprep.subr.mxu0 0.0
    %2609 = vmatpush1.xpose.msra.mxu0 0.0
    %2610 = vmatprep.mubr.f32.mxu0 0.0
    %2611 = vmatmul.mubr.f32.gmra.mrb[0].mxu0 %v2538
    %v2612 = vpop.f32.mrb[0].mxu0
    %v2613 = vadd.f32 0.0, %v2612
    %v2614 = vpop.f32.mrb[0].mxu0
    %2615 = vdwg.mxu0
    %v2616 = vmul.f32 %v2534, 0.35355338
    %v2617 = vmul.f32 %v2613, 0.35355338
    %v2618 = vsel %vm527, %v2616, -inf
    %2619 = vmax.xlane.f32.xlu0 %v2618
    %v2620 = vpop.xlane.xlu0 %2619
    %v2621 = vsel %vm527, %v2617, -inf
    %2622 = vmax.xlane.f32.xlu0 %v2621
    %v2623 = vpop.xlane.xlu0 %2622
    %v2624 = vsub.f32 %v2616, %v2620
    %v2625 = vsub.f32 %v2617, %v2623
    %v2626 = vmul.f32 %v2624, 1.442695
    %v2627 = vpow.pop %v2626
    %v2628 = vmul.f32 %v2625, 1.442695
    %v2629 = vpow.pop %v2628
    %v2630 = vsel %vm527, %v2627, 0.0
    %2631 = vadd.xlane.f32.xlu0 %v2630
    %v2632 = vpop.xlane.xlu0 %2631
    %v2633 = vsel %vm527, %v2629, 0.0
    %2634 = vadd.xlane.f32.xlu0 %v2633
    %v2635 = vpop.xlane.xlu0 %2634
    %v2637 = vsel %vm527, %v2627, 0
    %2639 = vmatprep.subr.mxu0 0.0
    %2640 = vmatpush1.msra.mxu0 %v2440
    %2641 = vmatprep.subr.mxu0 0.0
    %2642 = vmatpush1.msra.mxu0 %v2445
    %2643 = vmatprep.subr.mxu0 0.0
    %2644 = vmatpush1.msra.mxu0 0.0
    %2645 = vmatprep.subr.mxu0 0.0
    %2646 = vmatpush1.msra.mxu0 0.0
    %2647 = vmatprep.subr.mxu0 0.0
    %2648 = vmatpush1.msra.mxu0 0.0
    %2649 = vmatprep.subr.mxu0 0.0
    %2650 = vmatpush1.msra.mxu0 0.0
    %2651 = vmatprep.subr.mxu0 0.0
    %2652 = vmatpush1.msra.mxu0 0.0
    %2653 = vmatprep.subr.mxu0 0.0
    %2654 = vmatpush1.msra.mxu0 0.0
    %2655 = vmatprep.subr.mxu0 0.0
    %2656 = vmatpush1.msra.mxu0 0.0
    %2657 = vmatprep.subr.mxu0 0.0
    %2658 = vmatpush1.msra.mxu0 0.0
    %2659 = vmatprep.subr.mxu0 0.0
    %2660 = vmatpush1.msra.mxu0 0.0
    %2661 = vmatprep.subr.mxu0 0.0
    %2662 = vmatpush1.msra.mxu0 0.0
    %2663 = vmatprep.subr.mxu0 0.0
    %2664 = vmatpush1.msra.mxu0 0.0
    %2665 = vmatprep.subr.mxu0 0.0
    %2666 = vmatpush1.msra.mxu0 0.0
    %2667 = vmatprep.subr.mxu0 0.0
    %2668 = vmatpush1.msra.mxu0 0.0
    %2669 = vmatprep.subr.mxu0 0.0
    %2670 = vmatpush1.msra.mxu0 0.0
    %2671 = vmatprep.subr.mxu0 0.0
    %2672 = vmatpush1.msra.mxu0 0.0
    %2673 = vmatprep.subr.mxu0 0.0
    %2674 = vmatpush1.msra.mxu0 0.0
    %2675 = vmatprep.subr.mxu0 0.0
    %2676 = vmatpush1.msra.mxu0 0.0
    %2677 = vmatprep.subr.mxu0 0.0
    %2678 = vmatpush1.msra.mxu0 0.0
    %2679 = vmatprep.subr.mxu0 0.0
    %2680 = vmatpush1.msra.mxu0 0.0
    %2681 = vmatprep.subr.mxu0 0.0
    %2682 = vmatpush1.msra.mxu0 0.0
    %2683 = vmatprep.subr.mxu0 0.0
    %2684 = vmatpush1.msra.mxu0 0.0
    %2685 = vmatprep.subr.mxu0 0.0
    %2686 = vmatpush1.msra.mxu0 0.0
    %2687 = vmatprep.subr.mxu0 0.0
    %2688 = vmatpush1.msra.mxu0 0.0
    %2689 = vmatprep.subr.mxu0 0.0
    %2690 = vmatpush1.msra.mxu0 0.0
    %2691 = vmatprep.subr.mxu0 0.0
    %2692 = vmatpush1.msra.mxu0 0.0
    %2693 = vmatprep.subr.mxu0 0.0
    %2694 = vmatpush1.msra.mxu0 0.0
    %2695 = vmatprep.subr.mxu0 0.0
    %2696 = vmatpush1.msra.mxu0 0.0
    %2697 = vmatprep.subr.mxu0 0.0
    %2698 = vmatpush1.msra.mxu0 0.0
    %2699 = vmatprep.subr.mxu0 0.0
    %2700 = vmatpush1.msra.mxu0 0.0
    %2701 = vmatprep.subr.mxu0 0.0
    %2702 = vmatpush1.msra.mxu0 0.0
    %2703 = vmatprep.mubr.f32.mxu0 0.0
    %2704 = vmatmul.mubr.f32.gmra.mrb[0].mxu0 %v2637
    %v2705 = vpop.f32.mrb[0].mxu0
    %v2706 = vadd.f32 0.0, %v2705
    %v2707 = vpop.f32.mrb[0].mxu0
    %2708 = vdwg.mxu0
    %v2710 = vsel %vm527, %v2629, 0
    %2712 = vmatprep.subr.mxu0 0.0
    %2713 = vmatpush1.msra.mxu0 %v2450
    %2714 = vmatprep.subr.mxu0 0.0
    %2715 = vmatpush1.msra.mxu0 %v2455
    %2716 = vmatprep.subr.mxu0 0.0
    %2717 = vmatpush1.msra.mxu0 0.0
    %2718 = vmatprep.subr.mxu0 0.0
    %2719 = vmatpush1.msra.mxu0 0.0
    %2720 = vmatprep.subr.mxu0 0.0
    %2721 = vmatpush1.msra.mxu0 0.0
    %2722 = vmatprep.subr.mxu0 0.0
    %2723 = vmatpush1.msra.mxu0 0.0
    %2724 = vmatprep.subr.mxu0 0.0
    %2725 = vmatpush1.msra.mxu0 0.0
    %2726 = vmatprep.subr.mxu0 0.0
    %2727 = vmatpush1.msra.mxu0 0.0
    %2728 = vmatprep.subr.mxu0 0.0
    %2729 = vmatpush1.msra.mxu0 0.0
    %2730 = vmatprep.subr.mxu0 0.0
    %2731 = vmatpush1.msra.mxu0 0.0
    %2732 = vmatprep.subr.mxu0 0.0
    %2733 = vmatpush1.msra.mxu0 0.0
    %2734 = vmatprep.subr.mxu0 0.0
    %2735 = vmatpush1.msra.mxu0 0.0
    %2736 = vmatprep.subr.mxu0 0.0
    %2737 = vmatpush1.msra.mxu0 0.0
    %2738 = vmatprep.subr.mxu0 0.0
    %2739 = vmatpush1.msra.mxu0 0.0
    %2740 = vmatprep.subr.mxu0 0.0
    %2741 = vmatpush1.msra.mxu0 0.0
    %2742 = vmatprep.subr.mxu0 0.0
    %2743 = vmatpush1.msra.mxu0 0.0
    %2744 = vmatprep.subr.mxu0 0.0
    %2745 = vmatpush1.msra.mxu0 0.0
    %2746 = vmatprep.subr.mxu0 0.0
    %2747 = vmatpush1.msra.mxu0 0.0
    %2748 = vmatprep.subr.mxu0 0.0
    %2749 = vmatpush1.msra.mxu0 0.0
    %2750 = vmatprep.subr.mxu0 0.0
    %2751 = vmatpush1.msra.mxu0 0.0
    %2752 = vmatprep.subr.mxu0 0.0
    %2753 = vmatpush1.msra.mxu0 0.0
    %2754 = vmatprep.subr.mxu0 0.0
    %2755 = vmatpush1.msra.mxu0 0.0
    %2756 = vmatprep.subr.mxu0 0.0
    %2757 = vmatpush1.msra.mxu0 0.0
    %2758 = vmatprep.subr.mxu0 0.0
    %2759 = vmatpush1.msra.mxu0 0.0
    %2760 = vmatprep.subr.mxu0 0.0
    %2761 = vmatpush1.msra.mxu0 0.0
    %2762 = vmatprep.subr.mxu0 0.0
    %2763 = vmatpush1.msra.mxu0 0.0
    %2764 = vmatprep.subr.mxu0 0.0
    %2765 = vmatpush1.msra.mxu0 0.0
    %2766 = vmatprep.subr.mxu0 0.0
    %2767 = vmatpush1.msra.mxu0 0.0
    %2768 = vmatprep.subr.mxu0 0.0
    %2769 = vmatpush1.msra.mxu0 0.0
    %2770 = vmatprep.subr.mxu0 0.0
    %2771 = vmatpush1.msra.mxu0 0.0
    %2772 = vmatprep.subr.mxu0 0.0
    %2773 = vmatpush1.msra.mxu0 0.0
    %2774 = vmatprep.subr.mxu0 0.0
    %2775 = vmatpush1.msra.mxu0 0.0
    %2776 = vmatprep.mubr.f32.mxu0 0.0
    %2777 = vmatmul.mubr.f32.gmra.mrb[0].mxu0 %v2710
    %v2778 = vpop.f32.mrb[0].mxu0
    %v2779 = vadd.f32 0.0, %v2778
    %v2780 = vpop.f32.mrb[0].mxu0
    %2781 = vdwg.mxu0
    %v2782 = vrcp.pop %v2632
    %v2783 = vrcp.pop %v2635
    %v2784 = vmul.f32 %v2706, %v2782
    %v2785 = vmul.f32 %v2779, %v2783
    %s2786 = scalar_lea.vmem %s9, 24
    %v2787 = vld [vmem:[%s2786] sm:$0xff]
    %v2789 = vsel %vm366, %v2784, 0
    %v2792 = vsel %vm366, %v2785, 0
    %2794 = vmatprep.subr.mxu0 0.0
    %2795 = vmatpush1.msra.mxu0 %v2787
    %2796 = vmatprep.subr.mxu0 0.0
    %2797 = vmatpush1.msra.mxu0 0.0
    %2798 = vmatprep.subr.mxu0 0.0
    %2799 = vmatpush1.msra.mxu0 0.0
    %2800 = vmatprep.subr.mxu0 0.0
    %2801 = vmatpush1.msra.mxu0 0.0
    %2802 = vmatprep.subr.mxu0 0.0
    %2803 = vmatpush1.msra.mxu0 0.0
    %2804 = vmatprep.subr.mxu0 0.0
    %2805 = vmatpush1.msra.mxu0 0.0
    %2806 = vmatprep.subr.mxu0 0.0
    %2807 = vmatpush1.msra.mxu0 0.0
    %2808 = vmatprep.subr.mxu0 0.0
    %2809 = vmatpush1.msra.mxu0 0.0
    %2810 = vmatprep.subr.mxu0 0.0
    %2811 = vmatpush1.msra.mxu0 0.0
    %2812 = vmatprep.subr.mxu0 0.0
    %2813 = vmatpush1.msra.mxu0 0.0
    %2814 = vmatprep.subr.mxu0 0.0
    %2815 = vmatpush1.msra.mxu0 0.0
    %2816 = vmatprep.subr.mxu0 0.0
    %2817 = vmatpush1.msra.mxu0 0.0
    %2818 = vmatprep.subr.mxu0 0.0
    %2819 = vmatpush1.msra.mxu0 0.0
    %2820 = vmatprep.subr.mxu0 0.0
    %2821 = vmatpush1.msra.mxu0 0.0
    %2822 = vmatprep.subr.mxu0 0.0
    %2823 = vmatpush1.msra.mxu0 0.0
    %2824 = vmatprep.subr.mxu0 0.0
    %2825 = vmatpush1.msra.mxu0 0.0
    %2826 = vmatprep.subr.mxu0 0.0
    %2827 = vmatpush1.msra.mxu0 0.0
    %2828 = vmatprep.subr.mxu0 0.0
    %2829 = vmatpush1.msra.mxu0 0.0
    %2830 = vmatprep.subr.mxu0 0.0
    %2831 = vmatpush1.msra.mxu0 0.0
    %2832 = vmatprep.subr.mxu0 0.0
    %2833 = vmatpush1.msra.mxu0 0.0
    %2834 = vmatprep.subr.mxu0 0.0
    %2835 = vmatpush1.msra.mxu0 0.0
    %2836 = vmatprep.subr.mxu0 0.0
    %2837 = vmatpush1.msra.mxu0 0.0
    %2838 = vmatprep.subr.mxu0 0.0
    %2839 = vmatpush1.msra.mxu0 0.0
    %2840 = vmatprep.subr.mxu0 0.0
    %2841 = vmatpush1.msra.mxu0 0.0
    %2842 = vmatprep.subr.mxu0 0.0
    %2843 = vmatpush1.msra.mxu0 0.0
    %2844 = vmatprep.subr.mxu0 0.0
    %2845 = vmatpush1.msra.mxu0 0.0
    %2846 = vmatprep.subr.mxu0 0.0
    %2847 = vmatpush1.msra.mxu0 0.0
    %2848 = vmatprep.subr.mxu0 0.0
    %2849 = vmatpush1.msra.mxu0 0.0
    %2850 = vmatprep.subr.mxu0 0.0
    %2851 = vmatpush1.msra.mxu0 0.0
    %2852 = vmatprep.subr.mxu0 0.0
    %2853 = vmatpush1.msra.mxu0 0.0
    %2854 = vmatprep.subr.mxu0 0.0
    %2855 = vmatpush1.msra.mxu0 0.0
    %2856 = vmatprep.subr.mxu0 0.0
    %2857 = vmatpush1.msra.mxu0 0.0
    %2858 = vmatprep.mubr.f32.mxu0 0.0
    %2859 = vmatmul.mubr.f32.gmra.mrb[0].mxu0 %v2789
    %v2860 = vpop.f32.mrb[0].mxu0
    %v2861 = vadd.f32 0.0, %v2860
    %v2862 = vpop.f32.mrb[0].mxu0
    %2863 = vmatprep.mubr.f32.mxu0 0.0
    %2864 = vmatmul.mubr.f32.gmra.mrb[0].mxu0 %v2792
    %v2865 = vpop.f32.mrb[0].mxu0
    %v2866 = vadd.f32 0.0, %v2865
    %v2867 = vpop.f32.mrb[0].mxu0
    %2868 = vdwg.mxu0
    %v2869 = vadd.f32 %v2172, %v2861
    %v2870 = vadd.f32 %v2173, %v2866
    %2871 = vst.msk [vmem:[#allocation2] sm:$0xff] %vm68, %v2869
    %2872 = vst.msk [vmem:[#allocation2 + $0x8] sm:$0xff] %vm68, %v2870
    // Predicated region
    $region46: #{attention_layer_pallas.1} parent=1 // pred_check
      _
    $region47: #{attention_layer_pallas.1} parent=1 // pred_check_branch
      %2874 = sbr.rel (0) target = $region49
    $region48: #{attention_layer_pallas.1} parent=1 // pred_region
      %s2876 = ssub.s32 256, 256
      %2877 = vsyncadd [#allocation3], %s2876
      %s2878 = sshll.u32 [#allocation2], 4
      %s2879 = int_to_ptr.vmem [resolvable:$true] %s2878
      %2884 = dma.vmem_to_hbm [thread:$0]  %s2879, 256, %s11, [#allocation3], 128, 128, 8
    $region49: #{attention_layer_pallas.1} parent=1 // pred_fallthru
      _
    // Predicated region
    $region50: #{attention_layer_pallas.1} parent=1 // pred_check
      _
    $region51: #{attention_layer_pallas.1} parent=1 // pred_check_branch
      %2886 = sbr.rel (0) target = $region53
    $region52: #{attention_layer_pallas.1} parent=1 // pred_region
      %2887 = dma.done [#allocation3], 256
    $region53: #{attention_layer_pallas.1} parent=1 // pred_fallthru
      _
    %2888 = vsyncpa [#allocation3], 1

</llo_original>
